<compile_context>
chip_gen: v7x
topology: tpu7x:2x2x1
jax: 0.10.0
libtpu: 0.0.40
codegen_flags: <defaults>
</compile_context>

<pallas_src>
import functools

import numpy as np
import jax
import jax.numpy as jnp
from jax import lax
from jax.experimental import pallas as pl
from jax.experimental.pallas import tpu as pltpu

EPS = 1e-6


def _rmsnorm(x, w):
    # f32 variance math (VPU-friendly on v5e too).
    var = jnp.mean(x * x, axis=-1, keepdims=True)
    return x * lax.rsqrt(var + EPS) * w


def _rope(t, cos, sin, half):
    # rotate_half(t) = concat(-t2, t1) along the lane (head_dim) axis.
    rot = jnp.concatenate([-t[..., half:], t[..., :half]], axis=-1)
    return t * cos + rot * sin


def qwen3_block_kernel(x_ref, bias_ref, cos_ref, sin_ref,
                       wqkv_ref, wo_ref, qn_ref, kn_ref, g1_ref, g2_ref,
                       wgu_ref, wd_ref, o_ref,
                       *, n_heads, n_kv_heads, head_dim):
    f32, bf16 = jnp.float32, jnp.bfloat16
    H, KV, hd = n_heads, n_kv_heads, head_dim
    G = H // KV
    half = hd // 2

    x = x_ref[...].astype(f32)                 # (TB, S, D)
    TB, S, D = x.shape
    xf = x.reshape(TB * S, D)                  # fold batch into the matmul M axis

    # ----------------------- attention branch -----------------------
    h1 = _rmsnorm(xf, g1_ref[...])
    qkv = jnp.dot(h1.astype(bf16), wqkv_ref[...],
                  preferred_element_type=f32)              # (TB*S, (H+2KV)*hd)

    q = qkv[:, :H * hd]
    k = qkv[:, H * hd:(H + KV) * hd]
    v = qkv[:, (H + KV) * hd:]

    # Head-major layout: (TB, H, S, hd) / (TB, KV, S, hd).
    q4 = jnp.transpose(q.reshape(TB, S, H, hd), (0, 2, 1, 3))
    k4 = jnp.transpose(k.reshape(TB, S, KV, hd), (0, 2, 1, 3))
    v4 = jnp.transpose(v.reshape(TB, S, KV, hd), (0, 2, 1, 3))

    cos4 = cos_ref[...][None, None]            # (1, 1, S, hd) -- shared by q and k
    sin4 = sin_ref[...][None, None]

    # Per-head RMS qk-norm (1/sqrt(hd) pre-folded into qn) and RoPE, f32.
    q4 = _rope(_rmsnorm(q4, qn_ref[...][None, None]), cos4, sin4, half)
    k4 = _rope(_rmsnorm(k4, kn_ref[...][None, None]), cos4, sin4, half)

    # Batch the G query heads of each (batch, KV-group) along the matmul M axis.
    qg = q4.reshape(TB * KV, G * S, hd)
    k3 = k4.reshape(TB * KV, S, hd)
    v3 = v4.reshape(TB * KV, S, hd)

    s = jnp.einsum('kmd,knd->kmn',
                   qg.astype(bf16), k3.astype(bf16),
                   preferred_element_type=f32)             # (TB*KV, G*S, S)
    s = s + bias_ref[...][None]                            # additive causal bias
    m = jnp.max(s, axis=-1, keepdims=True)
    p = jnp.exp(s - m)                                     # f32
    l = jnp.sum(p, axis=-1, keepdims=True)

    ctx = jnp.einsum('kmn,knd->kmd',
                     p.astype(bf16), v3.astype(bf16),
                     preferred_element_type=f32)           # (TB*KV, G*S, hd)
    ctx = ctx * pl.reciprocal(l, approx=True)              # normalize post-PV (EUP)

    # Output projection: one 2-D matmul with K = H*hd (wo kept (H*hd, D)).
    ctx2 = jnp.transpose(ctx.reshape(TB, H, S, hd), (0, 2, 1, 3)).reshape(TB * S, H * hd)
    attn = jnp.dot(ctx2.astype(bf16), wo_ref[...],
                   preferred_element_type=f32)             # (TB*S, D)

    x1 = xf + attn                                         # residual 1 (f32)

    # ----------------------- SwiGLU feed-forward -----------------------
    h2 = _rmsnorm(x1, g2_ref[...])
    gu = jnp.dot(h2.astype(bf16), wgu_ref[...],
                 preferred_element_type=f32)               # (TB*S, 2*hidden)
    hidden = gu.shape[-1] // 2
    act = jax.nn.silu(gu[:, :hidden]) * gu[:, hidden:]     # f32
    ff = jnp.dot(act.astype(bf16), wd_ref[...],
                 preferred_element_type=f32)               # (TB*S, D)

    o_ref[...] = (x1 + ff).reshape(TB, S, D).astype(o_ref.dtype)   # residual 2


def prepare_qwen3_params(params, *, head_dim):
    """One-time host-side weight preparation. Do NOT call per forward step."""
    f32, bf16 = jnp.float32, jnp.bfloat16
    return {
        'wqkv': jnp.concatenate([params['wq'], params['wk'], params['wv']],
                                axis=1).astype(bf16),
        'wo': params['wo'].astype(bf16),           # kept 2-D (H*hd, D)
        'wgu': jnp.concatenate([params['w_gate'], params['w_up']],
                               axis=1).astype(bf16),
        'wd': params['w_down'].astype(bf16),
        # Fold 1/sqrt(head_dim) into q_norm (RoPE is linear). Fold is local to this
        # call path; the stored checkpoint parameter is untouched.
        'qn': params['q_norm'].astype(f32) * (head_dim ** -0.5),
        'kn': params['k_norm'].astype(f32),
        'g1': params['g1'].astype(f32),
        'g2': params['g2'].astype(f32),
    }


def qwen3_transformer_block(x, cos, sin, prep, *, n_heads, n_kv_heads, head_dim):
    B, S, D = x.shape
    assert head_dim % 2 == 0, "rotate_half requires an even head_dim"
    assert n_heads % n_kv_heads == 0
    G = n_heads // n_kv_heads
    GS = G * S
    f32 = jnp.float32

    # Batch-tiling: fold enough batch elements into one grid step so the matmul
    # M axis (TB*S rows) approaches 256 (full MXU rows on v6e/v7x, 2 passes on v5e).
    ROWS_TARGET = 256
    TB = min(B, max(1, ROWS_TARGET // S))
    while B % TB:
        TB -= 1
    grid_b = B // TB

    cos = cos.astype(f32)
    sin = sin.astype(f32)

    # Additive causal bias (0 / -1e30), trace-time constant: row m of the (G*S, S)
    # group-batched score block corresponds to query position m % S.
    rows = np.arange(GS) % S
    bias = jnp.asarray(
        np.where(np.arange(S)[None, :] <= rows[:, None], 0.0, -1e30).astype(np.float32))

    operands = [bias, cos, sin, prep['wqkv'], prep['wo'], prep['qn'], prep['kn'],
                prep['g1'], prep['g2'], prep['wgu'], prep['wd']]

    def resident(a):
        # Grid-invariant operand: full block, single-buffered (no 2x VMEM copy).
        nd = a.ndim
        return pl.BlockSpec(a.shape, lambda b, _nd=nd: (0,) * _nd,
                            pipeline_mode=pl.Buffered(1))

    in_specs = [pl.BlockSpec((TB, S, D), lambda b: (b, 0, 0))]
    in_specs += [resident(a) for a in operands]

    # Size the VMEM request from the actual buffer footprint: single-buffered
    # weights + double-buffered x/out tiles, plus headroom for Mosaic temporaries.
    def _nbytes(a):
        return int(np.prod(a.shape)) * jnp.dtype(a.dtype).itemsize
    w_bytes = sum(_nbytes(a) for a in operands)
    io_bytes = 2 * 2 * TB * S * D * jnp.dtype(x.dtype).itemsize
    vmem_limit = int(min(100 * 2**20, 2 * (w_bytes + io_bytes) + (6 << 20)))

    kernel = functools.partial(qwen3_block_kernel, n_heads=n_heads,
                               n_kv_heads=n_kv_heads, head_dim=head_dim)

    return pl.pallas_call(
        kernel,
        out_shape=jax.ShapeDtypeStruct((B, S, D), x.dtype),
        grid=(grid_b,),
        in_specs=in_specs,
        out_specs=pl.BlockSpec((TB, S, D), lambda b: (b, 0, 0)),
        compiler_params=pltpu.CompilerParams(
            dimension_semantics=("parallel",),
            vmem_limit_bytes=vmem_limit),
    )(x, *operands)


if __name__ == "__main__":
    # small config implied by the module's __init__
    B, S = 2, 8
    emb_dim = 256
    n_heads = 2
    n_kv_heads = 1
    head_dim = emb_dim // n_heads      # 128 (lane-aligned)
    hidden_dim = 512                   # Qwen3FeedForward hidden size
    rope_theta = 10000.0

    key = jax.random.PRNGKey(0)
    ks = jax.random.split(key, 9)
    init = lambda k, shape: (0.02 * jax.random.normal(k, shape)).astype(jnp.float32)

    params = {
        'wq': init(ks[0], (emb_dim, n_heads * head_dim)),
        'wk': init(ks[1], (emb_dim, n_kv_heads * head_dim)),
        'wv': init(ks[2], (emb_dim, n_kv_heads * head_dim)),
        'wo': init(ks[3], (n_heads * head_dim, emb_dim)),
        'w_gate': init(ks[4], (emb_dim, hidden_dim)),
        'w_up': init(ks[5], (emb_dim, hidden_dim)),
        'w_down': init(ks[6], (hidden_dim, emb_dim)),
        'q_norm': jnp.ones((1, head_dim), jnp.float32),
        'k_norm': jnp.ones((1, head_dim), jnp.float32),
        'g1': jnp.ones((1, emb_dim), jnp.float32),
        'g2': jnp.ones((1, emb_dim), jnp.float32),
    }

    x = jax.random.normal(ks[7], (B, S, emb_dim), jnp.float32)

    # RoPE tables (cos, sin) of shape (S, head_dim)
    pos = jnp.arange(S, dtype=jnp.float32)
    inv_freq = 1.0 / (rope_theta ** (jnp.arange(0, head_dim, 2, dtype=jnp.float32) / head_dim))
    freqs = pos[:, None] * inv_freq[None, :]
    emb = jnp.concatenate([freqs, freqs], axis=-1)
    cos, sin = jnp.cos(emb), jnp.sin(emb)

    # One-time weight preparation (fusion / bf16 cast / scale fold), outside the hot path.
    prep = prepare_qwen3_params(params, head_dim=head_dim)

    fwd = jax.jit(functools.partial(qwen3_transformer_block,
                                    n_heads=n_heads, n_kv_heads=n_kv_heads,
                                    head_dim=head_dim))
    y = fwd(x, cos, sin, prep)
    jax.block_until_ready(y)
    assert y.shape == (B, S, emb_dim) and bool(jnp.all(jnp.isfinite(y)))
    print("KERNEL_OK")
</pallas_src>

<mosaic_0001>
module attributes {stable_mosaic.version = 11 : i64} {
  func.func @qwen3_block_kernel(%arg0: i32, %arg1: memref<2x8x256xf32, #tpu.memory_space<vmem>>, %arg2: memref<16x8xf32, #tpu.memory_space<vmem>>, %arg3: memref<8x128xf32, #tpu.memory_space<vmem>>, %arg4: memref<8x128xf32, #tpu.memory_space<vmem>>, %arg5: memref<256x512xbf16, #tpu.memory_space<vmem>>, %arg6: memref<256x256xbf16, #tpu.memory_space<vmem>>, %arg7: memref<1x128xf32, #tpu.memory_space<vmem>>, %arg8: memref<1x128xf32, #tpu.memory_space<vmem>>, %arg9: memref<1x256xf32, #tpu.memory_space<vmem>>, %arg10: memref<1x256xf32, #tpu.memory_space<vmem>>, %arg11: memref<256x1024xbf16, #tpu.memory_space<vmem>>, %arg12: memref<512x256xbf16, #tpu.memory_space<vmem>>, %arg13: memref<2x8x256xf32, #tpu.memory_space<vmem>>) attributes {dimension_semantics = [#tpu.dimension_semantics<parallel>], iteration_bounds = array<i64: 1>, scalar_prefetch = 0 : i64, scratch_operands = 0 : i64, tpu.core_type = #tpu.core_type<tc>, window_params = [{transform_indices = @transform_0, window_bounds = array<i64: 2, 8, 256>}, {pipeline_mode = #tpu.pipeline_mode<synchronous>, transform_indices = @transform_1, window_bounds = array<i64: 16, 8>}, {pipeline_mode = #tpu.pipeline_mode<synchronous>, transform_indices = @transform_2, window_bounds = array<i64: 8, 128>}, {pipeline_mode = #tpu.pipeline_mode<synchronous>, transform_indices = @transform_3, window_bounds = array<i64: 8, 128>}, {pipeline_mode = #tpu.pipeline_mode<synchronous>, transform_indices = @transform_4, window_bounds = array<i64: 256, 512>}, {pipeline_mode = #tpu.pipeline_mode<synchronous>, transform_indices = @transform_5, window_bounds = array<i64: 256, 256>}, {pipeline_mode = #tpu.pipeline_mode<synchronous>, transform_indices = @transform_6, window_bounds = array<i64: 1, 128>}, {pipeline_mode = #tpu.pipeline_mode<synchronous>, transform_indices = @transform_7, window_bounds = array<i64: 1, 128>}, {pipeline_mode = #tpu.pipeline_mode<synchronous>, transform_indices = @transform_8, window_bounds = array<i64: 1, 256>}, {pipeline_mode = #tpu.pipeline_mode<synchronous>, transform_indices = @transform_9, window_bounds = array<i64: 1, 256>}, {pipeline_mode = #tpu.pipeline_mode<synchronous>, transform_indices = @transform_10, window_bounds = array<i64: 256, 1024>}, {pipeline_mode = #tpu.pipeline_mode<synchronous>, transform_indices = @transform_11, window_bounds = array<i64: 512, 256>}, {transform_indices = @transform_12, window_bounds = array<i64: 2, 8, 256>}]} {
    %c0 = arith.constant 0 : index
    %c0_0 = arith.constant 0 : index
    %c0_1 = arith.constant 0 : index
    %0 = vector.load %arg1[%c0, %c0_0, %c0_1] : memref<2x8x256xf32, #tpu.memory_space<vmem>>, vector<2x8x256xf32>
    %1 = vector.shape_cast %0 : vector<2x8x256xf32> to vector<16x256xf32>
    %c0_2 = arith.constant 0 : index
    %c0_3 = arith.constant 0 : index
    %2 = vector.load %arg9[%c0_2, %c0_3] : memref<1x256xf32, #tpu.memory_space<vmem>>, vector<1x256xf32>
    %3 = arith.mulf %1, %1 : vector<16x256xf32>
    %cst = arith.constant dense<0.000000e+00> : vector<16xf32>
    %4 = vector.multi_reduction <add>, %3, %cst [1] : vector<16x256xf32> to vector<16xf32>
    %5 = vector.shape_cast %4 : vector<16xf32> to vector<16x1xf32>
    %cst_4 = arith.constant 2.560000e+02 : f32
    %6 = vector.broadcast %cst_4 : f32 to vector<16x1xf32>
    %7 = arith.divf %5, %6 : vector<16x1xf32>
    %cst_5 = arith.constant 9.99999997E-7 : f32
    %8 = vector.broadcast %cst_5 : f32 to vector<16x1xf32>
    %9 = arith.addf %7, %8 : vector<16x1xf32>
    %10 = math.rsqrt %9 : vector<16x1xf32>
    %11 = vector.broadcast %10 : vector<16x1xf32> to vector<16x256xf32>
    %12 = arith.mulf %1, %11 : vector<16x256xf32>
    %13 = vector.broadcast %2 : vector<1x256xf32> to vector<16x256xf32>
    %14 = arith.mulf %12, %13 : vector<16x256xf32>
    %15 = arith.truncf %14 : vector<16x256xf32> to vector<16x256xbf16>
    %c0_6 = arith.constant 0 : index
    %c0_7 = arith.constant 0 : index
    %16 = vector.load %arg5[%c0_6, %c0_7] : memref<256x512xbf16, #tpu.memory_space<vmem>>, vector<256x512xbf16>
    %cst_8 = arith.constant dense<0.000000e+00> : vector<16x512xf32>
    %17 = tpu.matmul %15, %16, %cst_8 {dimension_numbers = #tpu.dot_dimension_numbers<[1], [0], [0], [1], [0, 0, 1, 1], [], []>} : vector<16x256xbf16>, vector<256x512xbf16>, vector<16x512xf32> -> vector<16x512xf32>
    %18 = vector.extract_strided_slice %17 {offsets = [0, 0], sizes = [16, 256], strides = [1, 1]} : vector<16x512xf32> to vector<16x256xf32>
    %19 = vector.extract_strided_slice %17 {offsets = [0, 256], sizes = [16, 128], strides = [1, 1]} : vector<16x512xf32> to vector<16x128xf32>
    %20 = vector.extract_strided_slice %17 {offsets = [0, 384], sizes = [16, 128], strides = [1, 1]} : vector<16x512xf32> to vector<16x128xf32>
    %21 = vector.shape_cast %18 : vector<16x256xf32> to vector<2x8x2x128xf32>
    %22 = tpu.transpose %21, [0, 2, 1, 3] : vector<2x8x2x128xf32> -> vector<2x2x8x128xf32>
    %23 = vector.shape_cast %19 : vector<16x128xf32> to vector<2x8x1x128xf32>
    %24 = tpu.transpose %23, [0, 2, 1, 3] : vector<2x8x1x128xf32> -> vector<2x1x8x128xf32>
    %25 = vector.shape_cast %20 : vector<16x128xf32> to vector<2x8x1x128xf32>
    %26 = tpu.transpose %25, [0, 2, 1, 3] : vector<2x8x1x128xf32> -> vector<2x1x8x128xf32>
    %c0_9 = arith.constant 0 : index
    %c0_10 = arith.constant 0 : index
    %27 = vector.load %arg3[%c0_9, %c0_10] : memref<8x128xf32, #tpu.memory_space<vmem>>, vector<8x128xf32>
    %28 = vector.shape_cast %27 : vector<8x128xf32> to vector<1x1x8x128xf32>
    %c0_11 = arith.constant 0 : index
    %c0_12 = arith.constant 0 : index
    %29 = vector.load %arg4[%c0_11, %c0_12] : memref<8x128xf32, #tpu.memory_space<vmem>>, vector<8x128xf32>
    %30 = vector.shape_cast %29 : vector<8x128xf32> to vector<1x1x8x128xf32>
    %c0_13 = arith.constant 0 : index
    %c0_14 = arith.constant 0 : index
    %31 = vector.load %arg7[%c0_13, %c0_14] : memref<1x128xf32, #tpu.memory_space<vmem>>, vector<1x128xf32>
    %32 = vector.shape_cast %31 : vector<1x128xf32> to vector<1x1x1x128xf32>
    %33 = arith.mulf %22, %22 : vector<2x2x8x128xf32>
    %cst_15 = arith.constant dense<0.000000e+00> : vector<2x2x8xf32>
    %34 = vector.multi_reduction <add>, %33, %cst_15 [3] : vector<2x2x8x128xf32> to vector<2x2x8xf32>
    %35 = vector.shape_cast %34 : vector<2x2x8xf32> to vector<2x2x8x1xf32>
    %cst_16 = arith.constant 1.280000e+02 : f32
    %36 = vector.broadcast %cst_16 : f32 to vector<2x2x8x1xf32>
    %37 = arith.divf %35, %36 : vector<2x2x8x1xf32>
    %cst_17 = arith.constant 9.99999997E-7 : f32
    %38 = vector.broadcast %cst_17 : f32 to vector<2x2x8x1xf32>
    %39 = arith.addf %37, %38 : vector<2x2x8x1xf32>
    %40 = math.rsqrt %39 : vector<2x2x8x1xf32>
    %41 = vector.broadcast %40 : vector<2x2x8x1xf32> to vector<2x2x8x128xf32>
    %42 = arith.mulf %22, %41 : vector<2x2x8x128xf32>
    %43 = vector.broadcast %32 : vector<1x1x1x128xf32> to vector<2x2x8x128xf32>
    %44 = arith.mulf %42, %43 : vector<2x2x8x128xf32>
    %45 = vector.extract_strided_slice %44 {offsets = [0, 0, 0, 64], sizes = [2, 2, 8, 64], strides = [1, 1, 1, 1]} : vector<2x2x8x128xf32> to vector<2x2x8x64xf32>
    %cst_18 = arith.constant 0.000000e+00 : f32
    %46 = vector.broadcast %cst_18 : f32 to vector<2x2x8x64xf32>
    %47 = arith.subf %46, %45 : vector<2x2x8x64xf32>
    %48 = vector.extract_strided_slice %44 {offsets = [0, 0, 0, 0], sizes = [2, 2, 8, 64], strides = [1, 1, 1, 1]} : vector<2x2x8x128xf32> to vector<2x2x8x64xf32>
    %49 = tpu.concatenate %47, %48 in 3 : vector<2x2x8x64xf32>, vector<2x2x8x64xf32> -> vector<2x2x8x128xf32>
    %50 = vector.broadcast %28 : vector<1x1x8x128xf32> to vector<2x2x8x128xf32>
    %51 = arith.mulf %44, %50 : vector<2x2x8x128xf32>
    %52 = vector.broadcast %30 : vector<1x1x8x128xf32> to vector<2x2x8x128xf32>
    %53 = arith.mulf %49, %52 : vector<2x2x8x128xf32>
    %54 = arith.addf %51, %53 : vector<2x2x8x128xf32>
    %c0_19 = arith.constant 0 : index
    %c0_20 = arith.constant 0 : index
    %55 = vector.load %arg8[%c0_19, %c0_20] : memref<1x128xf32, #tpu.memory_space<vmem>>, vector<1x128xf32>
    %56 = vector.shape_cast %55 : vector<1x128xf32> to vector<1x1x1x128xf32>
    %57 = arith.mulf %24, %24 : vector<2x1x8x128xf32>
    %cst_21 = arith.constant dense<0.000000e+00> : vector<2x1x8xf32>
    %58 = vector.multi_reduction <add>, %57, %cst_21 [3] : vector<2x1x8x128xf32> to vector<2x1x8xf32>
    %59 = vector.shape_cast %58 : vector<2x1x8xf32> to vector<2x1x8x1xf32>
    %cst_22 = arith.constant 1.280000e+02 : f32
    %60 = vector.broadcast %cst_22 : f32 to vector<2x1x8x1xf32>
    %61 = arith.divf %59, %60 : vector<2x1x8x1xf32>
    %cst_23 = arith.constant 9.99999997E-7 : f32
    %62 = vector.broadcast %cst_23 : f32 to vector<2x1x8x1xf32>
    %63 = arith.addf %61, %62 : vector<2x1x8x1xf32>
    %64 = math.rsqrt %63 : vector<2x1x8x1xf32>
    %65 = vector.broadcast %64 : vector<2x1x8x1xf32> to vector<2x1x8x128xf32>
    %66 = arith.mulf %24, %65 : vector<2x1x8x128xf32>
    %67 = vector.broadcast %56 : vector<1x1x1x128xf32> to vector<2x1x8x128xf32>
    %68 = arith.mulf %66, %67 : vector<2x1x8x128xf32>
    %69 = vector.extract_strided_slice %68 {offsets = [0, 0, 0, 64], sizes = [2, 1, 8, 64], strides = [1, 1, 1, 1]} : vector<2x1x8x128xf32> to vector<2x1x8x64xf32>
    %cst_24 = arith.constant 0.000000e+00 : f32
    %70 = vector.broadcast %cst_24 : f32 to vector<2x1x8x64xf32>
    %71 = arith.subf %70, %69 : vector<2x1x8x64xf32>
    %72 = vector.extract_strided_slice %68 {offsets = [0, 0, 0, 0], sizes = [2, 1, 8, 64], strides = [1, 1, 1, 1]} : vector<2x1x8x128xf32> to vector<2x1x8x64xf32>
    %73 = tpu.concatenate %71, %72 in 3 : vector<2x1x8x64xf32>, vector<2x1x8x64xf32> -> vector<2x1x8x128xf32>
    %74 = vector.broadcast %28 : vector<1x1x8x128xf32> to vector<2x1x8x128xf32>
    %75 = arith.mulf %68, %74 : vector<2x1x8x128xf32>
    %76 = vector.broadcast %30 : vector<1x1x8x128xf32> to vector<2x1x8x128xf32>
    %77 = arith.mulf %73, %76 : vector<2x1x8x128xf32>
    %78 = arith.addf %75, %77 : vector<2x1x8x128xf32>
    %79 = vector.shape_cast %54 : vector<2x2x8x128xf32> to vector<2x16x128xf32>
    %80 = vector.shape_cast %78 : vector<2x1x8x128xf32> to vector<2x8x128xf32>
    %81 = vector.shape_cast %26 : vector<2x1x8x128xf32> to vector<2x8x128xf32>
    %82 = arith.truncf %79 : vector<2x16x128xf32> to vector<2x16x128xbf16>
    %83 = arith.truncf %80 : vector<2x8x128xf32> to vector<2x8x128xbf16>
    "tpu.trace_start"() <{level = 10 : i32, message = "kmd,knd->kmn"}> : () -> ()
    %cst_25 = arith.constant dense<0.000000e+00> : vector<2x16x8xf32>
    %84 = tpu.matmul %82, %83, %cst_25 {dimension_numbers = #tpu.dot_dimension_numbers<[2], [2], [1], [1], [0, 0, 0, 1, 1, 1], [0], [0]>} : vector<2x16x128xbf16>, vector<2x8x128xbf16>, vector<2x16x8xf32> -> vector<2x16x8xf32>
    "tpu.trace_stop"() : () -> ()
    %c0_26 = arith.constant 0 : index
    %c0_27 = arith.constant 0 : index
    %85 = vector.load %arg2[%c0_26, %c0_27] : memref<16x8xf32, #tpu.memory_space<vmem>>, vector<16x8xf32>
    %86 = vector.shape_cast %85 : vector<16x8xf32> to vector<1x16x8xf32>
    %87 = vector.broadcast %86 : vector<1x16x8xf32> to vector<2x16x8xf32>
    %88 = arith.addf %84, %87 : vector<2x16x8xf32>
    %cst_28 = arith.constant dense<0xFF800000> : vector<2x16xf32>
    %89 = vector.multi_reduction <maximumf>, %88, %cst_28 [2] : vector<2x16x8xf32> to vector<2x16xf32>
    %90 = vector.shape_cast %89 : vector<2x16xf32> to vector<2x16x1xf32>
    %91 = vector.broadcast %90 : vector<2x16x1xf32> to vector<2x16x8xf32>
    %92 = arith.subf %88, %91 : vector<2x16x8xf32>
    %93 = math.exp %92 : vector<2x16x8xf32>
    %cst_29 = arith.constant dense<0.000000e+00> : vector<2x16xf32>
    %94 = vector.multi_reduction <add>, %93, %cst_29 [2] : vector<2x16x8xf32> to vector<2x16xf32>
    %95 = vector.shape_cast %94 : vector<2x16xf32> to vector<2x16x1xf32>
    %96 = arith.truncf %93 : vector<2x16x8xf32> to vector<2x16x8xbf16>
    %97 = arith.truncf %81 : vector<2x8x128xf32> to vector<2x8x128xbf16>
    "tpu.trace_start"() <{level = 10 : i32, message = "kmn,knd->kmd"}> : () -> ()
    %cst_30 = arith.constant dense<0.000000e+00> : vector<2x16x128xf32>
    %98 = tpu.matmul %96, %97, %cst_30 {dimension_numbers = #tpu.dot_dimension_numbers<[2], [1], [1], [2], [0, 0, 0, 1, 1, 2], [0], [0]>} : vector<2x16x8xbf16>, vector<2x8x128xbf16>, vector<2x16x128xf32> -> vector<2x16x128xf32>
    "tpu.trace_stop"() : () -> ()
    %99 = tpu.reciprocal %95 {approx = true} : vector<2x16x1xf32> -> vector<2x16x1xf32>
    %100 = vector.broadcast %99 : vector<2x16x1xf32> to vector<2x16x128xf32>
    %101 = arith.mulf %98, %100 : vector<2x16x128xf32>
    %102 = vector.shape_cast %101 : vector<2x16x128xf32> to vector<2x2x8x128xf32>
    %103 = tpu.transpose %102, [0, 2, 1, 3] : vector<2x2x8x128xf32> -> vector<2x8x2x128xf32>
    %104 = vector.shape_cast %103 : vector<2x8x2x128xf32> to vector<16x256xf32>
    %105 = arith.truncf %104 : vector<16x256xf32> to vector<16x256xbf16>
    %c0_31 = arith.constant 0 : index
    %c0_32 = arith.constant 0 : index
    %106 = vector.load %arg6[%c0_31, %c0_32] : memref<256x256xbf16, #tpu.memory_space<vmem>>, vector<256x256xbf16>
    %cst_33 = arith.constant dense<0.000000e+00> : vector<16x256xf32>
    %107 = tpu.matmul %105, %106, %cst_33 {dimension_numbers = #tpu.dot_dimension_numbers<[1], [0], [0], [1], [0, 0, 1, 1], [], []>} : vector<16x256xbf16>, vector<256x256xbf16>, vector<16x256xf32> -> vector<16x256xf32>
    %108 = arith.addf %1, %107 : vector<16x256xf32>
    %c0_34 = arith.constant 0 : index
    %c0_35 = arith.constant 0 : index
    %109 = vector.load %arg10[%c0_34, %c0_35] : memref<1x256xf32, #tpu.memory_space<vmem>>, vector<1x256xf32>
    %110 = arith.mulf %108, %108 : vector<16x256xf32>
    %cst_36 = arith.constant dense<0.000000e+00> : vector<16xf32>
    %111 = vector.multi_reduction <add>, %110, %cst_36 [1] : vector<16x256xf32> to vector<16xf32>
    %112 = vector.shape_cast %111 : vector<16xf32> to vector<16x1xf32>
    %cst_37 = arith.constant 2.560000e+02 : f32
    %113 = vector.broadcast %cst_37 : f32 to vector<16x1xf32>
    %114 = arith.divf %112, %113 : vector<16x1xf32>
    %cst_38 = arith.constant 9.99999997E-7 : f32
    %115 = vector.broadcast %cst_38 : f32 to vector<16x1xf32>
    %116 = arith.addf %114, %115 : vector<16x1xf32>
    %117 = math.rsqrt %116 : vector<16x1xf32>
    %118 = vector.broadcast %117 : vector<16x1xf32> to vector<16x256xf32>
    %119 = arith.mulf %108, %118 : vector<16x256xf32>
    %120 = vector.broadcast %109 : vector<1x256xf32> to vector<16x256xf32>
    %121 = arith.mulf %119, %120 : vector<16x256xf32>
    %122 = arith.truncf %121 : vector<16x256xf32> to vector<16x256xbf16>
    %c0_39 = arith.constant 0 : index
    %c0_40 = arith.constant 0 : index
    %123 = vector.load %arg11[%c0_39, %c0_40] : memref<256x1024xbf16, #tpu.memory_space<vmem>>, vector<256x1024xbf16>
    %cst_41 = arith.constant dense<0.000000e+00> : vector<16x1024xf32>
    %124 = tpu.matmul %122, %123, %cst_41 {dimension_numbers = #tpu.dot_dimension_numbers<[1], [0], [0], [1], [0, 0, 1, 1], [], []>} : vector<16x256xbf16>, vector<256x1024xbf16>, vector<16x1024xf32> -> vector<16x1024xf32>
    %125 = vector.extract_strided_slice %124 {offsets = [0, 0], sizes = [16, 512], strides = [1, 1]} : vector<16x1024xf32> to vector<16x512xf32>
    %126 = arith.negf %125 : vector<16x512xf32>
    %127 = math.exp %126 : vector<16x512xf32>
    %cst_42 = arith.constant 1.000000e+00 : f32
    %128 = vector.broadcast %cst_42 : f32 to vector<16x512xf32>
    %129 = arith.addf %128, %127 : vector<16x512xf32>
    %130 = arith.divf %128, %129 : vector<16x512xf32>
    %131 = arith.mulf %125, %130 : vector<16x512xf32>
    %132 = vector.extract_strided_slice %124 {offsets = [0, 512], sizes = [16, 512], strides = [1, 1]} : vector<16x1024xf32> to vector<16x512xf32>
    %133 = arith.mulf %131, %132 : vector<16x512xf32>
    %134 = arith.truncf %133 : vector<16x512xf32> to vector<16x512xbf16>
    %c0_43 = arith.constant 0 : index
    %c0_44 = arith.constant 0 : index
    %135 = vector.load %arg12[%c0_43, %c0_44] : memref<512x256xbf16, #tpu.memory_space<vmem>>, vector<512x256xbf16>
    %cst_45 = arith.constant dense<0.000000e+00> : vector<16x256xf32>
    %136 = tpu.matmul %134, %135, %cst_45 {dimension_numbers = #tpu.dot_dimension_numbers<[1], [0], [0], [1], [0, 0, 1, 1], [], []>} : vector<16x512xbf16>, vector<512x256xbf16>, vector<16x256xf32> -> vector<16x256xf32>
    %137 = arith.addf %108, %136 : vector<16x256xf32>
    %138 = vector.shape_cast %137 : vector<16x256xf32> to vector<2x8x256xf32>
    %c0_46 = arith.constant 0 : index
    %c0_47 = arith.constant 0 : index
    %c0_48 = arith.constant 0 : index
    %139 = vector.load %arg13[%c0_46, %c0_47, %c0_48] : memref<2x8x256xf32, #tpu.memory_space<vmem>>, vector<2x8x256xf32>
    tpu.vector_store %arg13[%c0_46, %c0_47, %c0_48], %138 {strides = array<i32>} : memref<2x8x256xf32, #tpu.memory_space<vmem>>, vector<2x8x256xf32>,
    return
  }
  func.func @transform_0(%arg0: i32) -> (i32, i32, i32) {
    %c0_i32 = arith.constant 0 : i32
    %c0_i32_0 = arith.constant 0 : i32
    %c0_i32_1 = arith.constant 0 : i32
    return %arg0, %c0_i32, %c0_i32_0 : i32, i32, i32
  }
  func.func @transform_1(%arg0: i32) -> (i32, i32) {
    %c0_i32 = arith.constant 0 : i32
    %c0_i32_0 = arith.constant 0 : i32
    %c0_i32_1 = arith.constant 0 : i32
    return %c0_i32, %c0_i32_0 : i32, i32
  }
  func.func @transform_2(%arg0: i32) -> (i32, i32) {
    %c0_i32 = arith.constant 0 : i32
    %c0_i32_0 = arith.constant 0 : i32
    %c0_i32_1 = arith.constant 0 : i32
    return %c0_i32, %c0_i32_0 : i32, i32
  }
  func.func @transform_3(%arg0: i32) -> (i32, i32) {
    %c0_i32 = arith.constant 0 : i32
    %c0_i32_0 = arith.constant 0 : i32
    %c0_i32_1 = arith.constant 0 : i32
    return %c0_i32, %c0_i32_0 : i32, i32
  }
  func.func @transform_4(%arg0: i32) -> (i32, i32) {
    %c0_i32 = arith.constant 0 : i32
    %c0_i32_0 = arith.constant 0 : i32
    %c0_i32_1 = arith.constant 0 : i32
    return %c0_i32, %c0_i32_0 : i32, i32
  }
  func.func @transform_5(%arg0: i32) -> (i32, i32) {
    %c0_i32 = arith.constant 0 : i32
    %c0_i32_0 = arith.constant 0 : i32
    %c0_i32_1 = arith.constant 0 : i32
    return %c0_i32, %c0_i32_0 : i32, i32
  }
  func.func @transform_6(%arg0: i32) -> (i32, i32) {
    %c0_i32 = arith.constant 0 : i32
    %c0_i32_0 = arith.constant 0 : i32
    %c0_i32_1 = arith.constant 0 : i32
    return %c0_i32, %c0_i32_0 : i32, i32
  }
  func.func @transform_7(%arg0: i32) -> (i32, i32) {
    %c0_i32 = arith.constant 0 : i32
    %c0_i32_0 = arith.constant 0 : i32
    %c0_i32_1 = arith.constant 0 : i32
    return %c0_i32, %c0_i32_0 : i32, i32
  }
  func.func @transform_8(%arg0: i32) -> (i32, i32) {
    %c0_i32 = arith.constant 0 : i32
    %c0_i32_0 = arith.constant 0 : i32
    %c0_i32_1 = arith.constant 0 : i32
    return %c0_i32, %c0_i32_0 : i32, i32
  }
  func.func @transform_9(%arg0: i32) -> (i32, i32) {
    %c0_i32 = arith.constant 0 : i32
    %c0_i32_0 = arith.constant 0 : i32
    %c0_i32_1 = arith.constant 0 : i32
    return %c0_i32, %c0_i32_0 : i32, i32
  }
  func.func @transform_10(%arg0: i32) -> (i32, i32) {
    %c0_i32 = arith.constant 0 : i32
    %c0_i32_0 = arith.constant 0 : i32
    %c0_i32_1 = arith.constant 0 : i32
    return %c0_i32, %c0_i32_0 : i32, i32
  }
  func.func @transform_11(%arg0: i32) -> (i32, i32) {
    %c0_i32 = arith.constant 0 : i32
    %c0_i32_0 = arith.constant 0 : i32
    %c0_i32_1 = arith.constant 0 : i32
    return %c0_i32, %c0_i32_0 : i32, i32
  }
  func.func @transform_12(%arg0: i32) -> (i32, i32, i32) {
    %c0_i32 = arith.constant 0 : i32
    %c0_i32_0 = arith.constant 0 : i32
    %c0_i32_1 = arith.constant 0 : i32
    return %arg0, %c0_i32, %c0_i32_0 : i32, i32, i32
  }
}

</mosaic_0001>

<llo_original>
// kernel: qwen3_transformer_block.1
$region0: #{qwen3_transformer_block.1}
  #allocation0 [shape = 'u32[]', space=smem, size = 0x4, offset = 0x4, fixed_abs, tag = 'smem constant byte address 0x4 - core index']
  #allocation1 [shape = 'u32[144,128]{1,0:T(1,128)}', space=vmem, size = 0x12000, scoped, tag = 'internal scratch']
  %s0 = inlined_call_operand.hbm [shape: f32[2,8,256], index: 0, kind: input, shape index: {}]
  %s1 = inlined_call_operand.vmem [shape: f32[16,8], index: 1, kind: input, shape index: {}]
  %s2 = inlined_call_operand.hbm [shape: f32[8,128], index: 2, kind: input, shape index: {}]
  %s3 = inlined_call_operand.hbm [shape: f32[8,128], index: 3, kind: input, shape index: {}]
  %s4 = inlined_call_operand.hbm [shape: bf16[256,512], index: 4, kind: input, shape index: {}]
  %s5 = inlined_call_operand.hbm [shape: bf16[256,256], index: 5, kind: input, shape index: {}]
  %s6 = inlined_call_operand.vmem [shape: f32[1,128], index: 6, kind: input, shape index: {}]
  %s7 = inlined_call_operand.vmem [shape: f32[1,128], index: 7, kind: input, shape index: {}]
  %s8 = inlined_call_operand.vmem [shape: f32[1,256], index: 8, kind: input, shape index: {}]
  %s9 = inlined_call_operand.vmem [shape: f32[1,256], index: 9, kind: input, shape index: {}]
  %s10 = inlined_call_operand.hbm [shape: bf16[256,1024], index: 10, kind: input, shape index: {}]
  %s11 = inlined_call_operand.hbm [shape: bf16[512,256], index: 11, kind: input, shape index: {}]
  %s12 = inlined_call_operand.hbm [shape: f32[2,8,256], index: 12, kind: output, shape index: {}]
  %s13 = sld [smem:[#allocation0]]
  $region86: #{qwen3_transformer_block.1} parent=0
    _
  %s15 = ssub.s32 1, %s13
  %s16 = scalar_select 0, %s15, %s13
  $region1: #{qwen3_transformer_block.1} parent=0
    #allocation2 [shape = 'u8[16384]{0}', space=vmem, size = 0x4000, scoped, tag = 'input window, operand 0, single buffered']
    #allocation3 [shape = 's32[1]{0}', space=sflag, size = 0x4, scoped, tag = 'scoped memory for qwen3_transformer_block.1']
    #allocation4 [shape = 's32[1]{0}', space=sflag, size = 0x4, scoped, tag = 'scoped memory for qwen3_transformer_block.1']
    #allocation5 [shape = 'u8[4096]{0}', space=vmem, size = 0x1000, scoped, tag = 'input window, operand 2, single buffered']
    #allocation6 [shape = 's32[1]{0}', space=sflag, size = 0x4, scoped, tag = 'scoped memory for qwen3_transformer_block.1']
    #allocation7 [shape = 'u8[4096]{0}', space=vmem, size = 0x1000, scoped, tag = 'input window, operand 3, single buffered']
    #allocation8 [shape = 'u8[262144]{0}', space=vmem, size = 0x40000, scoped, tag = 'input window, operand 4, single buffered']
    #allocation9 [shape = 's32[1]{0}', space=sflag, size = 0x4, scoped, tag = 'scoped memory for qwen3_transformer_block.1']
    #allocation10 [shape = 'u8[131072]{0}', space=vmem, size = 0x20000, scoped, tag = 'input window, operand 5, single buffered']
    #allocation11 [shape = 'u8[524288]{0}', space=vmem, size = 0x80000, scoped, tag = 'input window, operand 10, single buffered']
    #allocation12 [shape = 's32[1]{0}', space=sflag, size = 0x4, scoped, tag = 'scoped memory for qwen3_transformer_block.1']
    #allocation13 [shape = 'u8[262144]{0}', space=vmem, size = 0x40000, scoped, tag = 'input window, operand 11, single buffered']
    #allocation14 [shape = 'u8[16384]{0}', space=vmem, size = 0x4000, scoped, tag = 'output window, operand 0, single buffered']
    %17 = vsyncpa [#allocation3], 0
    %18 = vsyncpa [#allocation6], 0
    %19 = vsyncpa [#allocation9], 0
    %20 = vsyncpa [#allocation12], 0
    %21 = vsyncpa [#allocation4], 0
    // Predicated region
    $region2: #{qwen3_transformer_block.1} parent=1 // pred_check
      _
    $region3: #{qwen3_transformer_block.1} parent=1 // pred_check_branch
      %23 = sbr.rel (0) target = $region5
    $region4: #{qwen3_transformer_block.1} parent=1 // pred_region
      %s25 = ssub.s32 512, 512
      %26 = vsyncadd [#allocation3], %s25
      %s27 = sshll.u32 [#allocation2], 4
      %s28 = int_to_ptr.vmem [resolvable:$true] %s27
      %33 = dma.hbm_to_vmem [thread:$0]  %s0, 512, %s28, [#allocation3], 256, 256, 16
    $region5: #{qwen3_transformer_block.1} parent=1 // pred_fallthru
      _
    // Predicated region
    $region6: #{qwen3_transformer_block.1} parent=1 // pred_check
      _
    $region7: #{qwen3_transformer_block.1} parent=1 // pred_check_branch
      %35 = sbr.rel (0) target = $region9
    $region8: #{qwen3_transformer_block.1} parent=1 // pred_region
      _
    $region9: #{qwen3_transformer_block.1} parent=1 // pred_fallthru
      _
    // Predicated region
    $region10: #{qwen3_transformer_block.1} parent=1 // pred_check
      _
    $region11: #{qwen3_transformer_block.1} parent=1 // pred_check_branch
      %37 = sbr.rel (0) target = $region13
    $region12: #{qwen3_transformer_block.1} parent=1 // pred_region
      %s39 = ssub.s32 128, 128
      %40 = vsyncadd [#allocation6], %s39
      %s42 = sshll.u32 [#allocation5], 4
      %s43 = int_to_ptr.vmem [resolvable:$true] %s42
      %45 = dma.hbm_to_vmem [thread:$0]  %s2, 128, %s43, [#allocation6]
    $region13: #{qwen3_transformer_block.1} parent=1 // pred_fallthru
      _
    // Predicated region
    $region14: #{qwen3_transformer_block.1} parent=1 // pred_check
      _
    $region15: #{qwen3_transformer_block.1} parent=1 // pred_check_branch
      %47 = sbr.rel (0) target = $region17
    $region16: #{qwen3_transformer_block.1} parent=1 // pred_region
      %s49 = ssub.s32 128, 128
      %50 = vsyncadd [#allocation6], %s49
      %s52 = sshll.u32 [#allocation7], 4
      %s53 = int_to_ptr.vmem [resolvable:$true] %s52
      %55 = dma.hbm_to_vmem [thread:$0]  %s3, 128, %s53, [#allocation6]
    $region17: #{qwen3_transformer_block.1} parent=1 // pred_fallthru
      _
    // Predicated region
    $region18: #{qwen3_transformer_block.1} parent=1 // pred_check
      _
    $region19: #{qwen3_transformer_block.1} parent=1 // pred_check_branch
      %57 = sbr.rel (0) target = $region21
    $region20: #{qwen3_transformer_block.1} parent=1 // pred_region
      %s59 = ssub.s32 8192, 8192
      %60 = vsyncadd [#allocation9], %s59
      %s61 = sshll.u32 [#allocation8], 4
      %s62 = int_to_ptr.vmem [resolvable:$true] %s61
      %67 = dma.hbm_to_vmem [thread:$0]  %s4, 8192, %s62, [#allocation9], 256, 256, 16
    $region21: #{qwen3_transformer_block.1} parent=1 // pred_fallthru
      _
    // Predicated region
    $region22: #{qwen3_transformer_block.1} parent=1 // pred_check
      _
    $region23: #{qwen3_transformer_block.1} parent=1 // pred_check_branch
      %69 = sbr.rel (0) target = $region25
    $region24: #{qwen3_transformer_block.1} parent=1 // pred_region
      %s71 = ssub.s32 4096, 4096
      %72 = vsyncadd [#allocation9], %s71
      %s73 = sshll.u32 [#allocation10], 4
      %s74 = int_to_ptr.vmem [resolvable:$true] %s73
      %79 = dma.hbm_to_vmem [thread:$0]  %s5, 4096, %s74, [#allocation9], 128, 128, 8
    $region25: #{qwen3_transformer_block.1} parent=1 // pred_fallthru
      _
    // Predicated region
    $region26: #{qwen3_transformer_block.1} parent=1 // pred_check
      _
    $region27: #{qwen3_transformer_block.1} parent=1 // pred_check_branch
      %81 = sbr.rel (0) target = $region29
    $region28: #{qwen3_transformer_block.1} parent=1 // pred_region
      _
    $region29: #{qwen3_transformer_block.1} parent=1 // pred_fallthru
      _
    // Predicated region
    $region30: #{qwen3_transformer_block.1} parent=1 // pred_check
      _
    $region31: #{qwen3_transformer_block.1} parent=1 // pred_check_branch
      %83 = sbr.rel (0) target = $region33
    $region32: #{qwen3_transformer_block.1} parent=1 // pred_region
      _
    $region33: #{qwen3_transformer_block.1} parent=1 // pred_fallthru
      _
    // Predicated region
    $region34: #{qwen3_transformer_block.1} parent=1 // pred_check
      _
    $region35: #{qwen3_transformer_block.1} parent=1 // pred_check_branch
      %85 = sbr.rel (0) target = $region37
    $region36: #{qwen3_transformer_block.1} parent=1 // pred_region
      _
    $region37: #{qwen3_transformer_block.1} parent=1 // pred_fallthru
      _
    // Predicated region
    $region38: #{qwen3_transformer_block.1} parent=1 // pred_check
      _
    $region39: #{qwen3_transformer_block.1} parent=1 // pred_check_branch
      %87 = sbr.rel (0) target = $region41
    $region40: #{qwen3_transformer_block.1} parent=1 // pred_region
      _
    $region41: #{qwen3_transformer_block.1} parent=1 // pred_fallthru
      _
    // Predicated region
    $region42: #{qwen3_transformer_block.1} parent=1 // pred_check
      _
    $region43: #{qwen3_transformer_block.1} parent=1 // pred_check_branch
      %89 = sbr.rel (0) target = $region45
    $region44: #{qwen3_transformer_block.1} parent=1 // pred_region
      %s91 = ssub.s32 16384, 16384
      %92 = vsyncadd [#allocation12], %s91
      %s93 = sshll.u32 [#allocation11], 4
      %s94 = int_to_ptr.vmem [resolvable:$true] %s93
      %99 = dma.hbm_to_vmem [thread:$0]  %s10, 16384, %s94, [#allocation12], 512, 512, 32
    $region45: #{qwen3_transformer_block.1} parent=1 // pred_fallthru
      _
    // Predicated region
    $region46: #{qwen3_transformer_block.1} parent=1 // pred_check
      _
    $region47: #{qwen3_transformer_block.1} parent=1 // pred_check_branch
      %101 = sbr.rel (0) target = $region49
    $region48: #{qwen3_transformer_block.1} parent=1 // pred_region
      %s103 = ssub.s32 8192, 8192
      %104 = vsyncadd [#allocation12], %s103
      %s105 = sshll.u32 [#allocation13], 4
      %s106 = int_to_ptr.vmem [resolvable:$true] %s105
      %111 = dma.hbm_to_vmem [thread:$0]  %s11, 8192, %s106, [#allocation12], 128, 128, 8
    $region49: #{qwen3_transformer_block.1} parent=1 // pred_fallthru
      _
    // Predicated region
    $region50: #{qwen3_transformer_block.1} parent=1 // pred_check
      _
    $region51: #{qwen3_transformer_block.1} parent=1 // pred_check_branch
      %113 = sbr.rel (0) target = $region53
    $region52: #{qwen3_transformer_block.1} parent=1 // pred_region
      %114 = dma.done [#allocation3], 512
    $region53: #{qwen3_transformer_block.1} parent=1 // pred_fallthru
      _
    // Predicated region
    $region54: #{qwen3_transformer_block.1} parent=1 // pred_check
      _
    $region55: #{qwen3_transformer_block.1} parent=1 // pred_check_branch
      %116 = sbr.rel (0) target = $region57
    $region56: #{qwen3_transformer_block.1} parent=1 // pred_region
      %117 = dma.done [#allocation6], 128
    $region57: #{qwen3_transformer_block.1} parent=1 // pred_fallthru
      _
    // Predicated region
    $region58: #{qwen3_transformer_block.1} parent=1 // pred_check
      _
    $region59: #{qwen3_transformer_block.1} parent=1 // pred_check_branch
      %119 = sbr.rel (0) target = $region61
    $region60: #{qwen3_transformer_block.1} parent=1 // pred_region
      %120 = dma.done [#allocation6], 128
    $region61: #{qwen3_transformer_block.1} parent=1 // pred_fallthru
      _
    // Predicated region
    $region62: #{qwen3_transformer_block.1} parent=1 // pred_check
      _
    $region63: #{qwen3_transformer_block.1} parent=1 // pred_check_branch
      %122 = sbr.rel (0) target = $region65
    $region64: #{qwen3_transformer_block.1} parent=1 // pred_region
      %123 = dma.done [#allocation9], 8192
    $region65: #{qwen3_transformer_block.1} parent=1 // pred_fallthru
      _
    // Predicated region
    $region66: #{qwen3_transformer_block.1} parent=1 // pred_check
      _
    $region67: #{qwen3_transformer_block.1} parent=1 // pred_check_branch
      %125 = sbr.rel (0) target = $region69
    $region68: #{qwen3_transformer_block.1} parent=1 // pred_region
      %126 = dma.done [#allocation9], 4096
    $region69: #{qwen3_transformer_block.1} parent=1 // pred_fallthru
      _
    // Predicated region
    $region70: #{qwen3_transformer_block.1} parent=1 // pred_check
      _
    $region71: #{qwen3_transformer_block.1} parent=1 // pred_check_branch
      %128 = sbr.rel (0) target = $region73
    $region72: #{qwen3_transformer_block.1} parent=1 // pred_region
      %129 = dma.done [#allocation12], 16384
    $region73: #{qwen3_transformer_block.1} parent=1 // pred_fallthru
      _
    // Predicated region
    $region74: #{qwen3_transformer_block.1} parent=1 // pred_check
      _
    $region75: #{qwen3_transformer_block.1} parent=1 // pred_check_branch
      %131 = sbr.rel (0) target = $region77
    $region76: #{qwen3_transformer_block.1} parent=1 // pred_region
      %132 = dma.done [#allocation12], 8192
    $region77: #{qwen3_transformer_block.1} parent=1 // pred_fallthru
      _
    %v134 = vld [vmem:[#allocation2] sm:$0xff]
    %v135 = vld [vmem:[#allocation2 + $0x8] sm:$0xff]
    %v136 = vld [vmem:[#allocation2 + $0x10] sm:$0xff]
    %v137 = vld [vmem:[#allocation2 + $0x18] sm:$0xff]
    %v138 = vld [vmem:[%s8] sm:$0x3]
    %v139 = vmul.f32 %v134, %v134
    %v140 = vmul.f32 %v135, %v135
    %v141 = vmul.f32 %v136, %v136
    %v142 = vmul.f32 %v137, %v137
    %v143 = vadd.f32 %v139, %v140
    %144 = vadd.xlane.f32.xlu0 %v143
    %v145 = vpop.xlane.xlu0 %144
    %v146 = vadd.f32 %v141, %v142
    %147 = vadd.xlane.f32.xlu0 %v146
    %v148 = vpop.xlane.xlu0 %147
    %v149 = vrcp.pop 256.0
    %v150 = vmul.f32 %v145, %v149
    %v151 = vmul.f32 %v148, %v149
    %v152 = vadd.f32 %v150, 1e-06
    %v153 = vadd.f32 %v151, 1e-06
    %v154 = vrsqrt.pop %v152
    %v155 = vrsqrt.pop %v153
    %v156 = vmul.f32 %v134, %v154
    %v157 = vmul.f32 %v135, %v154
    %v158 = vmul.f32 %v136, %v155
    %v159 = vmul.f32 %v137, %v155
    %v161 = vlaneseq
    %v162 = vshrl.u32 %v161, 7
    %v163 = vsub.s32 0, %v162
    %v164 = vrot.slane %v138, %v163
    %v165 = vlaneseq
    %v166 = vshrl.u32 %v165, 7
    %v167 = vsub.s32 1, %v166
    %v168 = vrot.slane %v138, %v167
    %v171 = vmul.f32 %v156, %v164
    %v172 = vmul.f32 %v157, %v168
    %v173 = vmul.f32 %v158, %v164
    %v174 = vmul.f32 %v159, %v168
    %v175 = vpack.c.bf16 %v173, %v171
    %v176 = vpack.c.bf16 %v174, %v172
    %v177 = vld [vmem:[#allocation8] sm:$0xff]
    %v178 = vld [vmem:[#allocation8 + $0x8] sm:$0xff]
    %v179 = vld [vmem:[#allocation8 + $0x10] sm:$0xff]
    %v180 = vld [vmem:[#allocation8 + $0x18] sm:$0xff]
    %v181 = vld [vmem:[#allocation8 + $0x20] sm:$0xff]
    %v182 = vld [vmem:[#allocation8 + $0x28] sm:$0xff]
    %v183 = vld [vmem:[#allocation8 + $0x30] sm:$0xff]
    %v184 = vld [vmem:[#allocation8 + $0x38] sm:$0xff]
    %v185 = vld [vmem:[#allocation8 + $0x40] sm:$0xff]
    %v186 = vld [vmem:[#allocation8 + $0x48] sm:$0xff]
    %v187 = vld [vmem:[#allocation8 + $0x50] sm:$0xff]
    %v188 = vld [vmem:[#allocation8 + $0x58] sm:$0xff]
    %v189 = vld [vmem:[#allocation8 + $0x60] sm:$0xff]
    %v190 = vld [vmem:[#allocation8 + $0x68] sm:$0xff]
    %v191 = vld [vmem:[#allocation8 + $0x70] sm:$0xff]
    %v192 = vld [vmem:[#allocation8 + $0x78] sm:$0xff]
    %v193 = vld [vmem:[#allocation8 + $0x80] sm:$0xff]
    %v194 = vld [vmem:[#allocation8 + $0x88] sm:$0xff]
    %v195 = vld [vmem:[#allocation8 + $0x90] sm:$0xff]
    %v196 = vld [vmem:[#allocation8 + $0x98] sm:$0xff]
    %v197 = vld [vmem:[#allocation8 + $0xa0] sm:$0xff]
    %v198 = vld [vmem:[#allocation8 + $0xa8] sm:$0xff]
    %v199 = vld [vmem:[#allocation8 + $0xb0] sm:$0xff]
    %v200 = vld [vmem:[#allocation8 + $0xb8] sm:$0xff]
    %v201 = vld [vmem:[#allocation8 + $0xc0] sm:$0xff]
    %v202 = vld [vmem:[#allocation8 + $0xc8] sm:$0xff]
    %v203 = vld [vmem:[#allocation8 + $0xd0] sm:$0xff]
    %v204 = vld [vmem:[#allocation8 + $0xd8] sm:$0xff]
    %v205 = vld [vmem:[#allocation8 + $0xe0] sm:$0xff]
    %v206 = vld [vmem:[#allocation8 + $0xe8] sm:$0xff]
    %v207 = vld [vmem:[#allocation8 + $0xf0] sm:$0xff]
    %v208 = vld [vmem:[#allocation8 + $0xf8] sm:$0xff]
    %v209 = vld [vmem:[#allocation8 + $0x100] sm:$0xff]
    %v210 = vld [vmem:[#allocation8 + $0x108] sm:$0xff]
    %v211 = vld [vmem:[#allocation8 + $0x110] sm:$0xff]
    %v212 = vld [vmem:[#allocation8 + $0x118] sm:$0xff]
    %v213 = vld [vmem:[#allocation8 + $0x120] sm:$0xff]
    %v214 = vld [vmem:[#allocation8 + $0x128] sm:$0xff]
    %v215 = vld [vmem:[#allocation8 + $0x130] sm:$0xff]
    %v216 = vld [vmem:[#allocation8 + $0x138] sm:$0xff]
    %v217 = vld [vmem:[#allocation8 + $0x140] sm:$0xff]
    %v218 = vld [vmem:[#allocation8 + $0x148] sm:$0xff]
    %v219 = vld [vmem:[#allocation8 + $0x150] sm:$0xff]
    %v220 = vld [vmem:[#allocation8 + $0x158] sm:$0xff]
    %v221 = vld [vmem:[#allocation8 + $0x160] sm:$0xff]
    %v222 = vld [vmem:[#allocation8 + $0x168] sm:$0xff]
    %v223 = vld [vmem:[#allocation8 + $0x170] sm:$0xff]
    %v224 = vld [vmem:[#allocation8 + $0x178] sm:$0xff]
    %v225 = vld [vmem:[#allocation8 + $0x180] sm:$0xff]
    %v226 = vld [vmem:[#allocation8 + $0x188] sm:$0xff]
    %v227 = vld [vmem:[#allocation8 + $0x190] sm:$0xff]
    %v228 = vld [vmem:[#allocation8 + $0x198] sm:$0xff]
    %v229 = vld [vmem:[#allocation8 + $0x1a0] sm:$0xff]
    %v230 = vld [vmem:[#allocation8 + $0x1a8] sm:$0xff]
    %v231 = vld [vmem:[#allocation8 + $0x1b0] sm:$0xff]
    %v232 = vld [vmem:[#allocation8 + $0x1b8] sm:$0xff]
    %v233 = vld [vmem:[#allocation8 + $0x1c0] sm:$0xff]
    %v234 = vld [vmem:[#allocation8 + $0x1c8] sm:$0xff]
    %v235 = vld [vmem:[#allocation8 + $0x1d0] sm:$0xff]
    %v236 = vld [vmem:[#allocation8 + $0x1d8] sm:$0xff]
    %v237 = vld [vmem:[#allocation8 + $0x1e0] sm:$0xff]
    %v238 = vld [vmem:[#allocation8 + $0x1e8] sm:$0xff]
    %v239 = vld [vmem:[#allocation8 + $0x1f0] sm:$0xff]
    %v240 = vld [vmem:[#allocation8 + $0x1f8] sm:$0xff]
    %v305 = vunpack.c.l.b16 %v177
    %v306 = vunpack.c.h.b16 %v177
    %v307 = vunpack.c.l.b16 %v178
    %v308 = vunpack.c.h.b16 %v178
    %v309 = vunpack.c.l.b16 %v179
    %v310 = vunpack.c.h.b16 %v179
    %v311 = vunpack.c.l.b16 %v180
    %v312 = vunpack.c.h.b16 %v180
    %v313 = vunpack.c.l.b16 %v181
    %v314 = vunpack.c.h.b16 %v181
    %v315 = vunpack.c.l.b16 %v182
    %v316 = vunpack.c.h.b16 %v182
    %v317 = vunpack.c.l.b16 %v183
    %v318 = vunpack.c.h.b16 %v183
    %v319 = vunpack.c.l.b16 %v184
    %v320 = vunpack.c.h.b16 %v184
    %v321 = vunpack.c.l.b16 %v185
    %v322 = vunpack.c.h.b16 %v185
    %v323 = vunpack.c.l.b16 %v186
    %v324 = vunpack.c.h.b16 %v186
    %v325 = vunpack.c.l.b16 %v187
    %v326 = vunpack.c.h.b16 %v187
    %v327 = vunpack.c.l.b16 %v188
    %v328 = vunpack.c.h.b16 %v188
    %v329 = vunpack.c.l.b16 %v189
    %v330 = vunpack.c.h.b16 %v189
    %v331 = vunpack.c.l.b16 %v190
    %v332 = vunpack.c.h.b16 %v190
    %v333 = vunpack.c.l.b16 %v191
    %v334 = vunpack.c.h.b16 %v191
    %v335 = vunpack.c.l.b16 %v192
    %v336 = vunpack.c.h.b16 %v192
    %v337 = vunpack.c.l.b16 %v193
    %v338 = vunpack.c.h.b16 %v193
    %v339 = vunpack.c.l.b16 %v194
    %v340 = vunpack.c.h.b16 %v194
    %v341 = vunpack.c.l.b16 %v195
    %v342 = vunpack.c.h.b16 %v195
    %v343 = vunpack.c.l.b16 %v196
    %v344 = vunpack.c.h.b16 %v196
    %v345 = vunpack.c.l.b16 %v197
    %v346 = vunpack.c.h.b16 %v197
    %v347 = vunpack.c.l.b16 %v198
    %v348 = vunpack.c.h.b16 %v198
    %v349 = vunpack.c.l.b16 %v199
    %v350 = vunpack.c.h.b16 %v199
    %v351 = vunpack.c.l.b16 %v200
    %v352 = vunpack.c.h.b16 %v200
    %v353 = vunpack.c.l.b16 %v201
    %v354 = vunpack.c.h.b16 %v201
    %v355 = vunpack.c.l.b16 %v202
    %v356 = vunpack.c.h.b16 %v202
    %v357 = vunpack.c.l.b16 %v203
    %v358 = vunpack.c.h.b16 %v203
    %v359 = vunpack.c.l.b16 %v204
    %v360 = vunpack.c.h.b16 %v204
    %v361 = vunpack.c.l.b16 %v205
    %v362 = vunpack.c.h.b16 %v205
    %v363 = vunpack.c.l.b16 %v206
    %v364 = vunpack.c.h.b16 %v206
    %v365 = vunpack.c.l.b16 %v207
    %v366 = vunpack.c.h.b16 %v207
    %v367 = vunpack.c.l.b16 %v208
    %v368 = vunpack.c.h.b16 %v208
    %v369 = vunpack.c.l.b16 %v209
    %v370 = vunpack.c.h.b16 %v209
    %v371 = vunpack.c.l.b16 %v210
    %v372 = vunpack.c.h.b16 %v210
    %v373 = vunpack.c.l.b16 %v211
    %v374 = vunpack.c.h.b16 %v211
    %v375 = vunpack.c.l.b16 %v212
    %v376 = vunpack.c.h.b16 %v212
    %v377 = vunpack.c.l.b16 %v213
    %v378 = vunpack.c.h.b16 %v213
    %v379 = vunpack.c.l.b16 %v214
    %v380 = vunpack.c.h.b16 %v214
    %v381 = vunpack.c.l.b16 %v215
    %v382 = vunpack.c.h.b16 %v215
    %v383 = vunpack.c.l.b16 %v216
    %v384 = vunpack.c.h.b16 %v216
    %v385 = vunpack.c.l.b16 %v217
    %v386 = vunpack.c.h.b16 %v217
    %v387 = vunpack.c.l.b16 %v218
    %v388 = vunpack.c.h.b16 %v218
    %v389 = vunpack.c.l.b16 %v219
    %v390 = vunpack.c.h.b16 %v219
    %v391 = vunpack.c.l.b16 %v220
    %v392 = vunpack.c.h.b16 %v220
    %v393 = vunpack.c.l.b16 %v221
    %v394 = vunpack.c.h.b16 %v221
    %v395 = vunpack.c.l.b16 %v222
    %v396 = vunpack.c.h.b16 %v222
    %v397 = vunpack.c.l.b16 %v223
    %v398 = vunpack.c.h.b16 %v223
    %v399 = vunpack.c.l.b16 %v224
    %v400 = vunpack.c.h.b16 %v224
    %v401 = vunpack.c.l.b16 %v225
    %v402 = vunpack.c.h.b16 %v225
    %v403 = vunpack.c.l.b16 %v226
    %v404 = vunpack.c.h.b16 %v226
    %v405 = vunpack.c.l.b16 %v227
    %v406 = vunpack.c.h.b16 %v227
    %v407 = vunpack.c.l.b16 %v228
    %v408 = vunpack.c.h.b16 %v228
    %v409 = vunpack.c.l.b16 %v229
    %v410 = vunpack.c.h.b16 %v229
    %v411 = vunpack.c.l.b16 %v230
    %v412 = vunpack.c.h.b16 %v230
    %v413 = vunpack.c.l.b16 %v231
    %v414 = vunpack.c.h.b16 %v231
    %v415 = vunpack.c.l.b16 %v232
    %v416 = vunpack.c.h.b16 %v232
    %v417 = vunpack.c.l.b16 %v233
    %v418 = vunpack.c.h.b16 %v233
    %v419 = vunpack.c.l.b16 %v234
    %v420 = vunpack.c.h.b16 %v234
    %v421 = vunpack.c.l.b16 %v235
    %v422 = vunpack.c.h.b16 %v235
    %v423 = vunpack.c.l.b16 %v236
    %v424 = vunpack.c.h.b16 %v236
    %v425 = vunpack.c.l.b16 %v237
    %v426 = vunpack.c.h.b16 %v237
    %v427 = vunpack.c.l.b16 %v238
    %v428 = vunpack.c.h.b16 %v238
    %v429 = vunpack.c.l.b16 %v239
    %v430 = vunpack.c.h.b16 %v239
    %v431 = vunpack.c.l.b16 %v240
    %v432 = vunpack.c.h.b16 %v240
    %v433 = vpack.c.b16 %v309, %v305
    %v434 = vpack.c.b16 %v310, %v306
    %v435 = vpack.c.b16 %v311, %v307
    %v436 = vpack.c.b16 %v312, %v308
    %v437 = vpack.c.b16 %v317, %v313
    %v438 = vpack.c.b16 %v318, %v314
    %v439 = vpack.c.b16 %v319, %v315
    %v440 = vpack.c.b16 %v320, %v316
    %v441 = vpack.c.b16 %v325, %v321
    %v442 = vpack.c.b16 %v326, %v322
    %v443 = vpack.c.b16 %v327, %v323
    %v444 = vpack.c.b16 %v328, %v324
    %v445 = vpack.c.b16 %v333, %v329
    %v446 = vpack.c.b16 %v334, %v330
    %v447 = vpack.c.b16 %v335, %v331
    %v448 = vpack.c.b16 %v336, %v332
    %v449 = vpack.c.b16 %v341, %v337
    %v450 = vpack.c.b16 %v342, %v338
    %v451 = vpack.c.b16 %v343, %v339
    %v452 = vpack.c.b16 %v344, %v340
    %v453 = vpack.c.b16 %v349, %v345
    %v454 = vpack.c.b16 %v350, %v346
    %v455 = vpack.c.b16 %v351, %v347
    %v456 = vpack.c.b16 %v352, %v348
    %v457 = vpack.c.b16 %v357, %v353
    %v458 = vpack.c.b16 %v358, %v354
    %v459 = vpack.c.b16 %v359, %v355
    %v460 = vpack.c.b16 %v360, %v356
    %v461 = vpack.c.b16 %v365, %v361
    %v462 = vpack.c.b16 %v366, %v362
    %v463 = vpack.c.b16 %v367, %v363
    %v464 = vpack.c.b16 %v368, %v364
    %v465 = vpack.c.b16 %v373, %v369
    %v466 = vpack.c.b16 %v374, %v370
    %v467 = vpack.c.b16 %v375, %v371
    %v468 = vpack.c.b16 %v376, %v372
    %v469 = vpack.c.b16 %v381, %v377
    %v470 = vpack.c.b16 %v382, %v378
    %v471 = vpack.c.b16 %v383, %v379
    %v472 = vpack.c.b16 %v384, %v380
    %v473 = vpack.c.b16 %v389, %v385
    %v474 = vpack.c.b16 %v390, %v386
    %v475 = vpack.c.b16 %v391, %v387
    %v476 = vpack.c.b16 %v392, %v388
    %v477 = vpack.c.b16 %v397, %v393
    %v478 = vpack.c.b16 %v398, %v394
    %v479 = vpack.c.b16 %v399, %v395
    %v480 = vpack.c.b16 %v400, %v396
    %v481 = vpack.c.b16 %v405, %v401
    %v482 = vpack.c.b16 %v406, %v402
    %v483 = vpack.c.b16 %v407, %v403
    %v484 = vpack.c.b16 %v408, %v404
    %v485 = vpack.c.b16 %v413, %v409
    %v486 = vpack.c.b16 %v414, %v410
    %v487 = vpack.c.b16 %v415, %v411
    %v488 = vpack.c.b16 %v416, %v412
    %v489 = vpack.c.b16 %v421, %v417
    %v490 = vpack.c.b16 %v422, %v418
    %v491 = vpack.c.b16 %v423, %v419
    %v492 = vpack.c.b16 %v424, %v420
    %v493 = vpack.c.b16 %v429, %v425
    %v494 = vpack.c.b16 %v430, %v426
    %v495 = vpack.c.b16 %v431, %v427
    %v496 = vpack.c.b16 %v432, %v428
    %561 = vmatprep.subr.bf16.mxu0 %v434
    %562 = vmatpush1.bf16.msra.mxu0 %v433
    %563 = vmatprep.subr.bf16.mxu0 %v438
    %564 = vmatpush1.bf16.msra.mxu0 %v437
    %565 = vmatprep.subr.bf16.mxu0 %v442
    %566 = vmatpush1.bf16.msra.mxu0 %v441
    %567 = vmatprep.subr.bf16.mxu0 %v446
    %568 = vmatpush1.bf16.msra.mxu0 %v445
    %569 = vmatprep.subr.bf16.mxu0 %v450
    %570 = vmatpush1.bf16.msra.mxu0 %v449
    %571 = vmatprep.subr.bf16.mxu0 %v454
    %572 = vmatpush1.bf16.msra.mxu0 %v453
    %573 = vmatprep.subr.bf16.mxu0 %v458
    %574 = vmatpush1.bf16.msra.mxu0 %v457
    %575 = vmatprep.subr.bf16.mxu0 %v462
    %576 = vmatpush1.bf16.msra.mxu0 %v461
    %577 = vmatprep.subr.bf16.mxu0 %v466
    %578 = vmatpush1.bf16.msra.mxu0 %v465
    %579 = vmatprep.subr.bf16.mxu0 %v470
    %580 = vmatpush1.bf16.msra.mxu0 %v469
    %581 = vmatprep.subr.bf16.mxu0 %v474
    %582 = vmatpush1.bf16.msra.mxu0 %v473
    %583 = vmatprep.subr.bf16.mxu0 %v478
    %584 = vmatpush1.bf16.msra.mxu0 %v477
    %585 = vmatprep.subr.bf16.mxu0 %v482
    %586 = vmatpush1.bf16.msra.mxu0 %v481
    %587 = vmatprep.subr.bf16.mxu0 %v486
    %588 = vmatpush1.bf16.msra.mxu0 %v485
    %589 = vmatprep.subr.bf16.mxu0 %v490
    %590 = vmatpush1.bf16.msra.mxu0 %v489
    %591 = vmatprep.subr.bf16.mxu0 %v494
    %592 = vmatpush1.bf16.msra.mxu0 %v493
    %593 = vmatprep.mubr.bf16.mxu0 %v176
    %594 = vmatmul.mubr.bf16.gmra.mrb[0].mxu0 %v175
    %v595 = vpop.f32.mrb[0].mxu0
    %v596 = vadd.f32 0.0, %v595
    %v597 = vpop.f32.mrb[0].mxu0
    %v598 = vadd.f32 0.0, %v597
    %v599 = vpop.f32.mrb[0].mxu0
    %v600 = vadd.f32 0.0, %v599
    %v601 = vpop.f32.mrb[0].mxu0
    %v602 = vadd.f32 0.0, %v601
    %603 = vdwg.mxu0
    %604 = vmatprep.subr.bf16.mxu0 %v436
    %605 = vmatpush1.bf16.msra.mxu0 %v435
    %606 = vmatprep.subr.bf16.mxu0 %v440
    %607 = vmatpush1.bf16.msra.mxu0 %v439
    %608 = vmatprep.subr.bf16.mxu0 %v444
    %609 = vmatpush1.bf16.msra.mxu0 %v443
    %610 = vmatprep.subr.bf16.mxu0 %v448
    %611 = vmatpush1.bf16.msra.mxu0 %v447
    %612 = vmatprep.subr.bf16.mxu0 %v452
    %613 = vmatpush1.bf16.msra.mxu0 %v451
    %614 = vmatprep.subr.bf16.mxu0 %v456
    %615 = vmatpush1.bf16.msra.mxu0 %v455
    %616 = vmatprep.subr.bf16.mxu0 %v460
    %617 = vmatpush1.bf16.msra.mxu0 %v459
    %618 = vmatprep.subr.bf16.mxu0 %v464
    %619 = vmatpush1.bf16.msra.mxu0 %v463
    %620 = vmatprep.subr.bf16.mxu0 %v468
    %621 = vmatpush1.bf16.msra.mxu0 %v467
    %622 = vmatprep.subr.bf16.mxu0 %v472
    %623 = vmatpush1.bf16.msra.mxu0 %v471
    %624 = vmatprep.subr.bf16.mxu0 %v476
    %625 = vmatpush1.bf16.msra.mxu0 %v475
    %626 = vmatprep.subr.bf16.mxu0 %v480
    %627 = vmatpush1.bf16.msra.mxu0 %v479
    %628 = vmatprep.subr.bf16.mxu0 %v484
    %629 = vmatpush1.bf16.msra.mxu0 %v483
    %630 = vmatprep.subr.bf16.mxu0 %v488
    %631 = vmatpush1.bf16.msra.mxu0 %v487
    %632 = vmatprep.subr.bf16.mxu0 %v492
    %633 = vmatpush1.bf16.msra.mxu0 %v491
    %634 = vmatprep.subr.bf16.mxu0 %v496
    %635 = vmatpush1.bf16.msra.mxu0 %v495
    %636 = vmatprep.mubr.bf16.mxu0 %v176
    %637 = vmatmul.mubr.bf16.gmra.mrb[0].mxu0 %v175
    %v638 = vpop.f32.mrb[0].mxu0
    %v639 = vadd.f32 0.0, %v638
    %v640 = vpop.f32.mrb[0].mxu0
    %v641 = vadd.f32 0.0, %v640
    %v642 = vpop.f32.mrb[0].mxu0
    %v643 = vadd.f32 0.0, %v642
    %v644 = vpop.f32.mrb[0].mxu0
    %v645 = vadd.f32 0.0, %v644
    %646 = vdwg.mxu0
    %v647 = vcombine.high %v596, 0.0
    %v649 = vunpack.c.l.s4 1983009808
    %v650 = vunpack.c.0.s8 %v649
    %v651 = vlaneseq
    %v652 = vshrl.u32 %v651, 7
    %v653 = vsub.s32 %v650, %v652
    %v654 = vrot.slane %v596, %v653
    %v656 = vunpack.c.l.s4 1983009808
    %v657 = vunpack.c.0.s8 %v656
    %v658 = vlaneseq
    %v659 = vshrl.u32 %v658, 7
    %v660 = vsub.s32 %v657, %v659
    %v661 = vrot.slane %v647, %v660
    %v662 = vcombine.high %v598, 0.0
    %v664 = vunpack.c.l.s4 1983009808
    %v665 = vunpack.c.0.s8 %v664
    %v666 = vlaneseq
    %v667 = vshrl.u32 %v666, 7
    %v668 = vsub.s32 %v665, %v667
    %v669 = vrot.slane %v598, %v668
    %v671 = vunpack.c.l.s4 1983009808
    %v672 = vunpack.c.0.s8 %v671
    %v673 = vlaneseq
    %v674 = vshrl.u32 %v673, 7
    %v675 = vsub.s32 %v672, %v674
    %v676 = vrot.slane %v662, %v675
    %v677 = vcombine.low %v654, %v669
    %v678 = vcombine.high %v654, %v669
    %v680 = vunpack.c.l.s4 1934713408
    %v681 = vunpack.c.0.s8 %v680
    %v682 = vlaneseq
    %v683 = vshrl.u32 %v682, 7
    %v684 = vsub.s32 %v681, %v683
    %v685 = vrot.slane %v677, %v684
    %v687 = vunpack.c.l.s4 1934713408
    %v688 = vunpack.c.0.s8 %v687
    %v689 = vlaneseq
    %v690 = vshrl.u32 %v689, 7
    %v691 = vsub.s32 %v688, %v690
    %v692 = vrot.slane %v678, %v691
    %v693 = vcombine.low %v661, %v676
    %v694 = vcombine.high %v661, %v676
    %v696 = vunpack.c.l.s4 1934713408
    %v697 = vunpack.c.0.s8 %v696
    %v698 = vlaneseq
    %v699 = vshrl.u32 %v698, 7
    %v700 = vsub.s32 %v697, %v699
    %v701 = vrot.slane %v693, %v700
    %v703 = vunpack.c.l.s4 1934713408
    %v704 = vunpack.c.0.s8 %v703
    %v705 = vlaneseq
    %v706 = vshrl.u32 %v705, 7
    %v707 = vsub.s32 %v704, %v706
    %v708 = vrot.slane %v694, %v707
    %v709 = vcombine.high %v685, 0.0
    %v710 = vcombine.high %v692, 0.0
    %v711 = vcombine.high %v701, 0.0
    %v712 = vcombine.high %v708, 0.0
    %v713 = vcombine.high %v600, 0.0
    %v715 = vunpack.c.l.s4 1983009808
    %v716 = vunpack.c.0.s8 %v715
    %v717 = vlaneseq
    %v718 = vshrl.u32 %v717, 7
    %v719 = vsub.s32 %v716, %v718
    %v720 = vrot.slane %v600, %v719
    %v722 = vunpack.c.l.s4 1983009808
    %v723 = vunpack.c.0.s8 %v722
    %v724 = vlaneseq
    %v725 = vshrl.u32 %v724, 7
    %v726 = vsub.s32 %v723, %v725
    %v727 = vrot.slane %v713, %v726
    %v728 = vcombine.high %v602, 0.0
    %v730 = vunpack.c.l.s4 1983009808
    %v731 = vunpack.c.0.s8 %v730
    %v732 = vlaneseq
    %v733 = vshrl.u32 %v732, 7
    %v734 = vsub.s32 %v731, %v733
    %v735 = vrot.slane %v602, %v734
    %v737 = vunpack.c.l.s4 1983009808
    %v738 = vunpack.c.0.s8 %v737
    %v739 = vlaneseq
    %v740 = vshrl.u32 %v739, 7
    %v741 = vsub.s32 %v738, %v740
    %v742 = vrot.slane %v728, %v741
    %v743 = vcombine.low %v720, %v735
    %v744 = vcombine.high %v720, %v735
    %v746 = vunpack.c.l.s4 1934713408
    %v747 = vunpack.c.0.s8 %v746
    %v748 = vlaneseq
    %v749 = vshrl.u32 %v748, 7
    %v750 = vsub.s32 %v747, %v749
    %v751 = vrot.slane %v743, %v750
    %v753 = vunpack.c.l.s4 1934713408
    %v754 = vunpack.c.0.s8 %v753
    %v755 = vlaneseq
    %v756 = vshrl.u32 %v755, 7
    %v757 = vsub.s32 %v754, %v756
    %v758 = vrot.slane %v744, %v757
    %v759 = vcombine.low %v727, %v742
    %v760 = vcombine.high %v727, %v742
    %v762 = vunpack.c.l.s4 1934713408
    %v763 = vunpack.c.0.s8 %v762
    %v764 = vlaneseq
    %v765 = vshrl.u32 %v764, 7
    %v766 = vsub.s32 %v763, %v765
    %v767 = vrot.slane %v759, %v766
    %v769 = vunpack.c.l.s4 1934713408
    %v770 = vunpack.c.0.s8 %v769
    %v771 = vlaneseq
    %v772 = vshrl.u32 %v771, 7
    %v773 = vsub.s32 %v770, %v772
    %v774 = vrot.slane %v760, %v773
    %v775 = vcombine.high %v751, 0.0
    %v776 = vcombine.high %v758, 0.0
    %v777 = vcombine.high %v767, 0.0
    %v778 = vcombine.high %v774, 0.0
    %v779 = vcombine.low %v685, %v692
    %v781 = vunpack.c.l.s4 1983009808
    %v782 = vunpack.c.0.s8 %v781
    %v783 = vlaneseq
    %v784 = vshrl.u32 %v783, 7
    %v785 = vsub.s32 %v782, %v784
    %v786 = vrot.slane %v779, %v785
    %v787 = vcombine.low %v709, %v710
    %v789 = vunpack.c.l.s4 1983009808
    %v790 = vunpack.c.0.s8 %v789
    %v791 = vlaneseq
    %v792 = vshrl.u32 %v791, 7
    %v793 = vsub.s32 %v790, %v792
    %v794 = vrot.slane %v787, %v793
    %v795 = vcombine.low %v701, %v708
    %v797 = vunpack.c.l.s4 1983009808
    %v798 = vunpack.c.0.s8 %v797
    %v799 = vlaneseq
    %v800 = vshrl.u32 %v799, 7
    %v801 = vsub.s32 %v798, %v800
    %v802 = vrot.slane %v795, %v801
    %v803 = vcombine.low %v711, %v712
    %v805 = vunpack.c.l.s4 1983009808
    %v806 = vunpack.c.0.s8 %v805
    %v807 = vlaneseq
    %v808 = vshrl.u32 %v807, 7
    %v809 = vsub.s32 %v806, %v808
    %v810 = vrot.slane %v803, %v809
    %v811 = vcombine.low %v786, %v794
    %v813 = vunpack.c.l.s4 1934713408
    %v814 = vunpack.c.0.s8 %v813
    %v815 = vlaneseq
    %v816 = vshrl.u32 %v815, 7
    %v817 = vsub.s32 %v814, %v816
    %v818 = vrot.slane %v811, %v817
    %v819 = vcombine.low %v802, %v810
    %v821 = vunpack.c.l.s4 1934713408
    %v822 = vunpack.c.0.s8 %v821
    %v823 = vlaneseq
    %v824 = vshrl.u32 %v823, 7
    %v825 = vsub.s32 %v822, %v824
    %v826 = vrot.slane %v819, %v825
    %v827 = vcombine.low %v818, %v826
    %v828 = vcombine.high %v818, %v826
    %v829 = vcombine.low %v751, %v758
    %v831 = vunpack.c.l.s4 1983009808
    %v832 = vunpack.c.0.s8 %v831
    %v833 = vlaneseq
    %v834 = vshrl.u32 %v833, 7
    %v835 = vsub.s32 %v832, %v834
    %v836 = vrot.slane %v829, %v835
    %v837 = vcombine.low %v775, %v776
    %v839 = vunpack.c.l.s4 1983009808
    %v840 = vunpack.c.0.s8 %v839
    %v841 = vlaneseq
    %v842 = vshrl.u32 %v841, 7
    %v843 = vsub.s32 %v840, %v842
    %v844 = vrot.slane %v837, %v843
    %v845 = vcombine.low %v767, %v774
    %v847 = vunpack.c.l.s4 1983009808
    %v848 = vunpack.c.0.s8 %v847
    %v849 = vlaneseq
    %v850 = vshrl.u32 %v849, 7
    %v851 = vsub.s32 %v848, %v850
    %v852 = vrot.slane %v845, %v851
    %v853 = vcombine.low %v777, %v778
    %v855 = vunpack.c.l.s4 1983009808
    %v856 = vunpack.c.0.s8 %v855
    %v857 = vlaneseq
    %v858 = vshrl.u32 %v857, 7
    %v859 = vsub.s32 %v856, %v858
    %v860 = vrot.slane %v853, %v859
    %v861 = vcombine.low %v836, %v844
    %v863 = vunpack.c.l.s4 1934713408
    %v864 = vunpack.c.0.s8 %v863
    %v865 = vlaneseq
    %v866 = vshrl.u32 %v865, 7
    %v867 = vsub.s32 %v864, %v866
    %v868 = vrot.slane %v861, %v867
    %v869 = vcombine.low %v852, %v860
    %v871 = vunpack.c.l.s4 1934713408
    %v872 = vunpack.c.0.s8 %v871
    %v873 = vlaneseq
    %v874 = vshrl.u32 %v873, 7
    %v875 = vsub.s32 %v872, %v874
    %v876 = vrot.slane %v869, %v875
    %v877 = vcombine.low %v868, %v876
    %v878 = vcombine.high %v868, %v876
    %v881 = vcombine.high %v639, %v639
    %v883 = vunpack.c.l.s4 1966171168
    %v884 = vunpack.c.0.s8 %v883
    %v885 = vlaneseq
    %v886 = vshrl.u32 %v885, 7
    %v887 = vsub.s32 %v884, %v886
    %v888 = vrot.slane %v639, %v887
    %v890 = vunpack.c.l.s4 1966171168
    %v891 = vunpack.c.0.s8 %v890
    %v892 = vlaneseq
    %v893 = vshrl.u32 %v892, 7
    %v894 = vsub.s32 %v891, %v893
    %v895 = vrot.slane %v881, %v894
    %v896 = vcombine.high %v888, %v888
    %v897 = vcombine.high %v895, %v895
    %v899 = vunpack.c.l.s4 1966171168
    %v900 = vunpack.c.0.s8 %v899
    %v901 = vlaneseq
    %v902 = vshrl.u32 %v901, 7
    %v903 = vsub.s32 %v900, %v902
    %v904 = vrot.slane %v888, %v903
    %v906 = vunpack.c.l.s4 1966171168
    %v907 = vunpack.c.0.s8 %v906
    %v908 = vlaneseq
    %v909 = vshrl.u32 %v908, 7
    %v910 = vsub.s32 %v907, %v909
    %v911 = vrot.slane %v895, %v910
    %v913 = vunpack.c.l.s4 1966171168
    %v914 = vunpack.c.0.s8 %v913
    %v915 = vlaneseq
    %v916 = vshrl.u32 %v915, 7
    %v917 = vsub.s32 %v914, %v916
    %v918 = vrot.slane %v896, %v917
    %v920 = vunpack.c.l.s4 1966171168
    %v921 = vunpack.c.0.s8 %v920
    %v922 = vlaneseq
    %v923 = vshrl.u32 %v922, 7
    %v924 = vsub.s32 %v921, %v923
    %v925 = vrot.slane %v897, %v924
    %v926 = vcombine.high %v904, %v904
    %v927 = vcombine.high %v911, %v911
    %v928 = vcombine.high %v918, %v918
    %v929 = vcombine.high %v925, %v925
    %v930 = vcombine.high %v643, %v643
    %v932 = vunpack.c.l.s4 1966171168
    %v933 = vunpack.c.0.s8 %v932
    %v934 = vlaneseq
    %v935 = vshrl.u32 %v934, 7
    %v936 = vsub.s32 %v933, %v935
    %v937 = vrot.slane %v643, %v936
    %v939 = vunpack.c.l.s4 1966171168
    %v940 = vunpack.c.0.s8 %v939
    %v941 = vlaneseq
    %v942 = vshrl.u32 %v941, 7
    %v943 = vsub.s32 %v940, %v942
    %v944 = vrot.slane %v930, %v943
    %v945 = vcombine.high %v937, %v937
    %v946 = vcombine.high %v944, %v944
    %v948 = vunpack.c.l.s4 1966171168
    %v949 = vunpack.c.0.s8 %v948
    %v950 = vlaneseq
    %v951 = vshrl.u32 %v950, 7
    %v952 = vsub.s32 %v949, %v951
    %v953 = vrot.slane %v937, %v952
    %v955 = vunpack.c.l.s4 1966171168
    %v956 = vunpack.c.0.s8 %v955
    %v957 = vlaneseq
    %v958 = vshrl.u32 %v957, 7
    %v959 = vsub.s32 %v956, %v958
    %v960 = vrot.slane %v944, %v959
    %v962 = vunpack.c.l.s4 1966171168
    %v963 = vunpack.c.0.s8 %v962
    %v964 = vlaneseq
    %v965 = vshrl.u32 %v964, 7
    %v966 = vsub.s32 %v963, %v965
    %v967 = vrot.slane %v945, %v966
    %v969 = vunpack.c.l.s4 1966171168
    %v970 = vunpack.c.0.s8 %v969
    %v971 = vlaneseq
    %v972 = vshrl.u32 %v971, 7
    %v973 = vsub.s32 %v970, %v972
    %v974 = vrot.slane %v946, %v973
    %v975 = vcombine.high %v953, %v953
    %v976 = vcombine.high %v960, %v960
    %v977 = vcombine.high %v967, %v967
    %v978 = vcombine.high %v974, %v974
    %v997 = vcombine.high %v641, %v641
    %v999 = vunpack.c.l.s4 1966171168
    %v1000 = vunpack.c.0.s8 %v999
    %v1001 = vlaneseq
    %v1002 = vshrl.u32 %v1001, 7
    %v1003 = vsub.s32 %v1000, %v1002
    %v1004 = vrot.slane %v641, %v1003
    %v1006 = vunpack.c.l.s4 1966171168
    %v1007 = vunpack.c.0.s8 %v1006
    %v1008 = vlaneseq
    %v1009 = vshrl.u32 %v1008, 7
    %v1010 = vsub.s32 %v1007, %v1009
    %v1011 = vrot.slane %v997, %v1010
    %v1012 = vcombine.high %v1004, %v1004
    %v1013 = vcombine.high %v1011, %v1011
    %v1015 = vunpack.c.l.s4 1966171168
    %v1016 = vunpack.c.0.s8 %v1015
    %v1017 = vlaneseq
    %v1018 = vshrl.u32 %v1017, 7
    %v1019 = vsub.s32 %v1016, %v1018
    %v1020 = vrot.slane %v1004, %v1019
    %v1022 = vunpack.c.l.s4 1966171168
    %v1023 = vunpack.c.0.s8 %v1022
    %v1024 = vlaneseq
    %v1025 = vshrl.u32 %v1024, 7
    %v1026 = vsub.s32 %v1023, %v1025
    %v1027 = vrot.slane %v1011, %v1026
    %v1029 = vunpack.c.l.s4 1966171168
    %v1030 = vunpack.c.0.s8 %v1029
    %v1031 = vlaneseq
    %v1032 = vshrl.u32 %v1031, 7
    %v1033 = vsub.s32 %v1030, %v1032
    %v1034 = vrot.slane %v1012, %v1033
    %v1036 = vunpack.c.l.s4 1966171168
    %v1037 = vunpack.c.0.s8 %v1036
    %v1038 = vlaneseq
    %v1039 = vshrl.u32 %v1038, 7
    %v1040 = vsub.s32 %v1037, %v1039
    %v1041 = vrot.slane %v1013, %v1040
    %v1042 = vcombine.high %v1020, %v1020
    %v1043 = vcombine.high %v1027, %v1027
    %v1044 = vcombine.high %v1034, %v1034
    %v1045 = vcombine.high %v1041, %v1041
    %v1046 = vcombine.high %v645, %v645
    %v1048 = vunpack.c.l.s4 1966171168
    %v1049 = vunpack.c.0.s8 %v1048
    %v1050 = vlaneseq
    %v1051 = vshrl.u32 %v1050, 7
    %v1052 = vsub.s32 %v1049, %v1051
    %v1053 = vrot.slane %v645, %v1052
    %v1055 = vunpack.c.l.s4 1966171168
    %v1056 = vunpack.c.0.s8 %v1055
    %v1057 = vlaneseq
    %v1058 = vshrl.u32 %v1057, 7
    %v1059 = vsub.s32 %v1056, %v1058
    %v1060 = vrot.slane %v1046, %v1059
    %v1061 = vcombine.high %v1053, %v1053
    %v1062 = vcombine.high %v1060, %v1060
    %v1064 = vunpack.c.l.s4 1966171168
    %v1065 = vunpack.c.0.s8 %v1064
    %v1066 = vlaneseq
    %v1067 = vshrl.u32 %v1066, 7
    %v1068 = vsub.s32 %v1065, %v1067
    %v1069 = vrot.slane %v1053, %v1068
    %v1071 = vunpack.c.l.s4 1966171168
    %v1072 = vunpack.c.0.s8 %v1071
    %v1073 = vlaneseq
    %v1074 = vshrl.u32 %v1073, 7
    %v1075 = vsub.s32 %v1072, %v1074
    %v1076 = vrot.slane %v1060, %v1075
    %v1078 = vunpack.c.l.s4 1966171168
    %v1079 = vunpack.c.0.s8 %v1078
    %v1080 = vlaneseq
    %v1081 = vshrl.u32 %v1080, 7
    %v1082 = vsub.s32 %v1079, %v1081
    %v1083 = vrot.slane %v1061, %v1082
    %v1085 = vunpack.c.l.s4 1966171168
    %v1086 = vunpack.c.0.s8 %v1085
    %v1087 = vlaneseq
    %v1088 = vshrl.u32 %v1087, 7
    %v1089 = vsub.s32 %v1086, %v1088
    %v1090 = vrot.slane %v1062, %v1089
    %v1091 = vcombine.high %v1069, %v1069
    %v1092 = vcombine.high %v1076, %v1076
    %v1093 = vcombine.high %v1083, %v1083
    %v1094 = vcombine.high %v1090, %v1090
    %v1095 = vld [vmem:[#allocation5] sm:$0xff]
    %v1096 = vld [vmem:[#allocation7] sm:$0xff]
    %v1097 = vld [vmem:[%s6] sm:$0x1]
    %v1098 = vmul.f32 %v827, %v827
    %v1099 = vmul.f32 %v828, %v828
    %v1100 = vmul.f32 %v877, %v877
    %v1101 = vmul.f32 %v878, %v878
    %1102 = vadd.xlane.f32.xlu0 %v1098
    %v1103 = vpop.xlane.xlu0 %1102
    %1104 = vadd.xlane.f32.xlu0 %v1099
    %v1105 = vpop.xlane.xlu0 %1104
    %1106 = vadd.xlane.f32.xlu0 %v1100
    %v1107 = vpop.xlane.xlu0 %1106
    %1108 = vadd.xlane.f32.xlu0 %v1101
    %v1109 = vpop.xlane.xlu0 %1108
    %v1110 = vrcp.pop 128.0
    %v1111 = vmul.f32 %v1103, %v1110
    %v1112 = vmul.f32 %v1105, %v1110
    %v1113 = vmul.f32 %v1107, %v1110
    %v1114 = vmul.f32 %v1109, %v1110
    %v1115 = vadd.f32 %v1111, 1e-06
    %v1116 = vadd.f32 %v1112, 1e-06
    %v1117 = vadd.f32 %v1113, 1e-06
    %v1118 = vadd.f32 %v1114, 1e-06
    %v1119 = vrsqrt.pop %v1115
    %v1120 = vrsqrt.pop %v1116
    %v1121 = vrsqrt.pop %v1117
    %v1122 = vrsqrt.pop %v1118
    %v1123 = vmul.f32 %v827, %v1119
    %v1124 = vmul.f32 %v828, %v1120
    %v1125 = vmul.f32 %v877, %v1121
    %v1126 = vmul.f32 %v878, %v1122
    %v1128 = vlaneseq
    %v1129 = vshrl.u32 %v1128, 7
    %v1130 = vsub.s32 0, %v1129
    %v1131 = vrot.slane %v1097, %v1130
    %v1133 = vmul.f32 %v1123, %v1131
    %v1134 = vmul.f32 %v1124, %v1131
    %v1135 = vmul.f32 %v1125, %v1131
    %v1136 = vmul.f32 %v1126, %v1131
    %v1137 = vsub.f32 0.0, %v1133
    %v1138 = vsub.f32 0.0, %v1134
    %v1139 = vsub.f32 0.0, %v1135
    %v1140 = vsub.f32 0.0, %v1136
    %1145 = vrot.lane.b32.xlu0 %v1137, 64
    %v1146 = vpop.permute.xlu0 %1145
    %1147 = vrot.lane.b32.xlu0 %v1138, 64
    %v1148 = vpop.permute.xlu0 %1147
    %1149 = vrot.lane.b32.xlu0 %v1139, 64
    %v1150 = vpop.permute.xlu0 %1149
    %1151 = vrot.lane.b32.xlu0 %v1140, 64
    %v1152 = vpop.permute.xlu0 %1151
    %1161 = vrot.lane.b32.xlu0 %v1133, 64
    %v1162 = vpop.permute.xlu0 %1161
    %1163 = vrot.lane.b32.xlu0 %v1134, 64
    %v1164 = vpop.permute.xlu0 %1163
    %1165 = vrot.lane.b32.xlu0 %v1135, 64
    %v1166 = vpop.permute.xlu0 %1165
    %1167 = vrot.lane.b32.xlu0 %v1136, 64
    %v1168 = vpop.permute.xlu0 %1167
    %vm1173 = vcmask 523264
    %v1174 = vsel %vm1173, %v1146, %v1162
    %v1175 = vsel %vm1173, %v1148, %v1164
    %v1176 = vsel %vm1173, %v1150, %v1166
    %v1177 = vsel %vm1173, %v1152, %v1168
    %v1178 = vmul.f32 %v1133, %v1095
    %v1179 = vmul.f32 %v1134, %v1095
    %v1180 = vmul.f32 %v1135, %v1095
    %v1181 = vmul.f32 %v1136, %v1095
    %v1182 = vmul.f32 %v1174, %v1096
    %v1183 = vmul.f32 %v1175, %v1096
    %v1184 = vmul.f32 %v1176, %v1096
    %v1185 = vmul.f32 %v1177, %v1096
    %v1186 = vadd.f32 %v1178, %v1182
    %v1187 = vadd.f32 %v1179, %v1183
    %v1188 = vadd.f32 %v1180, %v1184
    %v1189 = vadd.f32 %v1181, %v1185
    %v1190 = vld [vmem:[%s7] sm:$0x1]
    %v1191 = vmul.f32 %v904, %v904
    %v1192 = vmul.f32 %v918, %v918
    %v1193 = vmul.f32 %v926, %v926
    %v1194 = vmul.f32 %v928, %v928
    %v1195 = vmul.f32 %v911, %v911
    %v1196 = vmul.f32 %v925, %v925
    %v1197 = vmul.f32 %v927, %v927
    %v1198 = vmul.f32 %v929, %v929
    %v1199 = vmul.f32 %v953, %v953
    %v1200 = vmul.f32 %v967, %v967
    %v1201 = vmul.f32 %v975, %v975
    %v1202 = vmul.f32 %v977, %v977
    %v1203 = vmul.f32 %v960, %v960
    %v1204 = vmul.f32 %v974, %v974
    %v1205 = vmul.f32 %v976, %v976
    %v1206 = vmul.f32 %v978, %v978
    %v1223 = vcombine.low %v1191, %v1192
    %v1224 = vcombine.low %v1193, %v1194
    %v1225 = vcombine.low %v1195, %v1196
    %v1226 = vcombine.low %v1197, %v1198
    %v1228 = vunpack.c.l.s4 1966171168
    %v1229 = vunpack.c.0.s8 %v1228
    %v1230 = vlaneseq
    %v1231 = vshrl.u32 %v1230, 7
    %v1232 = vsub.s32 %v1229, %v1231
    %v1233 = vrot.slane %v1223, %v1232
    %v1235 = vunpack.c.l.s4 1966171168
    %v1236 = vunpack.c.0.s8 %v1235
    %v1237 = vlaneseq
    %v1238 = vshrl.u32 %v1237, 7
    %v1239 = vsub.s32 %v1236, %v1238
    %v1240 = vrot.slane %v1224, %v1239
    %v1242 = vunpack.c.l.s4 1966171168
    %v1243 = vunpack.c.0.s8 %v1242
    %v1244 = vlaneseq
    %v1245 = vshrl.u32 %v1244, 7
    %v1246 = vsub.s32 %v1243, %v1245
    %v1247 = vrot.slane %v1225, %v1246
    %v1249 = vunpack.c.l.s4 1966171168
    %v1250 = vunpack.c.0.s8 %v1249
    %v1251 = vlaneseq
    %v1252 = vshrl.u32 %v1251, 7
    %v1253 = vsub.s32 %v1250, %v1252
    %v1254 = vrot.slane %v1226, %v1253
    %v1255 = vcombine.low %v1233, %v1240
    %v1256 = vcombine.low %v1247, %v1254
    %v1258 = vunpack.c.l.s4 1966171168
    %v1259 = vunpack.c.0.s8 %v1258
    %v1260 = vlaneseq
    %v1261 = vshrl.u32 %v1260, 7
    %v1262 = vsub.s32 %v1259, %v1261
    %v1263 = vrot.slane %v1255, %v1262
    %v1265 = vunpack.c.l.s4 1966171168
    %v1266 = vunpack.c.0.s8 %v1265
    %v1267 = vlaneseq
    %v1268 = vshrl.u32 %v1267, 7
    %v1269 = vsub.s32 %v1266, %v1268
    %v1270 = vrot.slane %v1256, %v1269
    %v1271 = vcombine.low %v1263, %v1270
    %v1272 = vcombine.low %v1199, %v1200
    %v1273 = vcombine.low %v1201, %v1202
    %v1274 = vcombine.low %v1203, %v1204
    %v1275 = vcombine.low %v1205, %v1206
    %v1277 = vunpack.c.l.s4 1966171168
    %v1278 = vunpack.c.0.s8 %v1277
    %v1279 = vlaneseq
    %v1280 = vshrl.u32 %v1279, 7
    %v1281 = vsub.s32 %v1278, %v1280
    %v1282 = vrot.slane %v1272, %v1281
    %v1284 = vunpack.c.l.s4 1966171168
    %v1285 = vunpack.c.0.s8 %v1284
    %v1286 = vlaneseq
    %v1287 = vshrl.u32 %v1286, 7
    %v1288 = vsub.s32 %v1285, %v1287
    %v1289 = vrot.slane %v1273, %v1288
    %v1291 = vunpack.c.l.s4 1966171168
    %v1292 = vunpack.c.0.s8 %v1291
    %v1293 = vlaneseq
    %v1294 = vshrl.u32 %v1293, 7
    %v1295 = vsub.s32 %v1292, %v1294
    %v1296 = vrot.slane %v1274, %v1295
    %v1298 = vunpack.c.l.s4 1966171168
    %v1299 = vunpack.c.0.s8 %v1298
    %v1300 = vlaneseq
    %v1301 = vshrl.u32 %v1300, 7
    %v1302 = vsub.s32 %v1299, %v1301
    %v1303 = vrot.slane %v1275, %v1302
    %v1304 = vcombine.low %v1282, %v1289
    %v1305 = vcombine.low %v1296, %v1303
    %v1307 = vunpack.c.l.s4 1966171168
    %v1308 = vunpack.c.0.s8 %v1307
    %v1309 = vlaneseq
    %v1310 = vshrl.u32 %v1309, 7
    %v1311 = vsub.s32 %v1308, %v1310
    %v1312 = vrot.slane %v1304, %v1311
    %v1314 = vunpack.c.l.s4 1966171168
    %v1315 = vunpack.c.0.s8 %v1314
    %v1316 = vlaneseq
    %v1317 = vshrl.u32 %v1316, 7
    %v1318 = vsub.s32 %v1315, %v1317
    %v1319 = vrot.slane %v1305, %v1318
    %v1320 = vcombine.low %v1312, %v1319
    %1323 = vadd.xlane.f32.xlu0 %v1271
    %v1324 = vpop.xlane.xlu0 %1323
    %1325 = vadd.xlane.f32.xlu0 %v1320
    %v1326 = vpop.xlane.xlu0 %1325
    %v1327 = vmul.f32 %v1324, %v1110
    %v1328 = vmul.f32 %v1326, %v1110
    %v1329 = vadd.f32 %v1327, 1e-06
    %v1330 = vadd.f32 %v1328, 1e-06
    %v1331 = vrsqrt.pop %v1329
    %v1332 = vrsqrt.pop %v1330
    %v1335 = vlaneseq
    %v1336 = vshrl.u32 %v1335, 7
    %v1337 = vsub.s32 0, %v1336
    %v1338 = vrot.slane %v1331, %v1337
    %v1339 = vlaneseq
    %v1340 = vshrl.u32 %v1339, 7
    %v1341 = vsub.s32 1, %v1340
    %v1342 = vrot.slane %v1331, %v1341
    %v1343 = vlaneseq
    %v1344 = vshrl.u32 %v1343, 7
    %v1345 = vsub.s32 2, %v1344
    %v1346 = vrot.slane %v1331, %v1345
    %v1347 = vlaneseq
    %v1348 = vshrl.u32 %v1347, 7
    %v1349 = vsub.s32 3, %v1348
    %v1350 = vrot.slane %v1331, %v1349
    %v1351 = vlaneseq
    %v1352 = vshrl.u32 %v1351, 7
    %v1353 = vsub.s32 4, %v1352
    %v1354 = vrot.slane %v1331, %v1353
    %v1355 = vlaneseq
    %v1356 = vshrl.u32 %v1355, 7
    %v1357 = vsub.s32 5, %v1356
    %v1358 = vrot.slane %v1331, %v1357
    %v1359 = vlaneseq
    %v1360 = vshrl.u32 %v1359, 7
    %v1361 = vsub.s32 6, %v1360
    %v1362 = vrot.slane %v1331, %v1361
    %v1363 = vlaneseq
    %v1364 = vshrl.u32 %v1363, 7
    %v1365 = vsub.s32 7, %v1364
    %v1366 = vrot.slane %v1331, %v1365
    %v1367 = vlaneseq
    %v1368 = vshrl.u32 %v1367, 7
    %v1369 = vsub.s32 0, %v1368
    %v1370 = vrot.slane %v1332, %v1369
    %v1371 = vlaneseq
    %v1372 = vshrl.u32 %v1371, 7
    %v1373 = vsub.s32 1, %v1372
    %v1374 = vrot.slane %v1332, %v1373
    %v1375 = vlaneseq
    %v1376 = vshrl.u32 %v1375, 7
    %v1377 = vsub.s32 2, %v1376
    %v1378 = vrot.slane %v1332, %v1377
    %v1379 = vlaneseq
    %v1380 = vshrl.u32 %v1379, 7
    %v1381 = vsub.s32 3, %v1380
    %v1382 = vrot.slane %v1332, %v1381
    %v1383 = vlaneseq
    %v1384 = vshrl.u32 %v1383, 7
    %v1385 = vsub.s32 4, %v1384
    %v1386 = vrot.slane %v1332, %v1385
    %v1387 = vlaneseq
    %v1388 = vshrl.u32 %v1387, 7
    %v1389 = vsub.s32 5, %v1388
    %v1390 = vrot.slane %v1332, %v1389
    %v1391 = vlaneseq
    %v1392 = vshrl.u32 %v1391, 7
    %v1393 = vsub.s32 6, %v1392
    %v1394 = vrot.slane %v1332, %v1393
    %v1395 = vlaneseq
    %v1396 = vshrl.u32 %v1395, 7
    %v1397 = vsub.s32 7, %v1396
    %v1398 = vrot.slane %v1332, %v1397
    %v1415 = vmul.f32 %v904, %v1338
    %v1416 = vmul.f32 %v918, %v1342
    %v1417 = vmul.f32 %v926, %v1346
    %v1418 = vmul.f32 %v928, %v1350
    %v1419 = vmul.f32 %v911, %v1354
    %v1420 = vmul.f32 %v925, %v1358
    %v1421 = vmul.f32 %v927, %v1362
    %v1422 = vmul.f32 %v929, %v1366
    %v1423 = vmul.f32 %v953, %v1370
    %v1424 = vmul.f32 %v967, %v1374
    %v1425 = vmul.f32 %v975, %v1378
    %v1426 = vmul.f32 %v977, %v1382
    %v1427 = vmul.f32 %v960, %v1386
    %v1428 = vmul.f32 %v974, %v1390
    %v1429 = vmul.f32 %v976, %v1394
    %v1430 = vmul.f32 %v978, %v1398
    %v1432 = vlaneseq
    %v1433 = vshrl.u32 %v1432, 7
    %v1434 = vsub.s32 0, %v1433
    %v1435 = vrot.slane %v1190, %v1434
    %v1436 = vcombine.high %v1435, %v1435
    %v1438 = vunpack.c.l.s4 1966171168
    %v1439 = vunpack.c.0.s8 %v1438
    %v1440 = vlaneseq
    %v1441 = vshrl.u32 %v1440, 7
    %v1442 = vsub.s32 %v1439, %v1441
    %v1443 = vrot.slane %v1435, %v1442
    %v1445 = vunpack.c.l.s4 1966171168
    %v1446 = vunpack.c.0.s8 %v1445
    %v1447 = vlaneseq
    %v1448 = vshrl.u32 %v1447, 7
    %v1449 = vsub.s32 %v1446, %v1448
    %v1450 = vrot.slane %v1436, %v1449
    %v1451 = vcombine.high %v1443, %v1443
    %v1452 = vcombine.high %v1450, %v1450
    %v1454 = vunpack.c.l.s4 1966171168
    %v1455 = vunpack.c.0.s8 %v1454
    %v1456 = vlaneseq
    %v1457 = vshrl.u32 %v1456, 7
    %v1458 = vsub.s32 %v1455, %v1457
    %v1459 = vrot.slane %v1443, %v1458
    %v1461 = vunpack.c.l.s4 1966171168
    %v1462 = vunpack.c.0.s8 %v1461
    %v1463 = vlaneseq
    %v1464 = vshrl.u32 %v1463, 7
    %v1465 = vsub.s32 %v1462, %v1464
    %v1466 = vrot.slane %v1450, %v1465
    %v1468 = vunpack.c.l.s4 1966171168
    %v1469 = vunpack.c.0.s8 %v1468
    %v1470 = vlaneseq
    %v1471 = vshrl.u32 %v1470, 7
    %v1472 = vsub.s32 %v1469, %v1471
    %v1473 = vrot.slane %v1451, %v1472
    %v1475 = vunpack.c.l.s4 1966171168
    %v1476 = vunpack.c.0.s8 %v1475
    %v1477 = vlaneseq
    %v1478 = vshrl.u32 %v1477, 7
    %v1479 = vsub.s32 %v1476, %v1478
    %v1480 = vrot.slane %v1452, %v1479
    %v1481 = vcombine.high %v1459, %v1459
    %v1482 = vcombine.high %v1466, %v1466
    %v1483 = vcombine.high %v1473, %v1473
    %v1484 = vcombine.high %v1480, %v1480
    %v1493 = vmul.f32 %v1415, %v1459
    %v1494 = vmul.f32 %v1416, %v1473
    %v1495 = vmul.f32 %v1417, %v1481
    %v1496 = vmul.f32 %v1418, %v1483
    %v1497 = vmul.f32 %v1419, %v1466
    %v1498 = vmul.f32 %v1420, %v1480
    %v1499 = vmul.f32 %v1421, %v1482
    %v1500 = vmul.f32 %v1422, %v1484
    %v1501 = vmul.f32 %v1423, %v1459
    %v1502 = vmul.f32 %v1424, %v1473
    %v1503 = vmul.f32 %v1425, %v1481
    %v1504 = vmul.f32 %v1426, %v1483
    %v1505 = vmul.f32 %v1427, %v1466
    %v1506 = vmul.f32 %v1428, %v1480
    %v1507 = vmul.f32 %v1429, %v1482
    %v1508 = vmul.f32 %v1430, %v1484
    %v1509 = vsub.f32 0.0, %v1493
    %v1510 = vsub.f32 0.0, %v1494
    %v1511 = vsub.f32 0.0, %v1495
    %v1512 = vsub.f32 0.0, %v1496
    %v1513 = vsub.f32 0.0, %v1497
    %v1514 = vsub.f32 0.0, %v1498
    %v1515 = vsub.f32 0.0, %v1499
    %v1516 = vsub.f32 0.0, %v1500
    %v1517 = vsub.f32 0.0, %v1501
    %v1518 = vsub.f32 0.0, %v1502
    %v1519 = vsub.f32 0.0, %v1503
    %v1520 = vsub.f32 0.0, %v1504
    %v1521 = vsub.f32 0.0, %v1505
    %v1522 = vsub.f32 0.0, %v1506
    %v1523 = vsub.f32 0.0, %v1507
    %v1524 = vsub.f32 0.0, %v1508
    %v1541 = vcombine.low %v1509, %v1510
    %v1542 = vcombine.low %v1511, %v1512
    %v1543 = vcombine.low %v1513, %v1514
    %v1544 = vcombine.low %v1515, %v1516
    %v1546 = vunpack.c.l.s4 1966171168
    %v1547 = vunpack.c.0.s8 %v1546
    %v1548 = vlaneseq
    %v1549 = vshrl.u32 %v1548, 7
    %v1550 = vsub.s32 %v1547, %v1549
    %v1551 = vrot.slane %v1541, %v1550
    %v1553 = vunpack.c.l.s4 1966171168
    %v1554 = vunpack.c.0.s8 %v1553
    %v1555 = vlaneseq
    %v1556 = vshrl.u32 %v1555, 7
    %v1557 = vsub.s32 %v1554, %v1556
    %v1558 = vrot.slane %v1542, %v1557
    %v1560 = vunpack.c.l.s4 1966171168
    %v1561 = vunpack.c.0.s8 %v1560
    %v1562 = vlaneseq
    %v1563 = vshrl.u32 %v1562, 7
    %v1564 = vsub.s32 %v1561, %v1563
    %v1565 = vrot.slane %v1543, %v1564
    %v1567 = vunpack.c.l.s4 1966171168
    %v1568 = vunpack.c.0.s8 %v1567
    %v1569 = vlaneseq
    %v1570 = vshrl.u32 %v1569, 7
    %v1571 = vsub.s32 %v1568, %v1570
    %v1572 = vrot.slane %v1544, %v1571
    %v1573 = vcombine.low %v1551, %v1558
    %v1574 = vcombine.low %v1565, %v1572
    %v1576 = vunpack.c.l.s4 1966171168
    %v1577 = vunpack.c.0.s8 %v1576
    %v1578 = vlaneseq
    %v1579 = vshrl.u32 %v1578, 7
    %v1580 = vsub.s32 %v1577, %v1579
    %v1581 = vrot.slane %v1573, %v1580
    %v1583 = vunpack.c.l.s4 1966171168
    %v1584 = vunpack.c.0.s8 %v1583
    %v1585 = vlaneseq
    %v1586 = vshrl.u32 %v1585, 7
    %v1587 = vsub.s32 %v1584, %v1586
    %v1588 = vrot.slane %v1574, %v1587
    %v1589 = vcombine.low %v1581, %v1588
    %v1590 = vcombine.low %v1517, %v1518
    %v1591 = vcombine.low %v1519, %v1520
    %v1592 = vcombine.low %v1521, %v1522
    %v1593 = vcombine.low %v1523, %v1524
    %v1595 = vunpack.c.l.s4 1966171168
    %v1596 = vunpack.c.0.s8 %v1595
    %v1597 = vlaneseq
    %v1598 = vshrl.u32 %v1597, 7
    %v1599 = vsub.s32 %v1596, %v1598
    %v1600 = vrot.slane %v1590, %v1599
    %v1602 = vunpack.c.l.s4 1966171168
    %v1603 = vunpack.c.0.s8 %v1602
    %v1604 = vlaneseq
    %v1605 = vshrl.u32 %v1604, 7
    %v1606 = vsub.s32 %v1603, %v1605
    %v1607 = vrot.slane %v1591, %v1606
    %v1609 = vunpack.c.l.s4 1966171168
    %v1610 = vunpack.c.0.s8 %v1609
    %v1611 = vlaneseq
    %v1612 = vshrl.u32 %v1611, 7
    %v1613 = vsub.s32 %v1610, %v1612
    %v1614 = vrot.slane %v1592, %v1613
    %v1616 = vunpack.c.l.s4 1966171168
    %v1617 = vunpack.c.0.s8 %v1616
    %v1618 = vlaneseq
    %v1619 = vshrl.u32 %v1618, 7
    %v1620 = vsub.s32 %v1617, %v1619
    %v1621 = vrot.slane %v1593, %v1620
    %v1622 = vcombine.low %v1600, %v1607
    %v1623 = vcombine.low %v1614, %v1621
    %v1625 = vunpack.c.l.s4 1966171168
    %v1626 = vunpack.c.0.s8 %v1625
    %v1627 = vlaneseq
    %v1628 = vshrl.u32 %v1627, 7
    %v1629 = vsub.s32 %v1626, %v1628
    %v1630 = vrot.slane %v1622, %v1629
    %v1632 = vunpack.c.l.s4 1966171168
    %v1633 = vunpack.c.0.s8 %v1632
    %v1634 = vlaneseq
    %v1635 = vshrl.u32 %v1634, 7
    %v1636 = vsub.s32 %v1633, %v1635
    %v1637 = vrot.slane %v1623, %v1636
    %v1638 = vcombine.low %v1630, %v1637
    %1639 = vrot.lane.b32.xlu0 %v1589, 64
    %v1640 = vpop.permute.xlu0 %1639
    %1641 = vrot.lane.b32.xlu0 %v1638, 64
    %v1642 = vpop.permute.xlu0 %1641
    %v1661 = vcombine.low %v1493, %v1494
    %v1662 = vcombine.low %v1495, %v1496
    %v1663 = vcombine.low %v1497, %v1498
    %v1664 = vcombine.low %v1499, %v1500
    %v1666 = vunpack.c.l.s4 1966171168
    %v1667 = vunpack.c.0.s8 %v1666
    %v1668 = vlaneseq
    %v1669 = vshrl.u32 %v1668, 7
    %v1670 = vsub.s32 %v1667, %v1669
    %v1671 = vrot.slane %v1661, %v1670
    %v1673 = vunpack.c.l.s4 1966171168
    %v1674 = vunpack.c.0.s8 %v1673
    %v1675 = vlaneseq
    %v1676 = vshrl.u32 %v1675, 7
    %v1677 = vsub.s32 %v1674, %v1676
    %v1678 = vrot.slane %v1662, %v1677
    %v1680 = vunpack.c.l.s4 1966171168
    %v1681 = vunpack.c.0.s8 %v1680
    %v1682 = vlaneseq
    %v1683 = vshrl.u32 %v1682, 7
    %v1684 = vsub.s32 %v1681, %v1683
    %v1685 = vrot.slane %v1663, %v1684
    %v1687 = vunpack.c.l.s4 1966171168
    %v1688 = vunpack.c.0.s8 %v1687
    %v1689 = vlaneseq
    %v1690 = vshrl.u32 %v1689, 7
    %v1691 = vsub.s32 %v1688, %v1690
    %v1692 = vrot.slane %v1664, %v1691
    %v1693 = vcombine.low %v1671, %v1678
    %v1694 = vcombine.low %v1685, %v1692
    %v1696 = vunpack.c.l.s4 1966171168
    %v1697 = vunpack.c.0.s8 %v1696
    %v1698 = vlaneseq
    %v1699 = vshrl.u32 %v1698, 7
    %v1700 = vsub.s32 %v1697, %v1699
    %v1701 = vrot.slane %v1693, %v1700
    %v1703 = vunpack.c.l.s4 1966171168
    %v1704 = vunpack.c.0.s8 %v1703
    %v1705 = vlaneseq
    %v1706 = vshrl.u32 %v1705, 7
    %v1707 = vsub.s32 %v1704, %v1706
    %v1708 = vrot.slane %v1694, %v1707
    %v1709 = vcombine.low %v1701, %v1708
    %v1710 = vcombine.low %v1501, %v1502
    %v1711 = vcombine.low %v1503, %v1504
    %v1712 = vcombine.low %v1505, %v1506
    %v1713 = vcombine.low %v1507, %v1508
    %v1715 = vunpack.c.l.s4 1966171168
    %v1716 = vunpack.c.0.s8 %v1715
    %v1717 = vlaneseq
    %v1718 = vshrl.u32 %v1717, 7
    %v1719 = vsub.s32 %v1716, %v1718
    %v1720 = vrot.slane %v1710, %v1719
    %v1722 = vunpack.c.l.s4 1966171168
    %v1723 = vunpack.c.0.s8 %v1722
    %v1724 = vlaneseq
    %v1725 = vshrl.u32 %v1724, 7
    %v1726 = vsub.s32 %v1723, %v1725
    %v1727 = vrot.slane %v1711, %v1726
    %v1729 = vunpack.c.l.s4 1966171168
    %v1730 = vunpack.c.0.s8 %v1729
    %v1731 = vlaneseq
    %v1732 = vshrl.u32 %v1731, 7
    %v1733 = vsub.s32 %v1730, %v1732
    %v1734 = vrot.slane %v1712, %v1733
    %v1736 = vunpack.c.l.s4 1966171168
    %v1737 = vunpack.c.0.s8 %v1736
    %v1738 = vlaneseq
    %v1739 = vshrl.u32 %v1738, 7
    %v1740 = vsub.s32 %v1737, %v1739
    %v1741 = vrot.slane %v1713, %v1740
    %v1742 = vcombine.low %v1720, %v1727
    %v1743 = vcombine.low %v1734, %v1741
    %v1745 = vunpack.c.l.s4 1966171168
    %v1746 = vunpack.c.0.s8 %v1745
    %v1747 = vlaneseq
    %v1748 = vshrl.u32 %v1747, 7
    %v1749 = vsub.s32 %v1746, %v1748
    %v1750 = vrot.slane %v1742, %v1749
    %v1752 = vunpack.c.l.s4 1966171168
    %v1753 = vunpack.c.0.s8 %v1752
    %v1754 = vlaneseq
    %v1755 = vshrl.u32 %v1754, 7
    %v1756 = vsub.s32 %v1753, %v1755
    %v1757 = vrot.slane %v1743, %v1756
    %v1758 = vcombine.low %v1750, %v1757
    %1759 = vrot.lane.b32.xlu0 %v1709, 64
    %v1760 = vpop.permute.xlu0 %1759
    %1761 = vrot.lane.b32.xlu0 %v1758, 64
    %v1762 = vpop.permute.xlu0 %1761
    %v1765 = vsel %vm1173, %v1640, %v1760
    %v1766 = vsel %vm1173, %v1642, %v1762
    %v1768 = vcombine.high %v1095, %v1095
    %v1770 = vunpack.c.l.s4 1966171168
    %v1771 = vunpack.c.0.s8 %v1770
    %v1772 = vlaneseq
    %v1773 = vshrl.u32 %v1772, 7
    %v1774 = vsub.s32 %v1771, %v1773
    %v1775 = vrot.slane %v1095, %v1774
    %v1777 = vunpack.c.l.s4 1966171168
    %v1778 = vunpack.c.0.s8 %v1777
    %v1779 = vlaneseq
    %v1780 = vshrl.u32 %v1779, 7
    %v1781 = vsub.s32 %v1778, %v1780
    %v1782 = vrot.slane %v1768, %v1781
    %v1783 = vcombine.high %v1775, %v1775
    %v1784 = vcombine.high %v1782, %v1782
    %v1786 = vunpack.c.l.s4 1966171168
    %v1787 = vunpack.c.0.s8 %v1786
    %v1788 = vlaneseq
    %v1789 = vshrl.u32 %v1788, 7
    %v1790 = vsub.s32 %v1787, %v1789
    %v1791 = vrot.slane %v1775, %v1790
    %v1793 = vunpack.c.l.s4 1966171168
    %v1794 = vunpack.c.0.s8 %v1793
    %v1795 = vlaneseq
    %v1796 = vshrl.u32 %v1795, 7
    %v1797 = vsub.s32 %v1794, %v1796
    %v1798 = vrot.slane %v1782, %v1797
    %v1800 = vunpack.c.l.s4 1966171168
    %v1801 = vunpack.c.0.s8 %v1800
    %v1802 = vlaneseq
    %v1803 = vshrl.u32 %v1802, 7
    %v1804 = vsub.s32 %v1801, %v1803
    %v1805 = vrot.slane %v1783, %v1804
    %v1807 = vunpack.c.l.s4 1966171168
    %v1808 = vunpack.c.0.s8 %v1807
    %v1809 = vlaneseq
    %v1810 = vshrl.u32 %v1809, 7
    %v1811 = vsub.s32 %v1808, %v1810
    %v1812 = vrot.slane %v1784, %v1811
    %v1813 = vcombine.high %v1791, %v1791
    %v1814 = vcombine.high %v1798, %v1798
    %v1815 = vcombine.high %v1805, %v1805
    %v1816 = vcombine.high %v1812, %v1812
    %v1825 = vmul.f32 %v1493, %v1791
    %v1826 = vmul.f32 %v1494, %v1805
    %v1827 = vmul.f32 %v1495, %v1813
    %v1828 = vmul.f32 %v1496, %v1815
    %v1829 = vmul.f32 %v1497, %v1798
    %v1830 = vmul.f32 %v1498, %v1812
    %v1831 = vmul.f32 %v1499, %v1814
    %v1832 = vmul.f32 %v1500, %v1816
    %v1833 = vmul.f32 %v1501, %v1791
    %v1834 = vmul.f32 %v1502, %v1805
    %v1835 = vmul.f32 %v1503, %v1813
    %v1836 = vmul.f32 %v1504, %v1815
    %v1837 = vmul.f32 %v1505, %v1798
    %v1838 = vmul.f32 %v1506, %v1812
    %v1839 = vmul.f32 %v1507, %v1814
    %v1840 = vmul.f32 %v1508, %v1816
    %v1841 = vmul.f32 %v1765, %v1096
    %v1842 = vmul.f32 %v1766, %v1096
    %v1845 = vcombine.high %v1841, %v1841
    %v1847 = vunpack.c.l.s4 1966171168
    %v1848 = vunpack.c.0.s8 %v1847
    %v1849 = vlaneseq
    %v1850 = vshrl.u32 %v1849, 7
    %v1851 = vsub.s32 %v1848, %v1850
    %v1852 = vrot.slane %v1841, %v1851
    %v1854 = vunpack.c.l.s4 1966171168
    %v1855 = vunpack.c.0.s8 %v1854
    %v1856 = vlaneseq
    %v1857 = vshrl.u32 %v1856, 7
    %v1858 = vsub.s32 %v1855, %v1857
    %v1859 = vrot.slane %v1845, %v1858
    %v1860 = vcombine.high %v1852, %v1852
    %v1861 = vcombine.high %v1859, %v1859
    %v1863 = vunpack.c.l.s4 1966171168
    %v1864 = vunpack.c.0.s8 %v1863
    %v1865 = vlaneseq
    %v1866 = vshrl.u32 %v1865, 7
    %v1867 = vsub.s32 %v1864, %v1866
    %v1868 = vrot.slane %v1852, %v1867
    %v1870 = vunpack.c.l.s4 1966171168
    %v1871 = vunpack.c.0.s8 %v1870
    %v1872 = vlaneseq
    %v1873 = vshrl.u32 %v1872, 7
    %v1874 = vsub.s32 %v1871, %v1873
    %v1875 = vrot.slane %v1859, %v1874
    %v1877 = vunpack.c.l.s4 1966171168
    %v1878 = vunpack.c.0.s8 %v1877
    %v1879 = vlaneseq
    %v1880 = vshrl.u32 %v1879, 7
    %v1881 = vsub.s32 %v1878, %v1880
    %v1882 = vrot.slane %v1860, %v1881
    %v1884 = vunpack.c.l.s4 1966171168
    %v1885 = vunpack.c.0.s8 %v1884
    %v1886 = vlaneseq
    %v1887 = vshrl.u32 %v1886, 7
    %v1888 = vsub.s32 %v1885, %v1887
    %v1889 = vrot.slane %v1861, %v1888
    %v1890 = vcombine.high %v1868, %v1868
    %v1891 = vcombine.high %v1875, %v1875
    %v1892 = vcombine.high %v1882, %v1882
    %v1893 = vcombine.high %v1889, %v1889
    %v1894 = vcombine.high %v1842, %v1842
    %v1896 = vunpack.c.l.s4 1966171168
    %v1897 = vunpack.c.0.s8 %v1896
    %v1898 = vlaneseq
    %v1899 = vshrl.u32 %v1898, 7
    %v1900 = vsub.s32 %v1897, %v1899
    %v1901 = vrot.slane %v1842, %v1900
    %v1903 = vunpack.c.l.s4 1966171168
    %v1904 = vunpack.c.0.s8 %v1903
    %v1905 = vlaneseq
    %v1906 = vshrl.u32 %v1905, 7
    %v1907 = vsub.s32 %v1904, %v1906
    %v1908 = vrot.slane %v1894, %v1907
    %v1909 = vcombine.high %v1901, %v1901
    %v1910 = vcombine.high %v1908, %v1908
    %v1912 = vunpack.c.l.s4 1966171168
    %v1913 = vunpack.c.0.s8 %v1912
    %v1914 = vlaneseq
    %v1915 = vshrl.u32 %v1914, 7
    %v1916 = vsub.s32 %v1913, %v1915
    %v1917 = vrot.slane %v1901, %v1916
    %v1919 = vunpack.c.l.s4 1966171168
    %v1920 = vunpack.c.0.s8 %v1919
    %v1921 = vlaneseq
    %v1922 = vshrl.u32 %v1921, 7
    %v1923 = vsub.s32 %v1920, %v1922
    %v1924 = vrot.slane %v1908, %v1923
    %v1926 = vunpack.c.l.s4 1966171168
    %v1927 = vunpack.c.0.s8 %v1926
    %v1928 = vlaneseq
    %v1929 = vshrl.u32 %v1928, 7
    %v1930 = vsub.s32 %v1927, %v1929
    %v1931 = vrot.slane %v1909, %v1930
    %v1933 = vunpack.c.l.s4 1966171168
    %v1934 = vunpack.c.0.s8 %v1933
    %v1935 = vlaneseq
    %v1936 = vshrl.u32 %v1935, 7
    %v1937 = vsub.s32 %v1934, %v1936
    %v1938 = vrot.slane %v1910, %v1937
    %v1939 = vcombine.high %v1917, %v1917
    %v1940 = vcombine.high %v1924, %v1924
    %v1941 = vcombine.high %v1931, %v1931
    %v1942 = vcombine.high %v1938, %v1938
    %v1959 = vadd.f32 %v1825, %v1868
    %v1960 = vadd.f32 %v1826, %v1882
    %v1961 = vadd.f32 %v1827, %v1890
    %v1962 = vadd.f32 %v1828, %v1892
    %v1963 = vadd.f32 %v1829, %v1875
    %v1964 = vadd.f32 %v1830, %v1889
    %v1965 = vadd.f32 %v1831, %v1891
    %v1966 = vadd.f32 %v1832, %v1893
    %v1967 = vadd.f32 %v1833, %v1917
    %v1968 = vadd.f32 %v1834, %v1931
    %v1969 = vadd.f32 %v1835, %v1939
    %v1970 = vadd.f32 %v1836, %v1941
    %v1971 = vadd.f32 %v1837, %v1924
    %v1972 = vadd.f32 %v1838, %v1938
    %v1973 = vadd.f32 %v1839, %v1940
    %v1974 = vadd.f32 %v1840, %v1942
    %v1975 = vpack.c.bf16 %v1187, %v1186
    %v1976 = vpack.c.bf16 %v1189, %v1188
    %v1993 = vcombine.low %v1959, %v1960
    %v1994 = vcombine.low %v1961, %v1962
    %v1995 = vcombine.low %v1963, %v1964
    %v1996 = vcombine.low %v1965, %v1966
    %v1998 = vunpack.c.l.s4 1966171168
    %v1999 = vunpack.c.0.s8 %v1998
    %v2000 = vlaneseq
    %v2001 = vshrl.u32 %v2000, 7
    %v2002 = vsub.s32 %v1999, %v2001
    %v2003 = vrot.slane %v1993, %v2002
    %v2005 = vunpack.c.l.s4 1966171168
    %v2006 = vunpack.c.0.s8 %v2005
    %v2007 = vlaneseq
    %v2008 = vshrl.u32 %v2007, 7
    %v2009 = vsub.s32 %v2006, %v2008
    %v2010 = vrot.slane %v1994, %v2009
    %v2012 = vunpack.c.l.s4 1966171168
    %v2013 = vunpack.c.0.s8 %v2012
    %v2014 = vlaneseq
    %v2015 = vshrl.u32 %v2014, 7
    %v2016 = vsub.s32 %v2013, %v2015
    %v2017 = vrot.slane %v1995, %v2016
    %v2019 = vunpack.c.l.s4 1966171168
    %v2020 = vunpack.c.0.s8 %v2019
    %v2021 = vlaneseq
    %v2022 = vshrl.u32 %v2021, 7
    %v2023 = vsub.s32 %v2020, %v2022
    %v2024 = vrot.slane %v1996, %v2023
    %v2025 = vcombine.low %v2003, %v2010
    %v2026 = vcombine.low %v2017, %v2024
    %v2028 = vunpack.c.l.s4 1966171168
    %v2029 = vunpack.c.0.s8 %v2028
    %v2030 = vlaneseq
    %v2031 = vshrl.u32 %v2030, 7
    %v2032 = vsub.s32 %v2029, %v2031
    %v2033 = vrot.slane %v2025, %v2032
    %v2035 = vunpack.c.l.s4 1966171168
    %v2036 = vunpack.c.0.s8 %v2035
    %v2037 = vlaneseq
    %v2038 = vshrl.u32 %v2037, 7
    %v2039 = vsub.s32 %v2036, %v2038
    %v2040 = vrot.slane %v2026, %v2039
    %v2041 = vcombine.low %v2033, %v2040
    %v2042 = vcombine.low %v1967, %v1968
    %v2043 = vcombine.low %v1969, %v1970
    %v2044 = vcombine.low %v1971, %v1972
    %v2045 = vcombine.low %v1973, %v1974
    %v2047 = vunpack.c.l.s4 1966171168
    %v2048 = vunpack.c.0.s8 %v2047
    %v2049 = vlaneseq
    %v2050 = vshrl.u32 %v2049, 7
    %v2051 = vsub.s32 %v2048, %v2050
    %v2052 = vrot.slane %v2042, %v2051
    %v2054 = vunpack.c.l.s4 1966171168
    %v2055 = vunpack.c.0.s8 %v2054
    %v2056 = vlaneseq
    %v2057 = vshrl.u32 %v2056, 7
    %v2058 = vsub.s32 %v2055, %v2057
    %v2059 = vrot.slane %v2043, %v2058
    %v2061 = vunpack.c.l.s4 1966171168
    %v2062 = vunpack.c.0.s8 %v2061
    %v2063 = vlaneseq
    %v2064 = vshrl.u32 %v2063, 7
    %v2065 = vsub.s32 %v2062, %v2064
    %v2066 = vrot.slane %v2044, %v2065
    %v2068 = vunpack.c.l.s4 1966171168
    %v2069 = vunpack.c.0.s8 %v2068
    %v2070 = vlaneseq
    %v2071 = vshrl.u32 %v2070, 7
    %v2072 = vsub.s32 %v2069, %v2071
    %v2073 = vrot.slane %v2045, %v2072
    %v2074 = vcombine.low %v2052, %v2059
    %v2075 = vcombine.low %v2066, %v2073
    %v2077 = vunpack.c.l.s4 1966171168
    %v2078 = vunpack.c.0.s8 %v2077
    %v2079 = vlaneseq
    %v2080 = vshrl.u32 %v2079, 7
    %v2081 = vsub.s32 %v2078, %v2080
    %v2082 = vrot.slane %v2074, %v2081
    %v2084 = vunpack.c.l.s4 1966171168
    %v2085 = vunpack.c.0.s8 %v2084
    %v2086 = vlaneseq
    %v2087 = vshrl.u32 %v2086, 7
    %v2088 = vsub.s32 %v2085, %v2087
    %v2089 = vrot.slane %v2075, %v2088
    %v2090 = vcombine.low %v2082, %v2089
    %v2093 = vpack.c.bf16 %v2041, %v2041
    %v2094 = vpack.c.bf16 %v2090, %v2090
    %v2095 = vld [vmem:[%s1] sm:$0xff]
    %v2096 = vld [vmem:[%s1 + $0x8] sm:$0xff]
    %2097 = vmatprep.subr.bf16.mxu0 0
    %2098 = vmatpush1.bf16.xpose.msra.mxu0 %v2093
    %2099 = vmatprep.subr.bf16.mxu0 0
    %2100 = vmatpush1.bf16.xpose.msra.mxu0 0
    %2101 = vmatprep.subr.bf16.mxu0 0
    %2102 = vmatpush1.bf16.xpose.msra.mxu0 0
    %2103 = vmatprep.subr.bf16.mxu0 0
    %2104 = vmatpush1.bf16.xpose.msra.mxu0 0
    %2105 = vmatprep.subr.bf16.mxu0 0
    %2106 = vmatpush1.bf16.xpose.msra.mxu0 0
    %2107 = vmatprep.subr.bf16.mxu0 0
    %2108 = vmatpush1.bf16.xpose.msra.mxu0 0
    %2109 = vmatprep.subr.bf16.mxu0 0
    %2110 = vmatpush1.bf16.xpose.msra.mxu0 0
    %2111 = vmatprep.subr.bf16.mxu0 0
    %2112 = vmatpush1.bf16.xpose.msra.mxu0 0
    %2113 = vmatprep.subr.bf16.mxu0 0
    %2114 = vmatpush1.bf16.xpose.msra.mxu0 0
    %2115 = vmatprep.subr.bf16.mxu0 0
    %2116 = vmatpush1.bf16.xpose.msra.mxu0 0
    %2117 = vmatprep.subr.bf16.mxu0 0
    %2118 = vmatpush1.bf16.xpose.msra.mxu0 0
    %2119 = vmatprep.subr.bf16.mxu0 0
    %2120 = vmatpush1.bf16.xpose.msra.mxu0 0
    %2121 = vmatprep.subr.bf16.mxu0 0
    %2122 = vmatpush1.bf16.xpose.msra.mxu0 0
    %2123 = vmatprep.subr.bf16.mxu0 0
    %2124 = vmatpush1.bf16.xpose.msra.mxu0 0
    %2125 = vmatprep.subr.bf16.mxu0 0
    %2126 = vmatpush1.bf16.xpose.msra.mxu0 0
    %2127 = vmatprep.subr.bf16.mxu0 0
    %2128 = vmatpush1.bf16.xpose.msra.mxu0 0
    %2129 = vmatprep.mubr.bf16.mxu0 0
    %2130 = vmatmul.mubr.bf16.gmra.mrb[0].mxu0 %v1975
    %v2131 = vpop.f32.mrb[0].mxu0
    %v2132 = vadd.f32 %v2095, %v2131
    %v2133 = vpop.f32.mrb[0].mxu0
    %v2134 = vpop.f32.mrb[0].mxu0
    %v2135 = vadd.f32 %v2096, %v2134
    %v2136 = vpop.f32.mrb[0].mxu0
    %2137 = vdwg.mxu0
    %2138 = vmatprep.subr.bf16.mxu0 0
    %2139 = vmatpush1.bf16.xpose.msra.mxu0 %v2094
    %2140 = vmatprep.subr.bf16.mxu0 0
    %2141 = vmatpush1.bf16.xpose.msra.mxu0 0
    %2142 = vmatprep.subr.bf16.mxu0 0
    %2143 = vmatpush1.bf16.xpose.msra.mxu0 0
    %2144 = vmatprep.subr.bf16.mxu0 0
    %2145 = vmatpush1.bf16.xpose.msra.mxu0 0
    %2146 = vmatprep.subr.bf16.mxu0 0
    %2147 = vmatpush1.bf16.xpose.msra.mxu0 0
    %2148 = vmatprep.subr.bf16.mxu0 0
    %2149 = vmatpush1.bf16.xpose.msra.mxu0 0
    %2150 = vmatprep.subr.bf16.mxu0 0
    %2151 = vmatpush1.bf16.xpose.msra.mxu0 0
    %2152 = vmatprep.subr.bf16.mxu0 0
    %2153 = vmatpush1.bf16.xpose.msra.mxu0 0
    %2154 = vmatprep.subr.bf16.mxu0 0
    %2155 = vmatpush1.bf16.xpose.msra.mxu0 0
    %2156 = vmatprep.subr.bf16.mxu0 0
    %2157 = vmatpush1.bf16.xpose.msra.mxu0 0
    %2158 = vmatprep.subr.bf16.mxu0 0
    %2159 = vmatpush1.bf16.xpose.msra.mxu0 0
    %2160 = vmatprep.subr.bf16.mxu0 0
    %2161 = vmatpush1.bf16.xpose.msra.mxu0 0
    %2162 = vmatprep.subr.bf16.mxu0 0
    %2163 = vmatpush1.bf16.xpose.msra.mxu0 0
    %2164 = vmatprep.subr.bf16.mxu0 0
    %2165 = vmatpush1.bf16.xpose.msra.mxu0 0
    %2166 = vmatprep.subr.bf16.mxu0 0
    %2167 = vmatpush1.bf16.xpose.msra.mxu0 0
    %2168 = vmatprep.subr.bf16.mxu0 0
    %2169 = vmatpush1.bf16.xpose.msra.mxu0 0
    %2170 = vmatprep.mubr.bf16.mxu0 0
    %2171 = vmatmul.mubr.bf16.gmra.mrb[0].mxu0 %v1976
    %v2172 = vpop.f32.mrb[0].mxu0
    %v2173 = vadd.f32 %v2095, %v2172
    %v2174 = vpop.f32.mrb[0].mxu0
    %v2175 = vpop.f32.mrb[0].mxu0
    %v2176 = vadd.f32 %v2096, %v2175
    %v2177 = vpop.f32.mrb[0].mxu0
    %2178 = vdwg.mxu0
    %vm2179 = vcmask 64512
    %v2180 = vsel %vm2179, %v2132, -inf
    %2181 = vmax.xlane.f32.xlu0 %v2180
    %v2182 = vpop.xlane.xlu0 %2181
    %v2183 = vsel %vm2179, %v2135, -inf
    %2184 = vmax.xlane.f32.xlu0 %v2183
    %v2185 = vpop.xlane.xlu0 %2184
    %v2186 = vsel %vm2179, %v2173, -inf
    %2187 = vmax.xlane.f32.xlu0 %v2186
    %v2188 = vpop.xlane.xlu0 %2187
    %v2189 = vsel %vm2179, %v2176, -inf
    %2190 = vmax.xlane.f32.xlu0 %v2189
    %v2191 = vpop.xlane.xlu0 %2190
    %v2192 = vsub.f32 %v2132, %v2182
    %v2193 = vsub.f32 %v2135, %v2185
    %v2194 = vsub.f32 %v2173, %v2188
    %v2195 = vsub.f32 %v2176, %v2191
    %v2196 = vmul.f32 %v2192, 1.442695
    %v2197 = vpow.pop %v2196
    %v2198 = vmul.f32 %v2193, 1.442695
    %v2199 = vpow.pop %v2198
    %v2200 = vmul.f32 %v2194, 1.442695
    %v2201 = vpow.pop %v2200
    %v2202 = vmul.f32 %v2195, 1.442695
    %v2203 = vpow.pop %v2202
    %v2204 = vsel %vm2179, %v2197, 0.0
    %2205 = vadd.xlane.f32.xlu0 %v2204
    %v2206 = vpop.xlane.xlu0 %2205
    %v2207 = vsel %vm2179, %v2199, 0.0
    %2208 = vadd.xlane.f32.xlu0 %v2207
    %v2209 = vpop.xlane.xlu0 %2208
    %v2210 = vsel %vm2179, %v2201, 0.0
    %2211 = vadd.xlane.f32.xlu0 %v2210
    %v2212 = vpop.xlane.xlu0 %2211
    %v2213 = vsel %vm2179, %v2203, 0.0
    %2214 = vadd.xlane.f32.xlu0 %v2213
    %v2215 = vpop.xlane.xlu0 %2214
    %v2216 = vpack.c.bf16 %v2199, %v2197
    %v2217 = vpack.c.bf16 %v2203, %v2201
    %v2218 = vcombine.low %v1020, %v1034
    %v2219 = vcombine.low %v1042, %v1044
    %v2220 = vcombine.low %v1027, %v1041
    %v2221 = vcombine.low %v1043, %v1045
    %v2223 = vunpack.c.l.s4 1966171168
    %v2224 = vunpack.c.0.s8 %v2223
    %v2225 = vlaneseq
    %v2226 = vshrl.u32 %v2225, 7
    %v2227 = vsub.s32 %v2224, %v2226
    %v2228 = vrot.slane %v2218, %v2227
    %v2230 = vunpack.c.l.s4 1966171168
    %v2231 = vunpack.c.0.s8 %v2230
    %v2232 = vlaneseq
    %v2233 = vshrl.u32 %v2232, 7
    %v2234 = vsub.s32 %v2231, %v2233
    %v2235 = vrot.slane %v2219, %v2234
    %v2237 = vunpack.c.l.s4 1966171168
    %v2238 = vunpack.c.0.s8 %v2237
    %v2239 = vlaneseq
    %v2240 = vshrl.u32 %v2239, 7
    %v2241 = vsub.s32 %v2238, %v2240
    %v2242 = vrot.slane %v2220, %v2241
    %v2244 = vunpack.c.l.s4 1966171168
    %v2245 = vunpack.c.0.s8 %v2244
    %v2246 = vlaneseq
    %v2247 = vshrl.u32 %v2246, 7
    %v2248 = vsub.s32 %v2245, %v2247
    %v2249 = vrot.slane %v2221, %v2248
    %v2250 = vcombine.low %v2228, %v2235
    %v2251 = vcombine.low %v2242, %v2249
    %v2253 = vunpack.c.l.s4 1966171168
    %v2254 = vunpack.c.0.s8 %v2253
    %v2255 = vlaneseq
    %v2256 = vshrl.u32 %v2255, 7
    %v2257 = vsub.s32 %v2254, %v2256
    %v2258 = vrot.slane %v2250, %v2257
    %v2260 = vunpack.c.l.s4 1966171168
    %v2261 = vunpack.c.0.s8 %v2260
    %v2262 = vlaneseq
    %v2263 = vshrl.u32 %v2262, 7
    %v2264 = vsub.s32 %v2261, %v2263
    %v2265 = vrot.slane %v2251, %v2264
    %v2266 = vcombine.low %v2258, %v2265
    %v2267 = vcombine.low %v1069, %v1083
    %v2268 = vcombine.low %v1091, %v1093
    %v2269 = vcombine.low %v1076, %v1090
    %v2270 = vcombine.low %v1092, %v1094
    %v2272 = vunpack.c.l.s4 1966171168
    %v2273 = vunpack.c.0.s8 %v2272
    %v2274 = vlaneseq
    %v2275 = vshrl.u32 %v2274, 7
    %v2276 = vsub.s32 %v2273, %v2275
    %v2277 = vrot.slane %v2267, %v2276
    %v2279 = vunpack.c.l.s4 1966171168
    %v2280 = vunpack.c.0.s8 %v2279
    %v2281 = vlaneseq
    %v2282 = vshrl.u32 %v2281, 7
    %v2283 = vsub.s32 %v2280, %v2282
    %v2284 = vrot.slane %v2268, %v2283
    %v2286 = vunpack.c.l.s4 1966171168
    %v2287 = vunpack.c.0.s8 %v2286
    %v2288 = vlaneseq
    %v2289 = vshrl.u32 %v2288, 7
    %v2290 = vsub.s32 %v2287, %v2289
    %v2291 = vrot.slane %v2269, %v2290
    %v2293 = vunpack.c.l.s4 1966171168
    %v2294 = vunpack.c.0.s8 %v2293
    %v2295 = vlaneseq
    %v2296 = vshrl.u32 %v2295, 7
    %v2297 = vsub.s32 %v2294, %v2296
    %v2298 = vrot.slane %v2270, %v2297
    %v2299 = vcombine.low %v2277, %v2284
    %v2300 = vcombine.low %v2291, %v2298
    %v2302 = vunpack.c.l.s4 1966171168
    %v2303 = vunpack.c.0.s8 %v2302
    %v2304 = vlaneseq
    %v2305 = vshrl.u32 %v2304, 7
    %v2306 = vsub.s32 %v2303, %v2305
    %v2307 = vrot.slane %v2299, %v2306
    %v2309 = vunpack.c.l.s4 1966171168
    %v2310 = vunpack.c.0.s8 %v2309
    %v2311 = vlaneseq
    %v2312 = vshrl.u32 %v2311, 7
    %v2313 = vsub.s32 %v2310, %v2312
    %v2314 = vrot.slane %v2300, %v2313
    %v2315 = vcombine.low %v2307, %v2314
    %v2318 = vpack.c.bf16 %v2266, %v2266
    %v2319 = vpack.c.bf16 %v2315, %v2315
    %v2321 = vsel %vm2179, %v2216, 0
    %vm2323 = vcmask 1043456
    %v2325 = vsel %vm2323, %v2318, 0
    %2327 = vmatprep.subr.bf16.mxu0 0
    %2328 = vmatpush1.bf16.msra.mxu0 %v2325
    %2329 = vmatprep.subr.bf16.mxu0 0
    %2330 = vmatpush1.bf16.msra.mxu0 0
    %2331 = vmatprep.subr.bf16.mxu0 0
    %2332 = vmatpush1.bf16.msra.mxu0 0
    %2333 = vmatprep.subr.bf16.mxu0 0
    %2334 = vmatpush1.bf16.msra.mxu0 0
    %2335 = vmatprep.subr.bf16.mxu0 0
    %2336 = vmatpush1.bf16.msra.mxu0 0
    %2337 = vmatprep.subr.bf16.mxu0 0
    %2338 = vmatpush1.bf16.msra.mxu0 0
    %2339 = vmatprep.subr.bf16.mxu0 0
    %2340 = vmatpush1.bf16.msra.mxu0 0
    %2341 = vmatprep.subr.bf16.mxu0 0
    %2342 = vmatpush1.bf16.msra.mxu0 0
    %2343 = vmatprep.subr.bf16.mxu0 0
    %2344 = vmatpush1.bf16.msra.mxu0 0
    %2345 = vmatprep.subr.bf16.mxu0 0
    %2346 = vmatpush1.bf16.msra.mxu0 0
    %2347 = vmatprep.subr.bf16.mxu0 0
    %2348 = vmatpush1.bf16.msra.mxu0 0
    %2349 = vmatprep.subr.bf16.mxu0 0
    %2350 = vmatpush1.bf16.msra.mxu0 0
    %2351 = vmatprep.subr.bf16.mxu0 0
    %2352 = vmatpush1.bf16.msra.mxu0 0
    %2353 = vmatprep.subr.bf16.mxu0 0
    %2354 = vmatpush1.bf16.msra.mxu0 0
    %2355 = vmatprep.subr.bf16.mxu0 0
    %2356 = vmatpush1.bf16.msra.mxu0 0
    %2357 = vmatprep.subr.bf16.mxu0 0
    %2358 = vmatpush1.bf16.msra.mxu0 0
    %2359 = vmatprep.mubr.bf16.mxu0 0
    %2360 = vmatmul.mubr.bf16.gmra.mrb[0].mxu0 %v2321
    %v2361 = vpop.f32.mrb[0].mxu0
    %v2362 = vadd.f32 0.0, %v2361
    %v2363 = vpop.f32.mrb[0].mxu0
    %v2364 = vpop.f32.mrb[0].mxu0
    %v2365 = vadd.f32 0.0, %v2364
    %v2366 = vpop.f32.mrb[0].mxu0
    %2367 = vdwg.mxu0
    %v2369 = vsel %vm2179, %v2217, 0
    %v2372 = vsel %vm2323, %v2319, 0
    %2374 = vmatprep.subr.bf16.mxu0 0
    %2375 = vmatpush1.bf16.msra.mxu0 %v2372
    %2376 = vmatprep.subr.bf16.mxu0 0
    %2377 = vmatpush1.bf16.msra.mxu0 0
    %2378 = vmatprep.subr.bf16.mxu0 0
    %2379 = vmatpush1.bf16.msra.mxu0 0
    %2380 = vmatprep.subr.bf16.mxu0 0
    %2381 = vmatpush1.bf16.msra.mxu0 0
    %2382 = vmatprep.subr.bf16.mxu0 0
    %2383 = vmatpush1.bf16.msra.mxu0 0
    %2384 = vmatprep.subr.bf16.mxu0 0
    %2385 = vmatpush1.bf16.msra.mxu0 0
    %2386 = vmatprep.subr.bf16.mxu0 0
    %2387 = vmatpush1.bf16.msra.mxu0 0
    %2388 = vmatprep.subr.bf16.mxu0 0
    %2389 = vmatpush1.bf16.msra.mxu0 0
    %2390 = vmatprep.subr.bf16.mxu0 0
    %2391 = vmatpush1.bf16.msra.mxu0 0
    %2392 = vmatprep.subr.bf16.mxu0 0
    %2393 = vmatpush1.bf16.msra.mxu0 0
    %2394 = vmatprep.subr.bf16.mxu0 0
    %2395 = vmatpush1.bf16.msra.mxu0 0
    %2396 = vmatprep.subr.bf16.mxu0 0
    %2397 = vmatpush1.bf16.msra.mxu0 0
    %2398 = vmatprep.subr.bf16.mxu0 0
    %2399 = vmatpush1.bf16.msra.mxu0 0
    %2400 = vmatprep.subr.bf16.mxu0 0
    %2401 = vmatpush1.bf16.msra.mxu0 0
    %2402 = vmatprep.subr.bf16.mxu0 0
    %2403 = vmatpush1.bf16.msra.mxu0 0
    %2404 = vmatprep.subr.bf16.mxu0 0
    %2405 = vmatpush1.bf16.msra.mxu0 0
    %2406 = vmatprep.mubr.bf16.mxu0 0
    %2407 = vmatmul.mubr.bf16.gmra.mrb[0].mxu0 %v2369
    %v2408 = vpop.f32.mrb[0].mxu0
    %v2409 = vadd.f32 0.0, %v2408
    %v2410 = vpop.f32.mrb[0].mxu0
    %v2411 = vpop.f32.mrb[0].mxu0
    %v2412 = vadd.f32 0.0, %v2411
    %v2413 = vpop.f32.mrb[0].mxu0
    %2414 = vdwg.mxu0
    %v2415 = vrcp.pop %v2206
    %v2416 = vrcp.pop %v2209
    %v2417 = vrcp.pop %v2212
    %v2418 = vrcp.pop %v2215
    %v2419 = vmul.f32 %v2362, %v2415
    %v2420 = vmul.f32 %v2365, %v2416
    %v2421 = vmul.f32 %v2409, %v2417
    %v2422 = vmul.f32 %v2412, %v2418
    %v2423 = vcombine.high %v2419, 0.0
    %v2425 = vunpack.c.l.s4 1983009808
    %v2426 = vunpack.c.0.s8 %v2425
    %v2427 = vlaneseq
    %v2428 = vshrl.u32 %v2427, 7
    %v2429 = vsub.s32 %v2426, %v2428
    %v2430 = vrot.slane %v2419, %v2429
    %v2432 = vunpack.c.l.s4 1983009808
    %v2433 = vunpack.c.0.s8 %v2432
    %v2434 = vlaneseq
    %v2435 = vshrl.u32 %v2434, 7
    %v2436 = vsub.s32 %v2433, %v2435
    %v2437 = vrot.slane %v2423, %v2436
    %v2438 = vcombine.high %v2420, 0.0
    %v2440 = vunpack.c.l.s4 1983009808
    %v2441 = vunpack.c.0.s8 %v2440
    %v2442 = vlaneseq
    %v2443 = vshrl.u32 %v2442, 7
    %v2444 = vsub.s32 %v2441, %v2443
    %v2445 = vrot.slane %v2420, %v2444
    %v2447 = vunpack.c.l.s4 1983009808
    %v2448 = vunpack.c.0.s8 %v2447
    %v2449 = vlaneseq
    %v2450 = vshrl.u32 %v2449, 7
    %v2451 = vsub.s32 %v2448, %v2450
    %v2452 = vrot.slane %v2438, %v2451
    %v2453 = vcombine.low %v2430, %v2445
    %v2454 = vcombine.high %v2430, %v2445
    %v2456 = vunpack.c.l.s4 1934713408
    %v2457 = vunpack.c.0.s8 %v2456
    %v2458 = vlaneseq
    %v2459 = vshrl.u32 %v2458, 7
    %v2460 = vsub.s32 %v2457, %v2459
    %v2461 = vrot.slane %v2453, %v2460
    %v2463 = vunpack.c.l.s4 1934713408
    %v2464 = vunpack.c.0.s8 %v2463
    %v2465 = vlaneseq
    %v2466 = vshrl.u32 %v2465, 7
    %v2467 = vsub.s32 %v2464, %v2466
    %v2468 = vrot.slane %v2454, %v2467
    %v2469 = vcombine.low %v2437, %v2452
    %v2470 = vcombine.high %v2437, %v2452
    %v2472 = vunpack.c.l.s4 1934713408
    %v2473 = vunpack.c.0.s8 %v2472
    %v2474 = vlaneseq
    %v2475 = vshrl.u32 %v2474, 7
    %v2476 = vsub.s32 %v2473, %v2475
    %v2477 = vrot.slane %v2469, %v2476
    %v2479 = vunpack.c.l.s4 1934713408
    %v2480 = vunpack.c.0.s8 %v2479
    %v2481 = vlaneseq
    %v2482 = vshrl.u32 %v2481, 7
    %v2483 = vsub.s32 %v2480, %v2482
    %v2484 = vrot.slane %v2470, %v2483
    %v2485 = vcombine.high %v2461, 0.0
    %v2486 = vcombine.high %v2468, 0.0
    %v2487 = vcombine.high %v2477, 0.0
    %v2488 = vcombine.high %v2484, 0.0
    %v2489 = vcombine.high %v2421, 0.0
    %v2491 = vunpack.c.l.s4 1983009808
    %v2492 = vunpack.c.0.s8 %v2491
    %v2493 = vlaneseq
    %v2494 = vshrl.u32 %v2493, 7
    %v2495 = vsub.s32 %v2492, %v2494
    %v2496 = vrot.slane %v2421, %v2495
    %v2498 = vunpack.c.l.s4 1983009808
    %v2499 = vunpack.c.0.s8 %v2498
    %v2500 = vlaneseq
    %v2501 = vshrl.u32 %v2500, 7
    %v2502 = vsub.s32 %v2499, %v2501
    %v2503 = vrot.slane %v2489, %v2502
    %v2504 = vcombine.high %v2422, 0.0
    %v2506 = vunpack.c.l.s4 1983009808
    %v2507 = vunpack.c.0.s8 %v2506
    %v2508 = vlaneseq
    %v2509 = vshrl.u32 %v2508, 7
    %v2510 = vsub.s32 %v2507, %v2509
    %v2511 = vrot.slane %v2422, %v2510
    %v2513 = vunpack.c.l.s4 1983009808
    %v2514 = vunpack.c.0.s8 %v2513
    %v2515 = vlaneseq
    %v2516 = vshrl.u32 %v2515, 7
    %v2517 = vsub.s32 %v2514, %v2516
    %v2518 = vrot.slane %v2504, %v2517
    %v2519 = vcombine.low %v2496, %v2511
    %v2520 = vcombine.high %v2496, %v2511
    %v2522 = vunpack.c.l.s4 1934713408
    %v2523 = vunpack.c.0.s8 %v2522
    %v2524 = vlaneseq
    %v2525 = vshrl.u32 %v2524, 7
    %v2526 = vsub.s32 %v2523, %v2525
    %v2527 = vrot.slane %v2519, %v2526
    %v2529 = vunpack.c.l.s4 1934713408
    %v2530 = vunpack.c.0.s8 %v2529
    %v2531 = vlaneseq
    %v2532 = vshrl.u32 %v2531, 7
    %v2533 = vsub.s32 %v2530, %v2532
    %v2534 = vrot.slane %v2520, %v2533
    %v2535 = vcombine.low %v2503, %v2518
    %v2536 = vcombine.high %v2503, %v2518
    %v2538 = vunpack.c.l.s4 1934713408
    %v2539 = vunpack.c.0.s8 %v2538
    %v2540 = vlaneseq
    %v2541 = vshrl.u32 %v2540, 7
    %v2542 = vsub.s32 %v2539, %v2541
    %v2543 = vrot.slane %v2535, %v2542
    %v2545 = vunpack.c.l.s4 1934713408
    %v2546 = vunpack.c.0.s8 %v2545
    %v2547 = vlaneseq
    %v2548 = vshrl.u32 %v2547, 7
    %v2549 = vsub.s32 %v2546, %v2548
    %v2550 = vrot.slane %v2536, %v2549
    %v2551 = vcombine.high %v2527, 0.0
    %v2552 = vcombine.high %v2534, 0.0
    %v2553 = vcombine.high %v2543, 0.0
    %v2554 = vcombine.high %v2550, 0.0
    %v2555 = vcombine.low %v2461, %v2468
    %v2557 = vunpack.c.l.s4 1983009808
    %v2558 = vunpack.c.0.s8 %v2557
    %v2559 = vlaneseq
    %v2560 = vshrl.u32 %v2559, 7
    %v2561 = vsub.s32 %v2558, %v2560
    %v2562 = vrot.slane %v2555, %v2561
    %v2563 = vcombine.low %v2485, %v2486
    %v2565 = vunpack.c.l.s4 1983009808
    %v2566 = vunpack.c.0.s8 %v2565
    %v2567 = vlaneseq
    %v2568 = vshrl.u32 %v2567, 7
    %v2569 = vsub.s32 %v2566, %v2568
    %v2570 = vrot.slane %v2563, %v2569
    %v2571 = vcombine.low %v2477, %v2484
    %v2573 = vunpack.c.l.s4 1983009808
    %v2574 = vunpack.c.0.s8 %v2573
    %v2575 = vlaneseq
    %v2576 = vshrl.u32 %v2575, 7
    %v2577 = vsub.s32 %v2574, %v2576
    %v2578 = vrot.slane %v2571, %v2577
    %v2579 = vcombine.low %v2487, %v2488
    %v2581 = vunpack.c.l.s4 1983009808
    %v2582 = vunpack.c.0.s8 %v2581
    %v2583 = vlaneseq
    %v2584 = vshrl.u32 %v2583, 7
    %v2585 = vsub.s32 %v2582, %v2584
    %v2586 = vrot.slane %v2579, %v2585
    %v2587 = vcombine.low %v2562, %v2570
    %v2589 = vunpack.c.l.s4 1934713408
    %v2590 = vunpack.c.0.s8 %v2589
    %v2591 = vlaneseq
    %v2592 = vshrl.u32 %v2591, 7
    %v2593 = vsub.s32 %v2590, %v2592
    %v2594 = vrot.slane %v2587, %v2593
    %v2595 = vcombine.low %v2578, %v2586
    %v2597 = vunpack.c.l.s4 1934713408
    %v2598 = vunpack.c.0.s8 %v2597
    %v2599 = vlaneseq
    %v2600 = vshrl.u32 %v2599, 7
    %v2601 = vsub.s32 %v2598, %v2600
    %v2602 = vrot.slane %v2595, %v2601
    %v2603 = vcombine.low %v2594, %v2602
    %v2604 = vcombine.high %v2594, %v2602
    %v2605 = vcombine.low %v2527, %v2534
    %v2607 = vunpack.c.l.s4 1983009808
    %v2608 = vunpack.c.0.s8 %v2607
    %v2609 = vlaneseq
    %v2610 = vshrl.u32 %v2609, 7
    %v2611 = vsub.s32 %v2608, %v2610
    %v2612 = vrot.slane %v2605, %v2611
    %v2613 = vcombine.low %v2551, %v2552
    %v2615 = vunpack.c.l.s4 1983009808
    %v2616 = vunpack.c.0.s8 %v2615
    %v2617 = vlaneseq
    %v2618 = vshrl.u32 %v2617, 7
    %v2619 = vsub.s32 %v2616, %v2618
    %v2620 = vrot.slane %v2613, %v2619
    %v2621 = vcombine.low %v2543, %v2550
    %v2623 = vunpack.c.l.s4 1983009808
    %v2624 = vunpack.c.0.s8 %v2623
    %v2625 = vlaneseq
    %v2626 = vshrl.u32 %v2625, 7
    %v2627 = vsub.s32 %v2624, %v2626
    %v2628 = vrot.slane %v2621, %v2627
    %v2629 = vcombine.low %v2553, %v2554
    %v2631 = vunpack.c.l.s4 1983009808
    %v2632 = vunpack.c.0.s8 %v2631
    %v2633 = vlaneseq
    %v2634 = vshrl.u32 %v2633, 7
    %v2635 = vsub.s32 %v2632, %v2634
    %v2636 = vrot.slane %v2629, %v2635
    %v2637 = vcombine.low %v2612, %v2620
    %v2639 = vunpack.c.l.s4 1934713408
    %v2640 = vunpack.c.0.s8 %v2639
    %v2641 = vlaneseq
    %v2642 = vshrl.u32 %v2641, 7
    %v2643 = vsub.s32 %v2640, %v2642
    %v2644 = vrot.slane %v2637, %v2643
    %v2645 = vcombine.low %v2628, %v2636
    %v2647 = vunpack.c.l.s4 1934713408
    %v2648 = vunpack.c.0.s8 %v2647
    %v2649 = vlaneseq
    %v2650 = vshrl.u32 %v2649, 7
    %v2651 = vsub.s32 %v2648, %v2650
    %v2652 = vrot.slane %v2645, %v2651
    %v2653 = vcombine.low %v2644, %v2652
    %v2654 = vcombine.high %v2644, %v2652
    %v2655 = vpack.c.bf16 %v2653, %v2603
    %v2656 = vpack.c.bf16 %v2654, %v2604
    %v2657 = vld [vmem:[#allocation10] sm:$0xff]
    %v2658 = vld [vmem:[#allocation10 + $0x8] sm:$0xff]
    %v2659 = vld [vmem:[#allocation10 + $0x10] sm:$0xff]
    %v2660 = vld [vmem:[#allocation10 + $0x18] sm:$0xff]
    %v2661 = vld [vmem:[#allocation10 + $0x20] sm:$0xff]
    %v2662 = vld [vmem:[#allocation10 + $0x28] sm:$0xff]
    %v2663 = vld [vmem:[#allocation10 + $0x30] sm:$0xff]
    %v2664 = vld [vmem:[#allocation10 + $0x38] sm:$0xff]
    %v2665 = vld [vmem:[#allocation10 + $0x40] sm:$0xff]
    %v2666 = vld [vmem:[#allocation10 + $0x48] sm:$0xff]
    %v2667 = vld [vmem:[#allocation10 + $0x50] sm:$0xff]
    %v2668 = vld [vmem:[#allocation10 + $0x58] sm:$0xff]
    %v2669 = vld [vmem:[#allocation10 + $0x60] sm:$0xff]
    %v2670 = vld [vmem:[#allocation10 + $0x68] sm:$0xff]
    %v2671 = vld [vmem:[#allocation10 + $0x70] sm:$0xff]
    %v2672 = vld [vmem:[#allocation10 + $0x78] sm:$0xff]
    %v2673 = vld [vmem:[#allocation10 + $0x80] sm:$0xff]
    %v2674 = vld [vmem:[#allocation10 + $0x88] sm:$0xff]
    %v2675 = vld [vmem:[#allocation10 + $0x90] sm:$0xff]
    %v2676 = vld [vmem:[#allocation10 + $0x98] sm:$0xff]
    %v2677 = vld [vmem:[#allocation10 + $0xa0] sm:$0xff]
    %v2678 = vld [vmem:[#allocation10 + $0xa8] sm:$0xff]
    %v2679 = vld [vmem:[#allocation10 + $0xb0] sm:$0xff]
    %v2680 = vld [vmem:[#allocation10 + $0xb8] sm:$0xff]
    %v2681 = vld [vmem:[#allocation10 + $0xc0] sm:$0xff]
    %v2682 = vld [vmem:[#allocation10 + $0xc8] sm:$0xff]
    %v2683 = vld [vmem:[#allocation10 + $0xd0] sm:$0xff]
    %v2684 = vld [vmem:[#allocation10 + $0xd8] sm:$0xff]
    %v2685 = vld [vmem:[#allocation10 + $0xe0] sm:$0xff]
    %v2686 = vld [vmem:[#allocation10 + $0xe8] sm:$0xff]
    %v2687 = vld [vmem:[#allocation10 + $0xf0] sm:$0xff]
    %v2688 = vld [vmem:[#allocation10 + $0xf8] sm:$0xff]
    %v2721 = vunpack.c.l.b16 %v2657
    %v2722 = vunpack.c.h.b16 %v2657
    %v2723 = vunpack.c.l.b16 %v2658
    %v2724 = vunpack.c.h.b16 %v2658
    %v2725 = vunpack.c.l.b16 %v2659
    %v2726 = vunpack.c.h.b16 %v2659
    %v2727 = vunpack.c.l.b16 %v2660
    %v2728 = vunpack.c.h.b16 %v2660
    %v2729 = vunpack.c.l.b16 %v2661
    %v2730 = vunpack.c.h.b16 %v2661
    %v2731 = vunpack.c.l.b16 %v2662
    %v2732 = vunpack.c.h.b16 %v2662
    %v2733 = vunpack.c.l.b16 %v2663
    %v2734 = vunpack.c.h.b16 %v2663
    %v2735 = vunpack.c.l.b16 %v2664
    %v2736 = vunpack.c.h.b16 %v2664
    %v2737 = vunpack.c.l.b16 %v2665
    %v2738 = vunpack.c.h.b16 %v2665
    %v2739 = vunpack.c.l.b16 %v2666
    %v2740 = vunpack.c.h.b16 %v2666
    %v2741 = vunpack.c.l.b16 %v2667
    %v2742 = vunpack.c.h.b16 %v2667
    %v2743 = vunpack.c.l.b16 %v2668
    %v2744 = vunpack.c.h.b16 %v2668
    %v2745 = vunpack.c.l.b16 %v2669
    %v2746 = vunpack.c.h.b16 %v2669
    %v2747 = vunpack.c.l.b16 %v2670
    %v2748 = vunpack.c.h.b16 %v2670
    %v2749 = vunpack.c.l.b16 %v2671
    %v2750 = vunpack.c.h.b16 %v2671
    %v2751 = vunpack.c.l.b16 %v2672
    %v2752 = vunpack.c.h.b16 %v2672
    %v2753 = vunpack.c.l.b16 %v2673
    %v2754 = vunpack.c.h.b16 %v2673
    %v2755 = vunpack.c.l.b16 %v2674
    %v2756 = vunpack.c.h.b16 %v2674
    %v2757 = vunpack.c.l.b16 %v2675
    %v2758 = vunpack.c.h.b16 %v2675
    %v2759 = vunpack.c.l.b16 %v2676
    %v2760 = vunpack.c.h.b16 %v2676
    %v2761 = vunpack.c.l.b16 %v2677
    %v2762 = vunpack.c.h.b16 %v2677
    %v2763 = vunpack.c.l.b16 %v2678
    %v2764 = vunpack.c.h.b16 %v2678
    %v2765 = vunpack.c.l.b16 %v2679
    %v2766 = vunpack.c.h.b16 %v2679
    %v2767 = vunpack.c.l.b16 %v2680
    %v2768 = vunpack.c.h.b16 %v2680
    %v2769 = vunpack.c.l.b16 %v2681
    %v2770 = vunpack.c.h.b16 %v2681
    %v2771 = vunpack.c.l.b16 %v2682
    %v2772 = vunpack.c.h.b16 %v2682
    %v2773 = vunpack.c.l.b16 %v2683
    %v2774 = vunpack.c.h.b16 %v2683
    %v2775 = vunpack.c.l.b16 %v2684
    %v2776 = vunpack.c.h.b16 %v2684
    %v2777 = vunpack.c.l.b16 %v2685
    %v2778 = vunpack.c.h.b16 %v2685
    %v2779 = vunpack.c.l.b16 %v2686
    %v2780 = vunpack.c.h.b16 %v2686
    %v2781 = vunpack.c.l.b16 %v2687
    %v2782 = vunpack.c.h.b16 %v2687
    %v2783 = vunpack.c.l.b16 %v2688
    %v2784 = vunpack.c.h.b16 %v2688
    %v2785 = vpack.c.b16 %v2723, %v2721
    %v2786 = vpack.c.b16 %v2724, %v2722
    %v2787 = vpack.c.b16 %v2727, %v2725
    %v2788 = vpack.c.b16 %v2728, %v2726
    %v2789 = vpack.c.b16 %v2731, %v2729
    %v2790 = vpack.c.b16 %v2732, %v2730
    %v2791 = vpack.c.b16 %v2735, %v2733
    %v2792 = vpack.c.b16 %v2736, %v2734
    %v2793 = vpack.c.b16 %v2739, %v2737
    %v2794 = vpack.c.b16 %v2740, %v2738
    %v2795 = vpack.c.b16 %v2743, %v2741
    %v2796 = vpack.c.b16 %v2744, %v2742
    %v2797 = vpack.c.b16 %v2747, %v2745
    %v2798 = vpack.c.b16 %v2748, %v2746
    %v2799 = vpack.c.b16 %v2751, %v2749
    %v2800 = vpack.c.b16 %v2752, %v2750
    %v2801 = vpack.c.b16 %v2755, %v2753
    %v2802 = vpack.c.b16 %v2756, %v2754
    %v2803 = vpack.c.b16 %v2759, %v2757
    %v2804 = vpack.c.b16 %v2760, %v2758
    %v2805 = vpack.c.b16 %v2763, %v2761
    %v2806 = vpack.c.b16 %v2764, %v2762
    %v2807 = vpack.c.b16 %v2767, %v2765
    %v2808 = vpack.c.b16 %v2768, %v2766
    %v2809 = vpack.c.b16 %v2771, %v2769
    %v2810 = vpack.c.b16 %v2772, %v2770
    %v2811 = vpack.c.b16 %v2775, %v2773
    %v2812 = vpack.c.b16 %v2776, %v2774
    %v2813 = vpack.c.b16 %v2779, %v2777
    %v2814 = vpack.c.b16 %v2780, %v2778
    %v2815 = vpack.c.b16 %v2783, %v2781
    %v2816 = vpack.c.b16 %v2784, %v2782
    %2849 = vmatprep.subr.bf16.mxu0 %v2786
    %2850 = vmatpush1.bf16.msra.mxu0 %v2785
    %2851 = vmatprep.subr.bf16.mxu0 %v2788
    %2852 = vmatpush1.bf16.msra.mxu0 %v2787
    %2853 = vmatprep.subr.bf16.mxu0 %v2790
    %2854 = vmatpush1.bf16.msra.mxu0 %v2789
    %2855 = vmatprep.subr.bf16.mxu0 %v2792
    %2856 = vmatpush1.bf16.msra.mxu0 %v2791
    %2857 = vmatprep.subr.bf16.mxu0 %v2794
    %2858 = vmatpush1.bf16.msra.mxu0 %v2793
    %2859 = vmatprep.subr.bf16.mxu0 %v2796
    %2860 = vmatpush1.bf16.msra.mxu0 %v2795
    %2861 = vmatprep.subr.bf16.mxu0 %v2798
    %2862 = vmatpush1.bf16.msra.mxu0 %v2797
    %2863 = vmatprep.subr.bf16.mxu0 %v2800
    %2864 = vmatpush1.bf16.msra.mxu0 %v2799
    %2865 = vmatprep.subr.bf16.mxu0 %v2802
    %2866 = vmatpush1.bf16.msra.mxu0 %v2801
    %2867 = vmatprep.subr.bf16.mxu0 %v2804
    %2868 = vmatpush1.bf16.msra.mxu0 %v2803
    %2869 = vmatprep.subr.bf16.mxu0 %v2806
    %2870 = vmatpush1.bf16.msra.mxu0 %v2805
    %2871 = vmatprep.subr.bf16.mxu0 %v2808
    %2872 = vmatpush1.bf16.msra.mxu0 %v2807
    %2873 = vmatprep.subr.bf16.mxu0 %v2810
    %2874 = vmatpush1.bf16.msra.mxu0 %v2809
    %2875 = vmatprep.subr.bf16.mxu0 %v2812
    %2876 = vmatpush1.bf16.msra.mxu0 %v2811
    %2877 = vmatprep.subr.bf16.mxu0 %v2814
    %2878 = vmatpush1.bf16.msra.mxu0 %v2813
    %2879 = vmatprep.subr.bf16.mxu0 %v2816
    %2880 = vmatpush1.bf16.msra.mxu0 %v2815
    %2881 = vmatprep.mubr.bf16.mxu0 %v2656
    %2882 = vmatmul.mubr.bf16.gmra.mrb[0].mxu0 %v2655
    %v2883 = vpop.f32.mrb[0].mxu0
    %v2884 = vadd.f32 0.0, %v2883
    %v2885 = vpop.f32.mrb[0].mxu0
    %v2886 = vadd.f32 0.0, %v2885
    %v2887 = vpop.f32.mrb[0].mxu0
    %v2888 = vadd.f32 0.0, %v2887
    %v2889 = vpop.f32.mrb[0].mxu0
    %v2890 = vadd.f32 0.0, %v2889
    %2891 = vdwg.mxu0
    %v2892 = vadd.f32 %v134, %v2884
    %v2893 = vadd.f32 %v135, %v2886
    %v2894 = vadd.f32 %v136, %v2888
    %v2895 = vadd.f32 %v137, %v2890
    %v2896 = vld [vmem:[%s9] sm:$0x3]
    %v2897 = vmul.f32 %v2892, %v2892
    %v2898 = vmul.f32 %v2893, %v2893
    %v2899 = vmul.f32 %v2894, %v2894
    %v2900 = vmul.f32 %v2895, %v2895
    %v2901 = vadd.f32 %v2897, %v2898
    %2902 = vadd.xlane.f32.xlu0 %v2901
    %v2903 = vpop.xlane.xlu0 %2902
    %v2904 = vadd.f32 %v2899, %v2900
    %2905 = vadd.xlane.f32.xlu0 %v2904
    %v2906 = vpop.xlane.xlu0 %2905
    %v2907 = vmul.f32 %v2903, %v149
    %v2908 = vmul.f32 %v2906, %v149
    %v2909 = vadd.f32 %v2907, 1e-06
    %v2910 = vadd.f32 %v2908, 1e-06
    %v2911 = vrsqrt.pop %v2909
    %v2912 = vrsqrt.pop %v2910
    %v2913 = vmul.f32 %v2892, %v2911
    %v2914 = vmul.f32 %v2893, %v2911
    %v2915 = vmul.f32 %v2894, %v2912
    %v2916 = vmul.f32 %v2895, %v2912
    %v2918 = vlaneseq
    %v2919 = vshrl.u32 %v2918, 7
    %v2920 = vsub.s32 0, %v2919
    %v2921 = vrot.slane %v2896, %v2920
    %v2922 = vlaneseq
    %v2923 = vshrl.u32 %v2922, 7
    %v2924 = vsub.s32 1, %v2923
    %v2925 = vrot.slane %v2896, %v2924
    %v2928 = vmul.f32 %v2913, %v2921
    %v2929 = vmul.f32 %v2914, %v2925
    %v2930 = vmul.f32 %v2915, %v2921
    %v2931 = vmul.f32 %v2916, %v2925
    %v2932 = vpack.c.bf16 %v2930, %v2928
    %v2933 = vpack.c.bf16 %v2931, %v2929
    %v2934 = vld [vmem:[#allocation11] sm:$0xff]
    %v2935 = vld [vmem:[#allocation11 + $0x8] sm:$0xff]
    %v2936 = vld [vmem:[#allocation11 + $0x10] sm:$0xff]
    %v2937 = vld [vmem:[#allocation11 + $0x18] sm:$0xff]
    %v2938 = vld [vmem:[#allocation11 + $0x20] sm:$0xff]
    %v2939 = vld [vmem:[#allocation11 + $0x28] sm:$0xff]
    %v2940 = vld [vmem:[#allocation11 + $0x30] sm:$0xff]
    %v2941 = vld [vmem:[#allocation11 + $0x38] sm:$0xff]
    %v2942 = vld [vmem:[#allocation11 + $0x40] sm:$0xff]
    %v2943 = vld [vmem:[#allocation11 + $0x48] sm:$0xff]
    %v2944 = vld [vmem:[#allocation11 + $0x50] sm:$0xff]
    %v2945 = vld [vmem:[#allocation11 + $0x58] sm:$0xff]
    %v2946 = vld [vmem:[#allocation11 + $0x60] sm:$0xff]
    %v2947 = vld [vmem:[#allocation11 + $0x68] sm:$0xff]
    %v2948 = vld [vmem:[#allocation11 + $0x70] sm:$0xff]
    %v2949 = vld [vmem:[#allocation11 + $0x78] sm:$0xff]
    %v2950 = vld [vmem:[#allocation11 + $0x80] sm:$0xff]
    %v2951 = vld [vmem:[#allocation11 + $0x88] sm:$0xff]
    %v2952 = vld [vmem:[#allocation11 + $0x90] sm:$0xff]
    %v2953 = vld [vmem:[#allocation11 + $0x98] sm:$0xff]
    %v2954 = vld [vmem:[#allocation11 + $0xa0] sm:$0xff]
    %v2955 = vld [vmem:[#allocation11 + $0xa8] sm:$0xff]
    %v2956 = vld [vmem:[#allocation11 + $0xb0] sm:$0xff]
    %v2957 = vld [vmem:[#allocation11 + $0xb8] sm:$0xff]
    %v2958 = vld [vmem:[#allocation11 + $0xc0] sm:$0xff]
    %v2959 = vld [vmem:[#allocation11 + $0xc8] sm:$0xff]
    %v2960 = vld [vmem:[#allocation11 + $0xd0] sm:$0xff]
    %v2961 = vld [vmem:[#allocation11 + $0xd8] sm:$0xff]
    %v2962 = vld [vmem:[#allocation11 + $0xe0] sm:$0xff]
    %v2963 = vld [vmem:[#allocation11 + $0xe8] sm:$0xff]
    %v2964 = vld [vmem:[#allocation11 + $0xf0] sm:$0xff]
    %v2965 = vld [vmem:[#allocation11 + $0xf8] sm:$0xff]
    %v2966 = vld [vmem:[#allocation11 + $0x100] sm:$0xff]
    %v2967 = vld [vmem:[#allocation11 + $0x108] sm:$0xff]
    %v2968 = vld [vmem:[#allocation11 + $0x110] sm:$0xff]
    %v2969 = vld [vmem:[#allocation11 + $0x118] sm:$0xff]
    %v2970 = vld [vmem:[#allocation11 + $0x120] sm:$0xff]
    %v2971 = vld [vmem:[#allocation11 + $0x128] sm:$0xff]
    %v2972 = vld [vmem:[#allocation11 + $0x130] sm:$0xff]
    %v2973 = vld [vmem:[#allocation11 + $0x138] sm:$0xff]
    %v2974 = vld [vmem:[#allocation11 + $0x140] sm:$0xff]
    %v2975 = vld [vmem:[#allocation11 + $0x148] sm:$0xff]
    %v2976 = vld [vmem:[#allocation11 + $0x150] sm:$0xff]
    %v2977 = vld [vmem:[#allocation11 + $0x158] sm:$0xff]
    %v2978 = vld [vmem:[#allocation11 + $0x160] sm:$0xff]
    %v2979 = vld [vmem:[#allocation11 + $0x168] sm:$0xff]
    %v2980 = vld [vmem:[#allocation11 + $0x170] sm:$0xff]
    %v2981 = vld [vmem:[#allocation11 + $0x178] sm:$0xff]
    %v2982 = vld [vmem:[#allocation11 + $0x180] sm:$0xff]
    %v2983 = vld [vmem:[#allocation11 + $0x188] sm:$0xff]
    %v2984 = vld [vmem:[#allocation11 + $0x190] sm:$0xff]
    %v2985 = vld [vmem:[#allocation11 + $0x198] sm:$0xff]
    %v2986 = vld [vmem:[#allocation11 + $0x1a0] sm:$0xff]
    %v2987 = vld [vmem:[#allocation11 + $0x1a8] sm:$0xff]
    %v2988 = vld [vmem:[#allocation11 + $0x1b0] sm:$0xff]
    %v2989 = vld [vmem:[#allocation11 + $0x1b8] sm:$0xff]
    %v2990 = vld [vmem:[#allocation11 + $0x1c0] sm:$0xff]
    %v2991 = vld [vmem:[#allocation11 + $0x1c8] sm:$0xff]
    %v2992 = vld [vmem:[#allocation11 + $0x1d0] sm:$0xff]
    %v2993 = vld [vmem:[#allocation11 + $0x1d8] sm:$0xff]
    %v2994 = vld [vmem:[#allocation11 + $0x1e0] sm:$0xff]
    %v2995 = vld [vmem:[#allocation11 + $0x1e8] sm:$0xff]
    %v2996 = vld [vmem:[#allocation11 + $0x1f0] sm:$0xff]
    %v2997 = vld [vmem:[#allocation11 + $0x1f8] sm:$0xff]
    %v2998 = vld [vmem:[#allocation11 + $0x200] sm:$0xff]
    %v2999 = vld [vmem:[#allocation11 + $0x208] sm:$0xff]
    %v3000 = vld [vmem:[#allocation11 + $0x210] sm:$0xff]
    %v3001 = vld [vmem:[#allocation11 + $0x218] sm:$0xff]
    %v3002 = vld [vmem:[#allocation11 + $0x220] sm:$0xff]
    %v3003 = vld [vmem:[#allocation11 + $0x228] sm:$0xff]
    %v3004 = vld [vmem:[#allocation11 + $0x230] sm:$0xff]
    %v3005 = vld [vmem:[#allocation11 + $0x238] sm:$0xff]
    %v3006 = vld [vmem:[#allocation11 + $0x240] sm:$0xff]
    %v3007 = vld [vmem:[#allocation11 + $0x248] sm:$0xff]
    %v3008 = vld [vmem:[#allocation11 + $0x250] sm:$0xff]
    %v3009 = vld [vmem:[#allocation11 + $0x258] sm:$0xff]
    %v3010 = vld [vmem:[#allocation11 + $0x260] sm:$0xff]
    %v3011 = vld [vmem:[#allocation11 + $0x268] sm:$0xff]
    %v3012 = vld [vmem:[#allocation11 + $0x270] sm:$0xff]
    %v3013 = vld [vmem:[#allocation11 + $0x278] sm:$0xff]
    %v3014 = vld [vmem:[#allocation11 + $0x280] sm:$0xff]
    %v3015 = vld [vmem:[#allocation11 + $0x288] sm:$0xff]
    %v3016 = vld [vmem:[#allocation11 + $0x290] sm:$0xff]
    %v3017 = vld [vmem:[#allocation11 + $0x298] sm:$0xff]
    %v3018 = vld [vmem:[#allocation11 + $0x2a0] sm:$0xff]
    %v3019 = vld [vmem:[#allocation11 + $0x2a8] sm:$0xff]
    %v3020 = vld [vmem:[#allocation11 + $0x2b0] sm:$0xff]
    %v3021 = vld [vmem:[#allocation11 + $0x2b8] sm:$0xff]
    %v3022 = vld [vmem:[#allocation11 + $0x2c0] sm:$0xff]
    %v3023 = vld [vmem:[#allocation11 + $0x2c8] sm:$0xff]
    %v3024 = vld [vmem:[#allocation11 + $0x2d0] sm:$0xff]
    %v3025 = vld [vmem:[#allocation11 + $0x2d8] sm:$0xff]
    %v3026 = vld [vmem:[#allocation11 + $0x2e0] sm:$0xff]
    %v3027 = vld [vmem:[#allocation11 + $0x2e8] sm:$0xff]
    %v3028 = vld [vmem:[#allocation11 + $0x2f0] sm:$0xff]
    %v3029 = vld [vmem:[#allocation11 + $0x2f8] sm:$0xff]
    %v3030 = vld [vmem:[#allocation11 + $0x300] sm:$0xff]
    %v3031 = vld [vmem:[#allocation11 + $0x308] sm:$0xff]
    %v3032 = vld [vmem:[#allocation11 + $0x310] sm:$0xff]
    %v3033 = vld [vmem:[#allocation11 + $0x318] sm:$0xff]
    %v3034 = vld [vmem:[#allocation11 + $0x320] sm:$0xff]
    %v3035 = vld [vmem:[#allocation11 + $0x328] sm:$0xff]
    %v3036 = vld [vmem:[#allocation11 + $0x330] sm:$0xff]
    %v3037 = vld [vmem:[#allocation11 + $0x338] sm:$0xff]
    %v3038 = vld [vmem:[#allocation11 + $0x340] sm:$0xff]
    %v3039 = vld [vmem:[#allocation11 + $0x348] sm:$0xff]
    %v3040 = vld [vmem:[#allocation11 + $0x350] sm:$0xff]
    %v3041 = vld [vmem:[#allocation11 + $0x358] sm:$0xff]
    %v3042 = vld [vmem:[#allocation11 + $0x360] sm:$0xff]
    %v3043 = vld [vmem:[#allocation11 + $0x368] sm:$0xff]
    %v3044 = vld [vmem:[#allocation11 + $0x370] sm:$0xff]
    %v3045 = vld [vmem:[#allocation11 + $0x378] sm:$0xff]
    %v3046 = vld [vmem:[#allocation11 + $0x380] sm:$0xff]
    %v3047 = vld [vmem:[#allocation11 + $0x388] sm:$0xff]
    %v3048 = vld [vmem:[#allocation11 + $0x390] sm:$0xff]
    %v3049 = vld [vmem:[#allocation11 + $0x398] sm:$0xff]
    %v3050 = vld [vmem:[#allocation11 + $0x3a0] sm:$0xff]
    %v3051 = vld [vmem:[#allocation11 + $0x3a8] sm:$0xff]
    %v3052 = vld [vmem:[#allocation11 + $0x3b0] sm:$0xff]
    %v3053 = vld [vmem:[#allocation11 + $0x3b8] sm:$0xff]
    %v3054 = vld [vmem:[#allocation11 + $0x3c0] sm:$0xff]
    %v3055 = vld [vmem:[#allocation11 + $0x3c8] sm:$0xff]
    %v3056 = vld [vmem:[#allocation11 + $0x3d0] sm:$0xff]
    %v3057 = vld [vmem:[#allocation11 + $0x3d8] sm:$0xff]
    %v3058 = vld [vmem:[#allocation11 + $0x3e0] sm:$0xff]
    %v3059 = vld [vmem:[#allocation11 + $0x3e8] sm:$0xff]
    %v3060 = vld [vmem:[#allocation11 + $0x3f0] sm:$0xff]
    %v3061 = vld [vmem:[#allocation11 + $0x3f8] sm:$0xff]
    %v3190 = vunpack.c.l.b16 %v2934
    %v3191 = vunpack.c.h.b16 %v2934
    %v3192 = vunpack.c.l.b16 %v2935
    %v3193 = vunpack.c.h.b16 %v2935
    %v3194 = vunpack.c.l.b16 %v2936
    %v3195 = vunpack.c.h.b16 %v2936
    %v3196 = vunpack.c.l.b16 %v2937
    %v3197 = vunpack.c.h.b16 %v2937
    %v3198 = vunpack.c.l.b16 %v2938
    %v3199 = vunpack.c.h.b16 %v2938
    %v3200 = vunpack.c.l.b16 %v2939
    %v3201 = vunpack.c.h.b16 %v2939
    %v3202 = vunpack.c.l.b16 %v2940
    %v3203 = vunpack.c.h.b16 %v2940
    %v3204 = vunpack.c.l.b16 %v2941
    %v3205 = vunpack.c.h.b16 %v2941
    %v3206 = vunpack.c.l.b16 %v2942
    %v3207 = vunpack.c.h.b16 %v2942
    %v3208 = vunpack.c.l.b16 %v2943
    %v3209 = vunpack.c.h.b16 %v2943
    %v3210 = vunpack.c.l.b16 %v2944
    %v3211 = vunpack.c.h.b16 %v2944
    %v3212 = vunpack.c.l.b16 %v2945
    %v3213 = vunpack.c.h.b16 %v2945
    %v3214 = vunpack.c.l.b16 %v2946
    %v3215 = vunpack.c.h.b16 %v2946
    %v3216 = vunpack.c.l.b16 %v2947
    %v3217 = vunpack.c.h.b16 %v2947
    %v3218 = vunpack.c.l.b16 %v2948
    %v3219 = vunpack.c.h.b16 %v2948
    %v3220 = vunpack.c.l.b16 %v2949
    %v3221 = vunpack.c.h.b16 %v2949
    %v3222 = vunpack.c.l.b16 %v2950
    %v3223 = vunpack.c.h.b16 %v2950
    %v3224 = vunpack.c.l.b16 %v2951
    %v3225 = vunpack.c.h.b16 %v2951
    %v3226 = vunpack.c.l.b16 %v2952
    %v3227 = vunpack.c.h.b16 %v2952
    %v3228 = vunpack.c.l.b16 %v2953
    %v3229 = vunpack.c.h.b16 %v2953
    %v3230 = vunpack.c.l.b16 %v2954
    %v3231 = vunpack.c.h.b16 %v2954
    %v3232 = vunpack.c.l.b16 %v2955
    %v3233 = vunpack.c.h.b16 %v2955
    %v3234 = vunpack.c.l.b16 %v2956
    %v3235 = vunpack.c.h.b16 %v2956
    %v3236 = vunpack.c.l.b16 %v2957
    %v3237 = vunpack.c.h.b16 %v2957
    %v3238 = vunpack.c.l.b16 %v2958
    %v3239 = vunpack.c.h.b16 %v2958
    %v3240 = vunpack.c.l.b16 %v2959
    %v3241 = vunpack.c.h.b16 %v2959
    %v3242 = vunpack.c.l.b16 %v2960
    %v3243 = vunpack.c.h.b16 %v2960
    %v3244 = vunpack.c.l.b16 %v2961
    %v3245 = vunpack.c.h.b16 %v2961
    %v3246 = vunpack.c.l.b16 %v2962
    %v3247 = vunpack.c.h.b16 %v2962
    %v3248 = vunpack.c.l.b16 %v2963
    %v3249 = vunpack.c.h.b16 %v2963
    %v3250 = vunpack.c.l.b16 %v2964
    %v3251 = vunpack.c.h.b16 %v2964
    %v3252 = vunpack.c.l.b16 %v2965
    %v3253 = vunpack.c.h.b16 %v2965
    %v3254 = vunpack.c.l.b16 %v2966
    %v3255 = vunpack.c.h.b16 %v2966
    %v3256 = vunpack.c.l.b16 %v2967
    %v3257 = vunpack.c.h.b16 %v2967
    %v3258 = vunpack.c.l.b16 %v2968
    %v3259 = vunpack.c.h.b16 %v2968
    %v3260 = vunpack.c.l.b16 %v2969
    %v3261 = vunpack.c.h.b16 %v2969
    %v3262 = vunpack.c.l.b16 %v2970
    %v3263 = vunpack.c.h.b16 %v2970
    %v3264 = vunpack.c.l.b16 %v2971
    %v3265 = vunpack.c.h.b16 %v2971
    %v3266 = vunpack.c.l.b16 %v2972
    %v3267 = vunpack.c.h.b16 %v2972
    %v3268 = vunpack.c.l.b16 %v2973
    %v3269 = vunpack.c.h.b16 %v2973
    %v3270 = vunpack.c.l.b16 %v2974
    %v3271 = vunpack.c.h.b16 %v2974
    %v3272 = vunpack.c.l.b16 %v2975
    %v3273 = vunpack.c.h.b16 %v2975
    %v3274 = vunpack.c.l.b16 %v2976
    %v3275 = vunpack.c.h.b16 %v2976
    %v3276 = vunpack.c.l.b16 %v2977
    %v3277 = vunpack.c.h.b16 %v2977
    %v3278 = vunpack.c.l.b16 %v2978
    %v3279 = vunpack.c.h.b16 %v2978
    %v3280 = vunpack.c.l.b16 %v2979
    %v3281 = vunpack.c.h.b16 %v2979
    %v3282 = vunpack.c.l.b16 %v2980
    %v3283 = vunpack.c.h.b16 %v2980
    %v3284 = vunpack.c.l.b16 %v2981
    %v3285 = vunpack.c.h.b16 %v2981
    %v3286 = vunpack.c.l.b16 %v2982
    %v3287 = vunpack.c.h.b16 %v2982
    %v3288 = vunpack.c.l.b16 %v2983
    %v3289 = vunpack.c.h.b16 %v2983
    %v3290 = vunpack.c.l.b16 %v2984
    %v3291 = vunpack.c.h.b16 %v2984
    %v3292 = vunpack.c.l.b16 %v2985
    %v3293 = vunpack.c.h.b16 %v2985
    %v3294 = vunpack.c.l.b16 %v2986
    %v3295 = vunpack.c.h.b16 %v2986
    %v3296 = vunpack.c.l.b16 %v2987
    %v3297 = vunpack.c.h.b16 %v2987
    %v3298 = vunpack.c.l.b16 %v2988
    %v3299 = vunpack.c.h.b16 %v2988
    %v3300 = vunpack.c.l.b16 %v2989
    %v3301 = vunpack.c.h.b16 %v2989
    %v3302 = vunpack.c.l.b16 %v2990
    %v3303 = vunpack.c.h.b16 %v2990
    %v3304 = vunpack.c.l.b16 %v2991
    %v3305 = vunpack.c.h.b16 %v2991
    %v3306 = vunpack.c.l.b16 %v2992
    %v3307 = vunpack.c.h.b16 %v2992
    %v3308 = vunpack.c.l.b16 %v2993
    %v3309 = vunpack.c.h.b16 %v2993
    %v3310 = vunpack.c.l.b16 %v2994
    %v3311 = vunpack.c.h.b16 %v2994
    %v3312 = vunpack.c.l.b16 %v2995
    %v3313 = vunpack.c.h.b16 %v2995
    %v3314 = vunpack.c.l.b16 %v2996
    %v3315 = vunpack.c.h.b16 %v2996
    %v3316 = vunpack.c.l.b16 %v2997
    %v3317 = vunpack.c.h.b16 %v2997
    %v3318 = vunpack.c.l.b16 %v2998
    %v3319 = vunpack.c.h.b16 %v2998
    %v3320 = vunpack.c.l.b16 %v2999
    %v3321 = vunpack.c.h.b16 %v2999
    %v3322 = vunpack.c.l.b16 %v3000
    %v3323 = vunpack.c.h.b16 %v3000
    %v3324 = vunpack.c.l.b16 %v3001
    %v3325 = vunpack.c.h.b16 %v3001
    %v3326 = vunpack.c.l.b16 %v3002
    %v3327 = vunpack.c.h.b16 %v3002
    %v3328 = vunpack.c.l.b16 %v3003
    %v3329 = vunpack.c.h.b16 %v3003
    %v3330 = vunpack.c.l.b16 %v3004
    %v3331 = vunpack.c.h.b16 %v3004
    %v3332 = vunpack.c.l.b16 %v3005
    %v3333 = vunpack.c.h.b16 %v3005
    %v3334 = vunpack.c.l.b16 %v3006
    %v3335 = vunpack.c.h.b16 %v3006
    %v3336 = vunpack.c.l.b16 %v3007
    %v3337 = vunpack.c.h.b16 %v3007
    %v3338 = vunpack.c.l.b16 %v3008
    %v3339 = vunpack.c.h.b16 %v3008
    %v3340 = vunpack.c.l.b16 %v3009
    %v3341 = vunpack.c.h.b16 %v3009
    %v3342 = vunpack.c.l.b16 %v3010
    %v3343 = vunpack.c.h.b16 %v3010
    %v3344 = vunpack.c.l.b16 %v3011
    %v3345 = vunpack.c.h.b16 %v3011
    %v3346 = vunpack.c.l.b16 %v3012
    %v3347 = vunpack.c.h.b16 %v3012
    %v3348 = vunpack.c.l.b16 %v3013
    %v3349 = vunpack.c.h.b16 %v3013
    %v3350 = vunpack.c.l.b16 %v3014
    %v3351 = vunpack.c.h.b16 %v3014
    %v3352 = vunpack.c.l.b16 %v3015
    %v3353 = vunpack.c.h.b16 %v3015
    %v3354 = vunpack.c.l.b16 %v3016
    %v3355 = vunpack.c.h.b16 %v3016
    %v3356 = vunpack.c.l.b16 %v3017
    %v3357 = vunpack.c.h.b16 %v3017
    %v3358 = vunpack.c.l.b16 %v3018
    %v3359 = vunpack.c.h.b16 %v3018
    %v3360 = vunpack.c.l.b16 %v3019
    %v3361 = vunpack.c.h.b16 %v3019
    %v3362 = vunpack.c.l.b16 %v3020
    %v3363 = vunpack.c.h.b16 %v3020
    %v3364 = vunpack.c.l.b16 %v3021
    %v3365 = vunpack.c.h.b16 %v3021
    %v3366 = vunpack.c.l.b16 %v3022
    %v3367 = vunpack.c.h.b16 %v3022
    %v3368 = vunpack.c.l.b16 %v3023
    %v3369 = vunpack.c.h.b16 %v3023
    %v3370 = vunpack.c.l.b16 %v3024
    %v3371 = vunpack.c.h.b16 %v3024
    %v3372 = vunpack.c.l.b16 %v3025
    %v3373 = vunpack.c.h.b16 %v3025
    %v3374 = vunpack.c.l.b16 %v3026
    %v3375 = vunpack.c.h.b16 %v3026
    %v3376 = vunpack.c.l.b16 %v3027
    %v3377 = vunpack.c.h.b16 %v3027
    %v3378 = vunpack.c.l.b16 %v3028
    %v3379 = vunpack.c.h.b16 %v3028
    %v3380 = vunpack.c.l.b16 %v3029
    %v3381 = vunpack.c.h.b16 %v3029
    %v3382 = vunpack.c.l.b16 %v3030
    %v3383 = vunpack.c.h.b16 %v3030
    %v3384 = vunpack.c.l.b16 %v3031
    %v3385 = vunpack.c.h.b16 %v3031
    %v3386 = vunpack.c.l.b16 %v3032
    %v3387 = vunpack.c.h.b16 %v3032
    %v3388 = vunpack.c.l.b16 %v3033
    %v3389 = vunpack.c.h.b16 %v3033
    %v3390 = vunpack.c.l.b16 %v3034
    %v3391 = vunpack.c.h.b16 %v3034
    %v3392 = vunpack.c.l.b16 %v3035
    %v3393 = vunpack.c.h.b16 %v3035
    %v3394 = vunpack.c.l.b16 %v3036
    %v3395 = vunpack.c.h.b16 %v3036
    %v3396 = vunpack.c.l.b16 %v3037
    %v3397 = vunpack.c.h.b16 %v3037
    %v3398 = vunpack.c.l.b16 %v3038
    %v3399 = vunpack.c.h.b16 %v3038
    %v3400 = vunpack.c.l.b16 %v3039
    %v3401 = vunpack.c.h.b16 %v3039
    %v3402 = vunpack.c.l.b16 %v3040
    %v3403 = vunpack.c.h.b16 %v3040
    %v3404 = vunpack.c.l.b16 %v3041
    %v3405 = vunpack.c.h.b16 %v3041
    %v3406 = vunpack.c.l.b16 %v3042
    %v3407 = vunpack.c.h.b16 %v3042
    %v3408 = vunpack.c.l.b16 %v3043
    %v3409 = vunpack.c.h.b16 %v3043
    %v3410 = vunpack.c.l.b16 %v3044
    %v3411 = vunpack.c.h.b16 %v3044
    %v3412 = vunpack.c.l.b16 %v3045
    %v3413 = vunpack.c.h.b16 %v3045
    %v3414 = vunpack.c.l.b16 %v3046
    %v3415 = vunpack.c.h.b16 %v3046
    %v3416 = vunpack.c.l.b16 %v3047
    %v3417 = vunpack.c.h.b16 %v3047
    %v3418 = vunpack.c.l.b16 %v3048
    %v3419 = vunpack.c.h.b16 %v3048
    %v3420 = vunpack.c.l.b16 %v3049
    %v3421 = vunpack.c.h.b16 %v3049
    %v3422 = vunpack.c.l.b16 %v3050
    %v3423 = vunpack.c.h.b16 %v3050
    %v3424 = vunpack.c.l.b16 %v3051
    %v3425 = vunpack.c.h.b16 %v3051
    %v3426 = vunpack.c.l.b16 %v3052
    %v3427 = vunpack.c.h.b16 %v3052
    %v3428 = vunpack.c.l.b16 %v3053
    %v3429 = vunpack.c.h.b16 %v3053
    %v3430 = vunpack.c.l.b16 %v3054
    %v3431 = vunpack.c.h.b16 %v3054
    %v3432 = vunpack.c.l.b16 %v3055
    %v3433 = vunpack.c.h.b16 %v3055
    %v3434 = vunpack.c.l.b16 %v3056
    %v3435 = vunpack.c.h.b16 %v3056
    %v3436 = vunpack.c.l.b16 %v3057
    %v3437 = vunpack.c.h.b16 %v3057
    %v3438 = vunpack.c.l.b16 %v3058
    %v3439 = vunpack.c.h.b16 %v3058
    %v3440 = vunpack.c.l.b16 %v3059
    %v3441 = vunpack.c.h.b16 %v3059
    %v3442 = vunpack.c.l.b16 %v3060
    %v3443 = vunpack.c.h.b16 %v3060
    %v3444 = vunpack.c.l.b16 %v3061
    %v3445 = vunpack.c.h.b16 %v3061
    %v3446 = vpack.c.b16 %v3198, %v3190
    %v3447 = vpack.c.b16 %v3199, %v3191
    %v3448 = vpack.c.b16 %v3200, %v3192
    %v3449 = vpack.c.b16 %v3201, %v3193
    %v3450 = vpack.c.b16 %v3202, %v3194
    %v3451 = vpack.c.b16 %v3203, %v3195
    %v3452 = vpack.c.b16 %v3204, %v3196
    %v3453 = vpack.c.b16 %v3205, %v3197
    %v3454 = vpack.c.b16 %v3214, %v3206
    %v3455 = vpack.c.b16 %v3215, %v3207
    %v3456 = vpack.c.b16 %v3216, %v3208
    %v3457 = vpack.c.b16 %v3217, %v3209
    %v3458 = vpack.c.b16 %v3218, %v3210
    %v3459 = vpack.c.b16 %v3219, %v3211
    %v3460 = vpack.c.b16 %v3220, %v3212
    %v3461 = vpack.c.b16 %v3221, %v3213
    %v3462 = vpack.c.b16 %v3230, %v3222
    %v3463 = vpack.c.b16 %v3231, %v3223
    %v3464 = vpack.c.b16 %v3232, %v3224
    %v3465 = vpack.c.b16 %v3233, %v3225
    %v3466 = vpack.c.b16 %v3234, %v3226
    %v3467 = vpack.c.b16 %v3235, %v3227
    %v3468 = vpack.c.b16 %v3236, %v3228
    %v3469 = vpack.c.b16 %v3237, %v3229
    %v3470 = vpack.c.b16 %v3246, %v3238
    %v3471 = vpack.c.b16 %v3247, %v3239
    %v3472 = vpack.c.b16 %v3248, %v3240
    %v3473 = vpack.c.b16 %v3249, %v3241
    %v3474 = vpack.c.b16 %v3250, %v3242
    %v3475 = vpack.c.b16 %v3251, %v3243
    %v3476 = vpack.c.b16 %v3252, %v3244
    %v3477 = vpack.c.b16 %v3253, %v3245
    %v3478 = vpack.c.b16 %v3262, %v3254
    %v3479 = vpack.c.b16 %v3263, %v3255
    %v3480 = vpack.c.b16 %v3264, %v3256
    %v3481 = vpack.c.b16 %v3265, %v3257
    %v3482 = vpack.c.b16 %v3266, %v3258
    %v3483 = vpack.c.b16 %v3267, %v3259
    %v3484 = vpack.c.b16 %v3268, %v3260
    %v3485 = vpack.c.b16 %v3269, %v3261
    %v3486 = vpack.c.b16 %v3278, %v3270
    %v3487 = vpack.c.b16 %v3279, %v3271
    %v3488 = vpack.c.b16 %v3280, %v3272
    %v3489 = vpack.c.b16 %v3281, %v3273
    %v3490 = vpack.c.b16 %v3282, %v3274
    %v3491 = vpack.c.b16 %v3283, %v3275
    %v3492 = vpack.c.b16 %v3284, %v3276
    %v3493 = vpack.c.b16 %v3285, %v3277
    %v3494 = vpack.c.b16 %v3294, %v3286
    %v3495 = vpack.c.b16 %v3295, %v3287
    %v3496 = vpack.c.b16 %v3296, %v3288
    %v3497 = vpack.c.b16 %v3297, %v3289
    %v3498 = vpack.c.b16 %v3298, %v3290
    %v3499 = vpack.c.b16 %v3299, %v3291
    %v3500 = vpack.c.b16 %v3300, %v3292
    %v3501 = vpack.c.b16 %v3301, %v3293
    %v3502 = vpack.c.b16 %v3310, %v3302
    %v3503 = vpack.c.b16 %v3311, %v3303
    %v3504 = vpack.c.b16 %v3312, %v3304
    %v3505 = vpack.c.b16 %v3313, %v3305
    %v3506 = vpack.c.b16 %v3314, %v3306
    %v3507 = vpack.c.b16 %v3315, %v3307
    %v3508 = vpack.c.b16 %v3316, %v3308
    %v3509 = vpack.c.b16 %v3317, %v3309
    %v3510 = vpack.c.b16 %v3326, %v3318
    %v3511 = vpack.c.b16 %v3327, %v3319
    %v3512 = vpack.c.b16 %v3328, %v3320
    %v3513 = vpack.c.b16 %v3329, %v3321
    %v3514 = vpack.c.b16 %v3330, %v3322
    %v3515 = vpack.c.b16 %v3331, %v3323
    %v3516 = vpack.c.b16 %v3332, %v3324
    %v3517 = vpack.c.b16 %v3333, %v3325
    %v3518 = vpack.c.b16 %v3342, %v3334
    %v3519 = vpack.c.b16 %v3343, %v3335
    %v3520 = vpack.c.b16 %v3344, %v3336
    %v3521 = vpack.c.b16 %v3345, %v3337
    %v3522 = vpack.c.b16 %v3346, %v3338
    %v3523 = vpack.c.b16 %v3347, %v3339
    %v3524 = vpack.c.b16 %v3348, %v3340
    %v3525 = vpack.c.b16 %v3349, %v3341
    %v3526 = vpack.c.b16 %v3358, %v3350
    %v3527 = vpack.c.b16 %v3359, %v3351
    %v3528 = vpack.c.b16 %v3360, %v3352
    %v3529 = vpack.c.b16 %v3361, %v3353
    %v3530 = vpack.c.b16 %v3362, %v3354
    %v3531 = vpack.c.b16 %v3363, %v3355
    %v3532 = vpack.c.b16 %v3364, %v3356
    %v3533 = vpack.c.b16 %v3365, %v3357
    %v3534 = vpack.c.b16 %v3374, %v3366
    %v3535 = vpack.c.b16 %v3375, %v3367
    %v3536 = vpack.c.b16 %v3376, %v3368
    %v3537 = vpack.c.b16 %v3377, %v3369
    %v3538 = vpack.c.b16 %v3378, %v3370
    %v3539 = vpack.c.b16 %v3379, %v3371
    %v3540 = vpack.c.b16 %v3380, %v3372
    %v3541 = vpack.c.b16 %v3381, %v3373
    %v3542 = vpack.c.b16 %v3390, %v3382
    %v3543 = vpack.c.b16 %v3391, %v3383
    %v3544 = vpack.c.b16 %v3392, %v3384
    %v3545 = vpack.c.b16 %v3393, %v3385
    %v3546 = vpack.c.b16 %v3394, %v3386
    %v3547 = vpack.c.b16 %v3395, %v3387
    %v3548 = vpack.c.b16 %v3396, %v3388
    %v3549 = vpack.c.b16 %v3397, %v3389
    %v3550 = vpack.c.b16 %v3406, %v3398
    %v3551 = vpack.c.b16 %v3407, %v3399
    %v3552 = vpack.c.b16 %v3408, %v3400
    %v3553 = vpack.c.b16 %v3409, %v3401
    %v3554 = vpack.c.b16 %v3410, %v3402
    %v3555 = vpack.c.b16 %v3411, %v3403
    %v3556 = vpack.c.b16 %v3412, %v3404
    %v3557 = vpack.c.b16 %v3413, %v3405
    %v3558 = vpack.c.b16 %v3422, %v3414
    %v3559 = vpack.c.b16 %v3423, %v3415
    %v3560 = vpack.c.b16 %v3424, %v3416
    %v3561 = vpack.c.b16 %v3425, %v3417
    %v3562 = vpack.c.b16 %v3426, %v3418
    %v3563 = vpack.c.b16 %v3427, %v3419
    %v3564 = vpack.c.b16 %v3428, %v3420
    %v3565 = vpack.c.b16 %v3429, %v3421
    %v3566 = vpack.c.b16 %v3438, %v3430
    %v3567 = vpack.c.b16 %v3439, %v3431
    %v3568 = vpack.c.b16 %v3440, %v3432
    %v3569 = vpack.c.b16 %v3441, %v3433
    %v3570 = vpack.c.b16 %v3442, %v3434
    %v3571 = vpack.c.b16 %v3443, %v3435
    %v3572 = vpack.c.b16 %v3444, %v3436
    %v3573 = vpack.c.b16 %v3445, %v3437
    %3702 = vmatprep.subr.bf16.mxu0 %v3447
    %3703 = vmatpush1.bf16.msra.mxu0 %v3446
    %3704 = vmatprep.subr.bf16.mxu0 %v3455
    %3705 = vmatpush1.bf16.msra.mxu0 %v3454
    %3706 = vmatprep.subr.bf16.mxu0 %v3463
    %3707 = vmatpush1.bf16.msra.mxu0 %v3462
    %3708 = vmatprep.subr.bf16.mxu0 %v3471
    %3709 = vmatpush1.bf16.msra.mxu0 %v3470
    %3710 = vmatprep.subr.bf16.mxu0 %v3479
    %3711 = vmatpush1.bf16.msra.mxu0 %v3478
    %3712 = vmatprep.subr.bf16.mxu0 %v3487
    %3713 = vmatpush1.bf16.msra.mxu0 %v3486
    %3714 = vmatprep.subr.bf16.mxu0 %v3495
    %3715 = vmatpush1.bf16.msra.mxu0 %v3494
    %3716 = vmatprep.subr.bf16.mxu0 %v3503
    %3717 = vmatpush1.bf16.msra.mxu0 %v3502
    %3718 = vmatprep.subr.bf16.mxu0 %v3511
    %3719 = vmatpush1.bf16.msra.mxu0 %v3510
    %3720 = vmatprep.subr.bf16.mxu0 %v3519
    %3721 = vmatpush1.bf16.msra.mxu0 %v3518
    %3722 = vmatprep.subr.bf16.mxu0 %v3527
    %3723 = vmatpush1.bf16.msra.mxu0 %v3526
    %3724 = vmatprep.subr.bf16.mxu0 %v3535
    %3725 = vmatpush1.bf16.msra.mxu0 %v3534
    %3726 = vmatprep.subr.bf16.mxu0 %v3543
    %3727 = vmatpush1.bf16.msra.mxu0 %v3542
    %3728 = vmatprep.subr.bf16.mxu0 %v3551
    %3729 = vmatpush1.bf16.msra.mxu0 %v3550
    %3730 = vmatprep.subr.bf16.mxu0 %v3559
    %3731 = vmatpush1.bf16.msra.mxu0 %v3558
    %3732 = vmatprep.subr.bf16.mxu0 %v3567
    %3733 = vmatpush1.bf16.msra.mxu0 %v3566
    %3734 = vmatprep.mubr.bf16.mxu0 %v2933
    %3735 = vmatmul.mubr.bf16.gmra.mrb[0].mxu0 %v2932
    %v3736 = vpop.f32.mrb[0].mxu0
    %v3737 = vadd.f32 0.0, %v3736
    %v3738 = vpop.f32.mrb[0].mxu0
    %v3739 = vadd.f32 0.0, %v3738
    %v3740 = vpop.f32.mrb[0].mxu0
    %v3741 = vadd.f32 0.0, %v3740
    %v3742 = vpop.f32.mrb[0].mxu0
    %v3743 = vadd.f32 0.0, %v3742
    %3744 = vdwg.mxu0
    %3745 = vmatprep.subr.bf16.mxu0 %v3449
    %3746 = vmatpush1.bf16.msra.mxu0 %v3448
    %3747 = vmatprep.subr.bf16.mxu0 %v3457
    %3748 = vmatpush1.bf16.msra.mxu0 %v3456
    %3749 = vmatprep.subr.bf16.mxu0 %v3465
    %3750 = vmatpush1.bf16.msra.mxu0 %v3464
    %3751 = vmatprep.subr.bf16.mxu0 %v3473
    %3752 = vmatpush1.bf16.msra.mxu0 %v3472
    %3753 = vmatprep.subr.bf16.mxu0 %v3481
    %3754 = vmatpush1.bf16.msra.mxu0 %v3480
    %3755 = vmatprep.subr.bf16.mxu0 %v3489
    %3756 = vmatpush1.bf16.msra.mxu0 %v3488
    %3757 = vmatprep.subr.bf16.mxu0 %v3497
    %3758 = vmatpush1.bf16.msra.mxu0 %v3496
    %3759 = vmatprep.subr.bf16.mxu0 %v3505
    %3760 = vmatpush1.bf16.msra.mxu0 %v3504
    %3761 = vmatprep.subr.bf16.mxu0 %v3513
    %3762 = vmatpush1.bf16.msra.mxu0 %v3512
    %3763 = vmatprep.subr.bf16.mxu0 %v3521
    %3764 = vmatpush1.bf16.msra.mxu0 %v3520
    %3765 = vmatprep.subr.bf16.mxu0 %v3529
    %3766 = vmatpush1.bf16.msra.mxu0 %v3528
    %3767 = vmatprep.subr.bf16.mxu0 %v3537
    %3768 = vmatpush1.bf16.msra.mxu0 %v3536
    %3769 = vmatprep.subr.bf16.mxu0 %v3545
    %3770 = vmatpush1.bf16.msra.mxu0 %v3544
    %3771 = vmatprep.subr.bf16.mxu0 %v3553
    %3772 = vmatpush1.bf16.msra.mxu0 %v3552
    %3773 = vmatprep.subr.bf16.mxu0 %v3561
    %3774 = vmatpush1.bf16.msra.mxu0 %v3560
    %3775 = vmatprep.subr.bf16.mxu0 %v3569
    %3776 = vmatpush1.bf16.msra.mxu0 %v3568
    %3777 = vmatprep.mubr.bf16.mxu0 %v2933
    %3778 = vmatmul.mubr.bf16.gmra.mrb[0].mxu0 %v2932
    %v3779 = vpop.f32.mrb[0].mxu0
    %v3780 = vadd.f32 0.0, %v3779
    %v3781 = vpop.f32.mrb[0].mxu0
    %v3782 = vadd.f32 0.0, %v3781
    %v3783 = vpop.f32.mrb[0].mxu0
    %v3784 = vadd.f32 0.0, %v3783
    %v3785 = vpop.f32.mrb[0].mxu0
    %v3786 = vadd.f32 0.0, %v3785
    %3787 = vdwg.mxu0
    %3788 = vmatprep.subr.bf16.mxu0 %v3451
    %3789 = vmatpush1.bf16.msra.mxu0 %v3450
    %3790 = vmatprep.subr.bf16.mxu0 %v3459
    %3791 = vmatpush1.bf16.msra.mxu0 %v3458
    %3792 = vmatprep.subr.bf16.mxu0 %v3467
    %3793 = vmatpush1.bf16.msra.mxu0 %v3466
    %3794 = vmatprep.subr.bf16.mxu0 %v3475
    %3795 = vmatpush1.bf16.msra.mxu0 %v3474
    %3796 = vmatprep.subr.bf16.mxu0 %v3483
    %3797 = vmatpush1.bf16.msra.mxu0 %v3482
    %3798 = vmatprep.subr.bf16.mxu0 %v3491
    %3799 = vmatpush1.bf16.msra.mxu0 %v3490
    %3800 = vmatprep.subr.bf16.mxu0 %v3499
    %3801 = vmatpush1.bf16.msra.mxu0 %v3498
    %3802 = vmatprep.subr.bf16.mxu0 %v3507
    %3803 = vmatpush1.bf16.msra.mxu0 %v3506
    %3804 = vmatprep.subr.bf16.mxu0 %v3515
    %3805 = vmatpush1.bf16.msra.mxu0 %v3514
    %3806 = vmatprep.subr.bf16.mxu0 %v3523
    %3807 = vmatpush1.bf16.msra.mxu0 %v3522
    %3808 = vmatprep.subr.bf16.mxu0 %v3531
    %3809 = vmatpush1.bf16.msra.mxu0 %v3530
    %3810 = vmatprep.subr.bf16.mxu0 %v3539
    %3811 = vmatpush1.bf16.msra.mxu0 %v3538
    %3812 = vmatprep.subr.bf16.mxu0 %v3547
    %3813 = vmatpush1.bf16.msra.mxu0 %v3546
    %3814 = vmatprep.subr.bf16.mxu0 %v3555
    %3815 = vmatpush1.bf16.msra.mxu0 %v3554
    %3816 = vmatprep.subr.bf16.mxu0 %v3563
    %3817 = vmatpush1.bf16.msra.mxu0 %v3562
    %3818 = vmatprep.subr.bf16.mxu0 %v3571
    %3819 = vmatpush1.bf16.msra.mxu0 %v3570
    %3820 = vmatprep.mubr.bf16.mxu0 %v2933
    %3821 = vmatmul.mubr.bf16.gmra.mrb[0].mxu0 %v2932
    %v3822 = vpop.f32.mrb[0].mxu0
    %v3823 = vadd.f32 0.0, %v3822
    %v3824 = vpop.f32.mrb[0].mxu0
    %v3825 = vadd.f32 0.0, %v3824
    %v3826 = vpop.f32.mrb[0].mxu0
    %v3827 = vadd.f32 0.0, %v3826
    %v3828 = vpop.f32.mrb[0].mxu0
    %v3829 = vadd.f32 0.0, %v3828
    %3830 = vdwg.mxu0
    %3831 = vmatprep.subr.bf16.mxu0 %v3453
    %3832 = vmatpush1.bf16.msra.mxu0 %v3452
    %3833 = vmatprep.subr.bf16.mxu0 %v3461
    %3834 = vmatpush1.bf16.msra.mxu0 %v3460
    %3835 = vmatprep.subr.bf16.mxu0 %v3469
    %3836 = vmatpush1.bf16.msra.mxu0 %v3468
    %3837 = vmatprep.subr.bf16.mxu0 %v3477
    %3838 = vmatpush1.bf16.msra.mxu0 %v3476
    %3839 = vmatprep.subr.bf16.mxu0 %v3485
    %3840 = vmatpush1.bf16.msra.mxu0 %v3484
    %3841 = vmatprep.subr.bf16.mxu0 %v3493
    %3842 = vmatpush1.bf16.msra.mxu0 %v3492
    %3843 = vmatprep.subr.bf16.mxu0 %v3501
    %3844 = vmatpush1.bf16.msra.mxu0 %v3500
    %3845 = vmatprep.subr.bf16.mxu0 %v3509
    %3846 = vmatpush1.bf16.msra.mxu0 %v3508
    %3847 = vmatprep.subr.bf16.mxu0 %v3517
    %3848 = vmatpush1.bf16.msra.mxu0 %v3516
    %3849 = vmatprep.subr.bf16.mxu0 %v3525
    %3850 = vmatpush1.bf16.msra.mxu0 %v3524
    %3851 = vmatprep.subr.bf16.mxu0 %v3533
    %3852 = vmatpush1.bf16.msra.mxu0 %v3532
    %3853 = vmatprep.subr.bf16.mxu0 %v3541
    %3854 = vmatpush1.bf16.msra.mxu0 %v3540
    %3855 = vmatprep.subr.bf16.mxu0 %v3549
    %3856 = vmatpush1.bf16.msra.mxu0 %v3548
    %3857 = vmatprep.subr.bf16.mxu0 %v3557
    %3858 = vmatpush1.bf16.msra.mxu0 %v3556
    %3859 = vmatprep.subr.bf16.mxu0 %v3565
    %3860 = vmatpush1.bf16.msra.mxu0 %v3564
    %3861 = vmatprep.subr.bf16.mxu0 %v3573
    %3862 = vmatpush1.bf16.msra.mxu0 %v3572
    %3863 = vmatprep.mubr.bf16.mxu0 %v2933
    %3864 = vmatmul.mubr.bf16.gmra.mrb[0].mxu0 %v2932
    %v3865 = vpop.f32.mrb[0].mxu0
    %v3866 = vadd.f32 0.0, %v3865
    %v3867 = vpop.f32.mrb[0].mxu0
    %v3868 = vadd.f32 0.0, %v3867
    %v3869 = vpop.f32.mrb[0].mxu0
    %v3870 = vadd.f32 0.0, %v3869
    %v3871 = vpop.f32.mrb[0].mxu0
    %v3872 = vadd.f32 0.0, %v3871
    %3873 = vdwg.mxu0
    %v3874 = vxor.u32 %v3737, 2147483648
    %v3875 = vxor.u32 %v3739, 2147483648
    %v3876 = vxor.u32 %v3780, 2147483648
    %v3877 = vxor.u32 %v3782, 2147483648
    %v3878 = vxor.u32 %v3741, 2147483648
    %v3879 = vxor.u32 %v3743, 2147483648
    %v3880 = vxor.u32 %v3784, 2147483648
    %v3881 = vxor.u32 %v3786, 2147483648
    %v3882 = vmul.f32 %v3874, 1.442695
    %v3883 = vpow.pop %v3882
    %v3884 = vmul.f32 %v3875, 1.442695
    %v3885 = vpow.pop %v3884
    %v3886 = vmul.f32 %v3876, 1.442695
    %v3887 = vpow.pop %v3886
    %v3888 = vmul.f32 %v3877, 1.442695
    %v3889 = vpow.pop %v3888
    %v3890 = vmul.f32 %v3878, 1.442695
    %v3891 = vpow.pop %v3890
    %v3892 = vmul.f32 %v3879, 1.442695
    %v3893 = vpow.pop %v3892
    %v3894 = vmul.f32 %v3880, 1.442695
    %v3895 = vpow.pop %v3894
    %v3896 = vmul.f32 %v3881, 1.442695
    %v3897 = vpow.pop %v3896
    %v3898 = vadd.f32 %v3883, 1.0
    %v3899 = vadd.f32 %v3885, 1.0
    %v3900 = vadd.f32 %v3887, 1.0
    %v3901 = vadd.f32 %v3889, 1.0
    %v3902 = vadd.f32 %v3891, 1.0
    %v3903 = vadd.f32 %v3893, 1.0
    %v3904 = vadd.f32 %v3895, 1.0
    %v3905 = vadd.f32 %v3897, 1.0
    %v3906 = vrcp.pop %v3898
    %v3907 = vmul.f32 1.0, %v3906
    %v3908 = vrcp.pop %v3899
    %v3909 = vmul.f32 1.0, %v3908
    %v3910 = vrcp.pop %v3900
    %v3911 = vmul.f32 1.0, %v3910
    %v3912 = vrcp.pop %v3901
    %v3913 = vmul.f32 1.0, %v3912
    %v3914 = vrcp.pop %v3902
    %v3915 = vmul.f32 1.0, %v3914
    %v3916 = vrcp.pop %v3903
    %v3917 = vmul.f32 1.0, %v3916
    %v3918 = vrcp.pop %v3904
    %v3919 = vmul.f32 1.0, %v3918
    %v3920 = vrcp.pop %v3905
    %v3921 = vmul.f32 1.0, %v3920
    %v3922 = vmul.f32 %v3737, %v3907
    %v3923 = vmul.f32 %v3739, %v3909
    %v3924 = vmul.f32 %v3780, %v3911
    %v3925 = vmul.f32 %v3782, %v3913
    %v3926 = vmul.f32 %v3741, %v3915
    %v3927 = vmul.f32 %v3743, %v3917
    %v3928 = vmul.f32 %v3784, %v3919
    %v3929 = vmul.f32 %v3786, %v3921
    %v3930 = vmul.f32 %v3922, %v3823
    %v3931 = vmul.f32 %v3923, %v3825
    %v3932 = vmul.f32 %v3924, %v3866
    %v3933 = vmul.f32 %v3925, %v3868
    %v3934 = vmul.f32 %v3926, %v3827
    %v3935 = vmul.f32 %v3927, %v3829
    %v3936 = vmul.f32 %v3928, %v3870
    %v3937 = vmul.f32 %v3929, %v3872
    %v3938 = vpack.c.bf16 %v3934, %v3930
    %v3939 = vpack.c.bf16 %v3935, %v3931
    %v3940 = vpack.c.bf16 %v3936, %v3932
    %v3941 = vpack.c.bf16 %v3937, %v3933
    %v3942 = vld [vmem:[#allocation13] sm:$0xff]
    %v3943 = vld [vmem:[#allocation13 + $0x8] sm:$0xff]
    %v3944 = vld [vmem:[#allocation13 + $0x10] sm:$0xff]
    %v3945 = vld [vmem:[#allocation13 + $0x18] sm:$0xff]
    %v3946 = vld [vmem:[#allocation13 + $0x20] sm:$0xff]
    %v3947 = vld [vmem:[#allocation13 + $0x28] sm:$0xff]
    %v3948 = vld [vmem:[#allocation13 + $0x30] sm:$0xff]
    %v3949 = vld [vmem:[#allocation13 + $0x38] sm:$0xff]
    %v3950 = vld [vmem:[#allocation13 + $0x40] sm:$0xff]
    %v3951 = vld [vmem:[#allocation13 + $0x48] sm:$0xff]
    %v3952 = vld [vmem:[#allocation13 + $0x50] sm:$0xff]
    %v3953 = vld [vmem:[#allocation13 + $0x58] sm:$0xff]
    %v3954 = vld [vmem:[#allocation13 + $0x60] sm:$0xff]
    %v3955 = vld [vmem:[#allocation13 + $0x68] sm:$0xff]
    %v3956 = vld [vmem:[#allocation13 + $0x70] sm:$0xff]
    %v3957 = vld [vmem:[#allocation13 + $0x78] sm:$0xff]
    %v3958 = vld [vmem:[#allocation13 + $0x80] sm:$0xff]
    %v3959 = vld [vmem:[#allocation13 + $0x88] sm:$0xff]
    %v3960 = vld [vmem:[#allocation13 + $0x90] sm:$0xff]
    %v3961 = vld [vmem:[#allocation13 + $0x98] sm:$0xff]
    %v3962 = vld [vmem:[#allocation13 + $0xa0] sm:$0xff]
    %v3963 = vld [vmem:[#allocation13 + $0xa8] sm:$0xff]
    %v3964 = vld [vmem:[#allocation13 + $0xb0] sm:$0xff]
    %v3965 = vld [vmem:[#allocation13 + $0xb8] sm:$0xff]
    %v3966 = vld [vmem:[#allocation13 + $0xc0] sm:$0xff]
    %v3967 = vld [vmem:[#allocation13 + $0xc8] sm:$0xff]
    %v3968 = vld [vmem:[#allocation13 + $0xd0] sm:$0xff]
    %v3969 = vld [vmem:[#allocation13 + $0xd8] sm:$0xff]
    %v3970 = vld [vmem:[#allocation13 + $0xe0] sm:$0xff]
    %v3971 = vld [vmem:[#allocation13 + $0xe8] sm:$0xff]
    %v3972 = vld [vmem:[#allocation13 + $0xf0] sm:$0xff]
    %v3973 = vld [vmem:[#allocation13 + $0xf8] sm:$0xff]
    %v3974 = vld [vmem:[#allocation13 + $0x100] sm:$0xff]
    %v3975 = vld [vmem:[#allocation13 + $0x108] sm:$0xff]
    %v3976 = vld [vmem:[#allocation13 + $0x110] sm:$0xff]
    %v3977 = vld [vmem:[#allocation13 + $0x118] sm:$0xff]
    %v3978 = vld [vmem:[#allocation13 + $0x120] sm:$0xff]
    %v3979 = vld [vmem:[#allocation13 + $0x128] sm:$0xff]
    %v3980 = vld [vmem:[#allocation13 + $0x130] sm:$0xff]
    %v3981 = vld [vmem:[#allocation13 + $0x138] sm:$0xff]
    %v3982 = vld [vmem:[#allocation13 + $0x140] sm:$0xff]
    %v3983 = vld [vmem:[#allocation13 + $0x148] sm:$0xff]
    %v3984 = vld [vmem:[#allocation13 + $0x150] sm:$0xff]
    %v3985 = vld [vmem:[#allocation13 + $0x158] sm:$0xff]
    %v3986 = vld [vmem:[#allocation13 + $0x160] sm:$0xff]
    %v3987 = vld [vmem:[#allocation13 + $0x168] sm:$0xff]
    %v3988 = vld [vmem:[#allocation13 + $0x170] sm:$0xff]
    %v3989 = vld [vmem:[#allocation13 + $0x178] sm:$0xff]
    %v3990 = vld [vmem:[#allocation13 + $0x180] sm:$0xff]
    %v3991 = vld [vmem:[#allocation13 + $0x188] sm:$0xff]
    %v3992 = vld [vmem:[#allocation13 + $0x190] sm:$0xff]
    %v3993 = vld [vmem:[#allocation13 + $0x198] sm:$0xff]
    %v3994 = vld [vmem:[#allocation13 + $0x1a0] sm:$0xff]
    %v3995 = vld [vmem:[#allocation13 + $0x1a8] sm:$0xff]
    %v3996 = vld [vmem:[#allocation13 + $0x1b0] sm:$0xff]
    %v3997 = vld [vmem:[#allocation13 + $0x1b8] sm:$0xff]
    %v3998 = vld [vmem:[#allocation13 + $0x1c0] sm:$0xff]
    %v3999 = vld [vmem:[#allocation13 + $0x1c8] sm:$0xff]
    %v4000 = vld [vmem:[#allocation13 + $0x1d0] sm:$0xff]
    %v4001 = vld [vmem:[#allocation13 + $0x1d8] sm:$0xff]
    %v4002 = vld [vmem:[#allocation13 + $0x1e0] sm:$0xff]
    %v4003 = vld [vmem:[#allocation13 + $0x1e8] sm:$0xff]
    %v4004 = vld [vmem:[#allocation13 + $0x1f0] sm:$0xff]
    %v4005 = vld [vmem:[#allocation13 + $0x1f8] sm:$0xff]
    %v4070 = vunpack.c.l.b16 %v3942
    %v4071 = vunpack.c.h.b16 %v3942
    %v4072 = vunpack.c.l.b16 %v3943
    %v4073 = vunpack.c.h.b16 %v3943
    %v4074 = vunpack.c.l.b16 %v3944
    %v4075 = vunpack.c.h.b16 %v3944
    %v4076 = vunpack.c.l.b16 %v3945
    %v4077 = vunpack.c.h.b16 %v3945
    %v4078 = vunpack.c.l.b16 %v3946
    %v4079 = vunpack.c.h.b16 %v3946
    %v4080 = vunpack.c.l.b16 %v3947
    %v4081 = vunpack.c.h.b16 %v3947
    %v4082 = vunpack.c.l.b16 %v3948
    %v4083 = vunpack.c.h.b16 %v3948
    %v4084 = vunpack.c.l.b16 %v3949
    %v4085 = vunpack.c.h.b16 %v3949
    %v4086 = vunpack.c.l.b16 %v3950
    %v4087 = vunpack.c.h.b16 %v3950
    %v4088 = vunpack.c.l.b16 %v3951
    %v4089 = vunpack.c.h.b16 %v3951
    %v4090 = vunpack.c.l.b16 %v3952
    %v4091 = vunpack.c.h.b16 %v3952
    %v4092 = vunpack.c.l.b16 %v3953
    %v4093 = vunpack.c.h.b16 %v3953
    %v4094 = vunpack.c.l.b16 %v3954
    %v4095 = vunpack.c.h.b16 %v3954
    %v4096 = vunpack.c.l.b16 %v3955
    %v4097 = vunpack.c.h.b16 %v3955
    %v4098 = vunpack.c.l.b16 %v3956
    %v4099 = vunpack.c.h.b16 %v3956
    %v4100 = vunpack.c.l.b16 %v3957
    %v4101 = vunpack.c.h.b16 %v3957
    %v4102 = vunpack.c.l.b16 %v3958
    %v4103 = vunpack.c.h.b16 %v3958
    %v4104 = vunpack.c.l.b16 %v3959
    %v4105 = vunpack.c.h.b16 %v3959
    %v4106 = vunpack.c.l.b16 %v3960
    %v4107 = vunpack.c.h.b16 %v3960
    %v4108 = vunpack.c.l.b16 %v3961
    %v4109 = vunpack.c.h.b16 %v3961
    %v4110 = vunpack.c.l.b16 %v3962
    %v4111 = vunpack.c.h.b16 %v3962
    %v4112 = vunpack.c.l.b16 %v3963
    %v4113 = vunpack.c.h.b16 %v3963
    %v4114 = vunpack.c.l.b16 %v3964
    %v4115 = vunpack.c.h.b16 %v3964
    %v4116 = vunpack.c.l.b16 %v3965
    %v4117 = vunpack.c.h.b16 %v3965
    %v4118 = vunpack.c.l.b16 %v3966
    %v4119 = vunpack.c.h.b16 %v3966
    %v4120 = vunpack.c.l.b16 %v3967
    %v4121 = vunpack.c.h.b16 %v3967
    %v4122 = vunpack.c.l.b16 %v3968
    %v4123 = vunpack.c.h.b16 %v3968
    %v4124 = vunpack.c.l.b16 %v3969
    %v4125 = vunpack.c.h.b16 %v3969
    %v4126 = vunpack.c.l.b16 %v3970
    %v4127 = vunpack.c.h.b16 %v3970
    %v4128 = vunpack.c.l.b16 %v3971
    %v4129 = vunpack.c.h.b16 %v3971
    %v4130 = vunpack.c.l.b16 %v3972
    %v4131 = vunpack.c.h.b16 %v3972
    %v4132 = vunpack.c.l.b16 %v3973
    %v4133 = vunpack.c.h.b16 %v3973
    %v4134 = vunpack.c.l.b16 %v3974
    %v4135 = vunpack.c.h.b16 %v3974
    %v4136 = vunpack.c.l.b16 %v3975
    %v4137 = vunpack.c.h.b16 %v3975
    %v4138 = vunpack.c.l.b16 %v3976
    %v4139 = vunpack.c.h.b16 %v3976
    %v4140 = vunpack.c.l.b16 %v3977
    %v4141 = vunpack.c.h.b16 %v3977
    %v4142 = vunpack.c.l.b16 %v3978
    %v4143 = vunpack.c.h.b16 %v3978
    %v4144 = vunpack.c.l.b16 %v3979
    %v4145 = vunpack.c.h.b16 %v3979
    %v4146 = vunpack.c.l.b16 %v3980
    %v4147 = vunpack.c.h.b16 %v3980
    %v4148 = vunpack.c.l.b16 %v3981
    %v4149 = vunpack.c.h.b16 %v3981
    %v4150 = vunpack.c.l.b16 %v3982
    %v4151 = vunpack.c.h.b16 %v3982
    %v4152 = vunpack.c.l.b16 %v3983
    %v4153 = vunpack.c.h.b16 %v3983
    %v4154 = vunpack.c.l.b16 %v3984
    %v4155 = vunpack.c.h.b16 %v3984
    %v4156 = vunpack.c.l.b16 %v3985
    %v4157 = vunpack.c.h.b16 %v3985
    %v4158 = vunpack.c.l.b16 %v3986
    %v4159 = vunpack.c.h.b16 %v3986
    %v4160 = vunpack.c.l.b16 %v3987
    %v4161 = vunpack.c.h.b16 %v3987
    %v4162 = vunpack.c.l.b16 %v3988
    %v4163 = vunpack.c.h.b16 %v3988
    %v4164 = vunpack.c.l.b16 %v3989
    %v4165 = vunpack.c.h.b16 %v3989
    %v4166 = vunpack.c.l.b16 %v3990
    %v4167 = vunpack.c.h.b16 %v3990
    %v4168 = vunpack.c.l.b16 %v3991
    %v4169 = vunpack.c.h.b16 %v3991
    %v4170 = vunpack.c.l.b16 %v3992
    %v4171 = vunpack.c.h.b16 %v3992
    %v4172 = vunpack.c.l.b16 %v3993
    %v4173 = vunpack.c.h.b16 %v3993
    %v4174 = vunpack.c.l.b16 %v3994
    %v4175 = vunpack.c.h.b16 %v3994
    %v4176 = vunpack.c.l.b16 %v3995
    %v4177 = vunpack.c.h.b16 %v3995
    %v4178 = vunpack.c.l.b16 %v3996
    %v4179 = vunpack.c.h.b16 %v3996
    %v4180 = vunpack.c.l.b16 %v3997
    %v4181 = vunpack.c.h.b16 %v3997
    %v4182 = vunpack.c.l.b16 %v3998
    %v4183 = vunpack.c.h.b16 %v3998
    %v4184 = vunpack.c.l.b16 %v3999
    %v4185 = vunpack.c.h.b16 %v3999
    %v4186 = vunpack.c.l.b16 %v4000
    %v4187 = vunpack.c.h.b16 %v4000
    %v4188 = vunpack.c.l.b16 %v4001
    %v4189 = vunpack.c.h.b16 %v4001
    %v4190 = vunpack.c.l.b16 %v4002
    %v4191 = vunpack.c.h.b16 %v4002
    %v4192 = vunpack.c.l.b16 %v4003
    %v4193 = vunpack.c.h.b16 %v4003
    %v4194 = vunpack.c.l.b16 %v4004
    %v4195 = vunpack.c.h.b16 %v4004
    %v4196 = vunpack.c.l.b16 %v4005
    %v4197 = vunpack.c.h.b16 %v4005
    %v4198 = vpack.c.b16 %v4072, %v4070
    %v4199 = vpack.c.b16 %v4073, %v4071
    %v4200 = vpack.c.b16 %v4076, %v4074
    %v4201 = vpack.c.b16 %v4077, %v4075
    %v4202 = vpack.c.b16 %v4080, %v4078
    %v4203 = vpack.c.b16 %v4081, %v4079
    %v4204 = vpack.c.b16 %v4084, %v4082
    %v4205 = vpack.c.b16 %v4085, %v4083
    %v4206 = vpack.c.b16 %v4088, %v4086
    %v4207 = vpack.c.b16 %v4089, %v4087
    %v4208 = vpack.c.b16 %v4092, %v4090
    %v4209 = vpack.c.b16 %v4093, %v4091
    %v4210 = vpack.c.b16 %v4096, %v4094
    %v4211 = vpack.c.b16 %v4097, %v4095
    %v4212 = vpack.c.b16 %v4100, %v4098
    %v4213 = vpack.c.b16 %v4101, %v4099
    %v4214 = vpack.c.b16 %v4104, %v4102
    %v4215 = vpack.c.b16 %v4105, %v4103
    %v4216 = vpack.c.b16 %v4108, %v4106
    %v4217 = vpack.c.b16 %v4109, %v4107
    %v4218 = vpack.c.b16 %v4112, %v4110
    %v4219 = vpack.c.b16 %v4113, %v4111
    %v4220 = vpack.c.b16 %v4116, %v4114
    %v4221 = vpack.c.b16 %v4117, %v4115
    %v4222 = vpack.c.b16 %v4120, %v4118
    %v4223 = vpack.c.b16 %v4121, %v4119
    %v4224 = vpack.c.b16 %v4124, %v4122
    %v4225 = vpack.c.b16 %v4125, %v4123
    %v4226 = vpack.c.b16 %v4128, %v4126
    %v4227 = vpack.c.b16 %v4129, %v4127
    %v4228 = vpack.c.b16 %v4132, %v4130
    %v4229 = vpack.c.b16 %v4133, %v4131
    %v4230 = vpack.c.b16 %v4136, %v4134
    %v4231 = vpack.c.b16 %v4137, %v4135
    %v4232 = vpack.c.b16 %v4140, %v4138
    %v4233 = vpack.c.b16 %v4141, %v4139
    %v4234 = vpack.c.b16 %v4144, %v4142
    %v4235 = vpack.c.b16 %v4145, %v4143
    %v4236 = vpack.c.b16 %v4148, %v4146
    %v4237 = vpack.c.b16 %v4149, %v4147
    %v4238 = vpack.c.b16 %v4152, %v4150
    %v4239 = vpack.c.b16 %v4153, %v4151
    %v4240 = vpack.c.b16 %v4156, %v4154
    %v4241 = vpack.c.b16 %v4157, %v4155
    %v4242 = vpack.c.b16 %v4160, %v4158
    %v4243 = vpack.c.b16 %v4161, %v4159
    %v4244 = vpack.c.b16 %v4164, %v4162
    %v4245 = vpack.c.b16 %v4165, %v4163
    %v4246 = vpack.c.b16 %v4168, %v4166
    %v4247 = vpack.c.b16 %v4169, %v4167
    %v4248 = vpack.c.b16 %v4172, %v4170
    %v4249 = vpack.c.b16 %v4173, %v4171
    %v4250 = vpack.c.b16 %v4176, %v4174
    %v4251 = vpack.c.b16 %v4177, %v4175
    %v4252 = vpack.c.b16 %v4180, %v4178
    %v4253 = vpack.c.b16 %v4181, %v4179
    %v4254 = vpack.c.b16 %v4184, %v4182
    %v4255 = vpack.c.b16 %v4185, %v4183
    %v4256 = vpack.c.b16 %v4188, %v4186
    %v4257 = vpack.c.b16 %v4189, %v4187
    %v4258 = vpack.c.b16 %v4192, %v4190
    %v4259 = vpack.c.b16 %v4193, %v4191
    %v4260 = vpack.c.b16 %v4196, %v4194
    %v4261 = vpack.c.b16 %v4197, %v4195
    %4326 = vmatprep.subr.bf16.mxu0 %v4199
    %4327 = vmatpush1.bf16.msra.mxu0 %v4198
    %4328 = vmatprep.subr.bf16.mxu0 %v4201
    %4329 = vmatpush1.bf16.msra.mxu0 %v4200
    %4330 = vmatprep.subr.bf16.mxu0 %v4203
    %4331 = vmatpush1.bf16.msra.mxu0 %v4202
    %4332 = vmatprep.subr.bf16.mxu0 %v4205
    %4333 = vmatpush1.bf16.msra.mxu0 %v4204
    %4334 = vmatprep.subr.bf16.mxu0 %v4207
    %4335 = vmatpush1.bf16.msra.mxu0 %v4206
    %4336 = vmatprep.subr.bf16.mxu0 %v4209
    %4337 = vmatpush1.bf16.msra.mxu0 %v4208
    %4338 = vmatprep.subr.bf16.mxu0 %v4211
    %4339 = vmatpush1.bf16.msra.mxu0 %v4210
    %4340 = vmatprep.subr.bf16.mxu0 %v4213
    %4341 = vmatpush1.bf16.msra.mxu0 %v4212
    %4342 = vmatprep.subr.bf16.mxu0 %v4215
    %4343 = vmatpush1.bf16.msra.mxu0 %v4214
    %4344 = vmatprep.subr.bf16.mxu0 %v4217
    %4345 = vmatpush1.bf16.msra.mxu0 %v4216
    %4346 = vmatprep.subr.bf16.mxu0 %v4219
    %4347 = vmatpush1.bf16.msra.mxu0 %v4218
    %4348 = vmatprep.subr.bf16.mxu0 %v4221
    %4349 = vmatpush1.bf16.msra.mxu0 %v4220
    %4350 = vmatprep.subr.bf16.mxu0 %v4223
    %4351 = vmatpush1.bf16.msra.mxu0 %v4222
    %4352 = vmatprep.subr.bf16.mxu0 %v4225
    %4353 = vmatpush1.bf16.msra.mxu0 %v4224
    %4354 = vmatprep.subr.bf16.mxu0 %v4227
    %4355 = vmatpush1.bf16.msra.mxu0 %v4226
    %4356 = vmatprep.subr.bf16.mxu0 %v4229
    %4357 = vmatpush1.bf16.msra.mxu0 %v4228
    %4358 = vmatprep.mubr.bf16.mxu0 %v3939
    %4359 = vmatmul.mubr.bf16.gmra.mrb[0].mxu0 %v3938
    %v4360 = vpop.f32.mrb[0].mxu0
    %v4361 = vadd.f32 0.0, %v4360
    %v4362 = vpop.f32.mrb[0].mxu0
    %v4363 = vadd.f32 0.0, %v4362
    %v4364 = vpop.f32.mrb[0].mxu0
    %v4365 = vadd.f32 0.0, %v4364
    %v4366 = vpop.f32.mrb[0].mxu0
    %v4367 = vadd.f32 0.0, %v4366
    %4368 = vdwg.mxu0
    %4369 = vmatprep.subr.bf16.mxu0 %v4231
    %4370 = vmatpush1.bf16.msra.mxu0 %v4230
    %4371 = vmatprep.subr.bf16.mxu0 %v4233
    %4372 = vmatpush1.bf16.msra.mxu0 %v4232
    %4373 = vmatprep.subr.bf16.mxu0 %v4235
    %4374 = vmatpush1.bf16.msra.mxu0 %v4234
    %4375 = vmatprep.subr.bf16.mxu0 %v4237
    %4376 = vmatpush1.bf16.msra.mxu0 %v4236
    %4377 = vmatprep.subr.bf16.mxu0 %v4239
    %4378 = vmatpush1.bf16.msra.mxu0 %v4238
    %4379 = vmatprep.subr.bf16.mxu0 %v4241
    %4380 = vmatpush1.bf16.msra.mxu0 %v4240
    %4381 = vmatprep.subr.bf16.mxu0 %v4243
    %4382 = vmatpush1.bf16.msra.mxu0 %v4242
    %4383 = vmatprep.subr.bf16.mxu0 %v4245
    %4384 = vmatpush1.bf16.msra.mxu0 %v4244
    %4385 = vmatprep.subr.bf16.mxu0 %v4247
    %4386 = vmatpush1.bf16.msra.mxu0 %v4246
    %4387 = vmatprep.subr.bf16.mxu0 %v4249
    %4388 = vmatpush1.bf16.msra.mxu0 %v4248
    %4389 = vmatprep.subr.bf16.mxu0 %v4251
    %4390 = vmatpush1.bf16.msra.mxu0 %v4250
    %4391 = vmatprep.subr.bf16.mxu0 %v4253
    %4392 = vmatpush1.bf16.msra.mxu0 %v4252
    %4393 = vmatprep.subr.bf16.mxu0 %v4255
    %4394 = vmatpush1.bf16.msra.mxu0 %v4254
    %4395 = vmatprep.subr.bf16.mxu0 %v4257
    %4396 = vmatpush1.bf16.msra.mxu0 %v4256
    %4397 = vmatprep.subr.bf16.mxu0 %v4259
    %4398 = vmatpush1.bf16.msra.mxu0 %v4258
    %4399 = vmatprep.subr.bf16.mxu0 %v4261
    %4400 = vmatpush1.bf16.msra.mxu0 %v4260
    %4401 = vmatprep.mubr.bf16.mxu0 %v3941
    %4402 = vmatmul.mubr.bf16.gmra.mrb[0].mxu0 %v3940
    %v4403 = vpop.f32.mrb[0].mxu0
    %v4404 = vadd.f32 %v4361, %v4403
    %v4405 = vpop.f32.mrb[0].mxu0
    %v4406 = vadd.f32 %v4363, %v4405
    %v4407 = vpop.f32.mrb[0].mxu0
    %v4408 = vadd.f32 %v4365, %v4407
    %v4409 = vpop.f32.mrb[0].mxu0
    %v4410 = vadd.f32 %v4367, %v4409
    %4411 = vdwg.mxu0
    %v4412 = vadd.f32 %v2892, %v4404
    %v4413 = vadd.f32 %v2893, %v4406
    %v4414 = vadd.f32 %v2894, %v4408
    %v4415 = vadd.f32 %v2895, %v4410
    %4416 = vst [vmem:[#allocation14] sm:$0xff] %v4412
    %4417 = vst [vmem:[#allocation14 + $0x8] sm:$0xff] %v4413
    %4418 = vst [vmem:[#allocation14 + $0x10] sm:$0xff] %v4414
    %4419 = vst [vmem:[#allocation14 + $0x18] sm:$0xff] %v4415
    // Predicated region
    $region78: #{qwen3_transformer_block.1} parent=1 // pred_check
      _
    $region79: #{qwen3_transformer_block.1} parent=1 // pred_check_branch
      %4421 = sbr.rel (0) target = $region81
    $region80: #{qwen3_transformer_block.1} parent=1 // pred_region
      %s4423 = ssub.s32 512, 512
      %4424 = vsyncadd [#allocation4], %s4423
      %s4425 = sshll.u32 [#allocation14], 4
      %s4426 = int_to_ptr.vmem [resolvable:$true] %s4425
      %4431 = dma.vmem_to_hbm [thread:$0]  %s4426, 512, %s12, [#allocation4], 256, 256, 16
    $region81: #{qwen3_transformer_block.1} parent=1 // pred_fallthru
      _
    // Predicated region
    $region82: #{qwen3_transformer_block.1} parent=1 // pred_check
      _
    $region83: #{qwen3_transformer_block.1} parent=1 // pred_check_branch
      %4433 = sbr.rel (0) target = $region85
    $region84: #{qwen3_transformer_block.1} parent=1 // pred_region
      %4434 = dma.done [#allocation4], 512
    $region85: #{qwen3_transformer_block.1} parent=1 // pred_fallthru
      _
    %4435 = vsyncpa [#allocation3], 1
    %4436 = vsyncpa [#allocation6], 1
    %4437 = vsyncpa [#allocation9], 1
    %4438 = vsyncpa [#allocation12], 1
    %4439 = vsyncpa [#allocation4], 1

</llo_original>
